<compile_context>
chip_gen: v7x
topology: tpu7x:2x2x1
jax: 0.10.0
libtpu: 0.0.40
codegen_flags: <defaults>
</compile_context>

<pallas_src>
import functools

import jax
import jax.numpy as jnp
from jax.experimental import pallas as pl
from jax.experimental.pallas import tpu as pltpu


# --------------------------------------------------------------------------
# Generation-aware VMEM sizing.
# --------------------------------------------------------------------------
def _vmem_caps():
    """(vmem_limit_bytes, per-step working-set budget) for this TPU generation."""
    try:
        cap = int(pltpu.get_tpu_info().vmem_capacity_bytes)
    except Exception:
        cap = 64 * 1024 * 1024          # conservative fallback: v7x per-TC VMEM
    limit = min(max(cap - 16 * 1024 * 1024, 32 * 1024 * 1024), 112 * 1024 * 1024)
    budget = int(limit * 0.55)          # headroom for double-buffering slack
    return limit, budget


def _pick_row_tile(H, N, fits):
    """Largest divisor of H whose footprint fits; keep >=2 parallel grid steps."""
    th = 1
    for cand in range(1, H + 1):
        if H % cand == 0 and fits(cand):
            th = cand
    # v7x has 2 TensorCores: a (1, 1) grid would idle one of them.
    if N * (H // th) < 2:
        for cand in range(th - 1, 0, -1):
            if H % cand == 0 and cand * 4 >= th:
                th = cand
                break
    return th


# --------------------------------------------------------------------------
# Fused (prev-block BN + LeakyReLU) -> 3x3 conv -> partial BN stats kernel.
# --------------------------------------------------------------------------
def _conv3x3_kernel(x_ref, xt_ref, xb_ref, w_ref, scale_ref, shift_ref,
                    y_ref, stats_ref, xp_scr, *, apply_act, single_k):
    """One (batch, row-tile) grid step.

    x_ref:     (1, TH, W, Cin)   row tile of the (pre-activation) input
    xt_ref:    (1, 1, W, Cin)    row above the tile (halo; masked at i == 0)
    xb_ref:    (1, 1, W, Cin)    row below the tile (halo; masked at last i)
    w_ref:     (9*Cin, Cout) if single_k else (3, 3, Cin, Cout)
    scale_ref: (1, Cin) f32      previous-block BN scale (unused if !apply_act)
    shift_ref: (1, Cin) f32      previous-block BN shift (unused if !apply_act)
    y_ref:     (1, TH, W, Cout)  conv output tile (pre-BN)
    stats_ref: (1, 1, 2, Cout)   per-tile [sum, sum_of_squares] of y (f32)
    xp_scr:    (TH+2, W+2, Cin)  VMEM scratch: zero-padded, activated input
    """
    TH, W, Cout = y_ref.shape[1], y_ref.shape[2], y_ref.shape[3]
    Cin = x_ref.shape[3]
    i = pl.program_id(1)
    n_rows = pl.num_programs(1)
    zdt = xp_scr.dtype

    # Hoist the per-channel affine params: act() is applied up to 3 times and
    # JAX does not CSE broadcast_in_dim.
    scale = scale_ref[0] if apply_act else None
    shift = shift_ref[0] if apply_act else None

    def act(v):
        v = v.astype(jnp.float32)
        if apply_act:
            v = v * scale + shift
            v = jnp.where(v >= 0, v, 0.2 * v)
        return v.astype(zdt)

    # Assemble the zero-padded (TH+2, W+2, Cin) tile. Only the border strips
    # are zeroed; the activated interior is written directly (single store).
    xp_scr[:, 0:1, :] = jnp.zeros((TH + 2, 1, Cin), zdt)            # left col
    xp_scr[:, W + 1:W + 2, :] = jnp.zeros((TH + 2, 1, Cin), zdt)    # right col
    xp_scr[1:TH + 1, 1:W + 1, :] = act(x_ref[0])                    # interior

    @pl.when(i == 0)
    def _():
        xp_scr[0:1, 1:W + 1, :] = jnp.zeros((1, W, Cin), zdt)       # top pad

    @pl.when(i > 0)
    def _():
        xp_scr[0:1, 1:W + 1, :] = act(xt_ref[0])                    # top halo

    @pl.when(i == n_rows - 1)
    def _():
        xp_scr[TH + 1:TH + 2, 1:W + 1, :] = jnp.zeros((1, W, Cin), zdt)

    @pl.when(i < n_rows - 1)
    def _():
        xp_scr[TH + 1:TH + 2, 1:W + 1, :] = act(xb_ref[0])          # bottom halo

    xp = xp_scr[...]

    if single_k:
        # Small-Cin layers: a single MXU matmul with K = 9*Cin fills the MXU
        # depth and avoids three result-FIFO drains per tile.
        patch = jnp.concatenate(
            [xp[ky:ky + TH, kx:kx + W, :] for ky in range(3) for kx in range(3)],
            axis=-1).reshape(TH * W, 9 * Cin)
        acc = jnp.dot(patch, w_ref[...], preferred_element_type=jnp.float32)
    else:
        # Deep layers: Cin alone fills K; skip the im2row concatenate and issue
        # 9 matmuls straight from shifted slices, summing register values.
        acc = None
        for ky in range(3):
            for kx in range(3):
                patch = xp[ky:ky + TH, kx:kx + W, :].reshape(TH * W, Cin)
                d = jnp.dot(patch, w_ref[ky, kx],
                            preferred_element_type=jnp.float32)
                acc = d if acc is None else acc + d

    # Single write of the output tile (no VMEM accumulator round-trips).
    # Note: Cout < 128 levels hit masked vst stores on the lane axis; accepted
    # as a known floor for narrow-channel UNET levels.
    y_ref[...] = acc.reshape(1, TH, W, Cout).astype(y_ref.dtype)

    # Per-tile partial BatchNorm statistics, taken from the f32 accumulator.
    s = acc.sum(axis=0, keepdims=True)                     # (1, Cout)
    ss = (acc * acc).sum(axis=0, keepdims=True)            # (1, Cout)
    stats_ref[...] = jnp.concatenate([s, ss], axis=0).reshape(1, 1, 2, Cout)


def conv3x3_fused(x, w, scale=None, shift=None, *, use_bf16=True,
                  out_dtype=None):
    """3x3 / stride-1 / pad-1 conv with optionally fused input activation.

    x: (N, H, W, Cin) raw (pre-activation) input; if scale/shift are given,
       LeakyReLU(x * scale + shift, 0.2) is applied in-kernel before the conv.
    w: (Cout, Cin, 3, 3) f32.
    Returns (y, stats): y (N, H, W, Cout) pre-BN conv output (out_dtype) and
    stats (N, R, 2, Cout) f32 per-row-tile [sum, sum_sq] partials.
    """
    N, H, W, Cin = x.shape
    Cout = w.shape[0]
    cdt = jnp.bfloat16 if use_bf16 else jnp.float32
    out_dtype = jnp.dtype(out_dtype) if out_dtype is not None else jnp.dtype(jnp.float32)

    single_k = Cin < 128

    # Pre-cast the weights once in the wrapper (no per-tile VPU cast).
    w_t = jnp.transpose(w, (2, 3, 1, 0)).astype(cdt)       # (ky, kx, Cin, Cout)
    if single_k:
        w_packed = w_t.reshape(9 * Cin, Cout)
        w_spec = pl.BlockSpec((9 * Cin, Cout), lambda n, i: (0, 0))
    else:
        w_packed = w_t
        w_spec = pl.BlockSpec((3, 3, Cin, Cout), lambda n, i: (0, 0, 0, 0))

    apply_act = scale is not None
    if not apply_act:
        scale = jnp.ones((Cin,), jnp.float32)
        shift = jnp.zeros((Cin,), jnp.float32)

    vmem_limit, budget = _vmem_caps()
    xb = x.dtype.itemsize
    yb = out_dtype.itemsize
    cb = jnp.dtype(cdt).itemsize

    def fits(th):
        m = th * W
        fp = 2 * th * W * Cin * xb                     # x tile (double buffered)
        fp += 2 * 2 * W * Cin * xb                     # halo rows
        fp += 2 * 9 * Cin * Cout * cb                  # resident weight slab
        fp += 2 * th * W * Cout * yb                   # y tile (double buffered)
        fp += (th + 2) * (W + 2) * Cin * cb            # padded scratch
        fp += (2 * m * 9 * Cin * cb) if single_k else (2 * m * Cin * cb)
        fp += 2 * m * Cout * 4                         # f32 accumulator value
        return fp <= budget and m <= 16384

    TH = _pick_row_tile(H, N, fits)
    R = H // TH

    kernel = functools.partial(_conv3x3_kernel, apply_act=apply_act,
                               single_k=single_k)

    y, stats = pl.pallas_call(
        kernel,
        out_shape=(jax.ShapeDtypeStruct((N, H, W, Cout), out_dtype),
                   jax.ShapeDtypeStruct((N, R, 2, Cout), jnp.float32)),
        grid_spec=pltpu.PrefetchScalarGridSpec(
            num_scalar_prefetch=0,
            grid=(N, R),
            in_specs=[
                pl.BlockSpec((1, TH, W, Cin), lambda n, i: (n, i, 0, 0)),
                # Halo rows: size-1 row blocks, clamped at the image edges
                # (clamped duplicate reads are masked out inside the kernel).
                pl.BlockSpec((1, 1, W, Cin),
                             lambda n, i: (n, jnp.maximum(i * TH - 1, 0), 0, 0)),
                pl.BlockSpec((1, 1, W, Cin),
                             lambda n, i: (n, jnp.minimum((i + 1) * TH, H - 1),
                                           0, 0)),
                w_spec,
                pl.BlockSpec((1, Cin), lambda n, i: (0, 0)),
                pl.BlockSpec((1, Cin), lambda n, i: (0, 0)),
            ],
            out_specs=(
                pl.BlockSpec((1, TH, W, Cout), lambda n, i: (n, i, 0, 0)),
                pl.BlockSpec((1, 1, 2, Cout), lambda n, i: (n, i, 0, 0)),
            ),
            scratch_shapes=[
                pltpu.VMEM((TH + 2, W + 2, Cin), cdt),
            ],
        ),
        compiler_params=pltpu.CompilerParams(
            dimension_semantics=("parallel", "parallel"),
            vmem_limit_bytes=vmem_limit),
    )(x, x, x, w_packed,
      scale.reshape(1, Cin).astype(jnp.float32),
      shift.reshape(1, Cin).astype(jnp.float32))
    return y, stats


# --------------------------------------------------------------------------
# BN parameter math (tiny per-channel glue) and the final elementwise kernel.
# --------------------------------------------------------------------------
def _bn_affine(stats, count, gamma, beta, eps):
    """Reduce per-tile partial stats -> per-channel BN scale/shift."""
    s = stats[:, :, 0, :].sum(axis=(0, 1))
    ss = stats[:, :, 1, :].sum(axis=(0, 1))
    mean = s / count
    var = ss / count - mean * mean            # biased variance (training BN)
    scale = gamma * jax.lax.rsqrt(var + eps)
    shift = beta - mean * scale
    return scale, shift


def _bn_lrelu_kernel(y_ref, scale_ref, shift_ref, o_ref):
    z = y_ref[...].astype(jnp.float32) * scale_ref[0] + shift_ref[0]
    o_ref[...] = jnp.where(z >= 0, z, 0.2 * z).astype(o_ref.dtype)


def bn_lrelu(y, scale, shift):
    """Standalone BN-apply + LeakyReLU for the final block output (mem-bound:
    use the largest row tile that fits VMEM)."""
    N, H, W, C = y.shape
    vmem_limit, budget = _vmem_caps()
    yb = y.dtype.itemsize

    def fits(th):
        return 2 * th * W * C * (yb + 4 + 4) <= budget

    TH = _pick_row_tile(H, N, fits)
    R = H // TH
    return pl.pallas_call(
        _bn_lrelu_kernel,
        out_shape=jax.ShapeDtypeStruct((N, H, W, C), jnp.float32),
        grid_spec=pltpu.PrefetchScalarGridSpec(
            num_scalar_prefetch=0,
            grid=(N, R),
            in_specs=[
                pl.BlockSpec((1, TH, W, C), lambda n, i: (n, i, 0, 0)),
                pl.BlockSpec((1, C), lambda n, i: (0, 0)),
                pl.BlockSpec((1, C), lambda n, i: (0, 0)),
            ],
            out_specs=pl.BlockSpec((1, TH, W, C), lambda n, i: (n, i, 0, 0)),
        ),
        compiler_params=pltpu.CompilerParams(
            dimension_semantics=("parallel", "parallel"),
            vmem_limit_bytes=vmem_limit),
    )(y, scale.reshape(1, C).astype(jnp.float32),
      shift.reshape(1, C).astype(jnp.float32))


# --------------------------------------------------------------------------
# ConvLayer forward.
# --------------------------------------------------------------------------
def conv_layer_forward(x_nchw, params, *, eps=1e-5, use_bf16=True):
    """Pallas implementation of ConvLayer.forward.  x_nchw: (N, Cin, H, W).

    use_bf16=True (default) feeds bf16 operands to the MXU with f32
    accumulation and f32 BN statistics; expect ~1e-2-level drift vs the f32
    PyTorch reference.  use_bf16=False reproduces f32 numerics.
    """
    # NCHW <-> NHWC only at the PyTorch-facing boundary.
    x = jnp.transpose(x_nchw, (0, 2, 3, 1))
    N, H, W, _ = x.shape
    count = N * H * W
    cdt = jnp.bfloat16 if use_bf16 else jnp.float32

    # Block 1: conv only (BN1 + LReLU is fused into block 2's conv input).
    # y1 is only re-read by block 2's conv, so store it in the compute dtype.
    y1, st1 = conv3x3_fused(x, params["w1"], use_bf16=use_bf16, out_dtype=cdt)
    sc1, sh1 = _bn_affine(st1, count, params["g1"], params["b1"], eps)

    # Block 2: fused BN1+LReLU on the input, conv w2, partial stats for BN2.
    y2, st2 = conv3x3_fused(y1, params["w2"], sc1, sh1, use_bf16=use_bf16,
                            out_dtype=jnp.float32)
    sc2, sh2 = _bn_affine(st2, count, params["g2"], params["b2"], eps)

    # Final BN2 + LeakyReLU (nothing downstream to fuse it into).
    out = bn_lrelu(y2, sc2, sh2)
    return jnp.transpose(out, (0, 3, 1, 2))


def _reference(x_nchw, params, eps=1e-5):
    """Pure-JAX reference matching the PyTorch forward (training-mode BN)."""
    def block(x, w, g, b):
        y = jax.lax.conv_general_dilated(
            x, w, window_strides=(1, 1), padding=((1, 1), (1, 1)),
            dimension_numbers=("NCHW", "OIHW", "NCHW"))
        mean = y.mean(axis=(0, 2, 3), keepdims=True)
        var = y.var(axis=(0, 2, 3), keepdims=True)
        z = (y - mean) * jax.lax.rsqrt(var + eps) * g.reshape(1, -1, 1, 1) \
            + b.reshape(1, -1, 1, 1)
        return jnp.where(z >= 0, z, 0.2 * z)
    x = block(x_nchw, params["w1"], params["g1"], params["b1"])
    return block(x, params["w2"], params["g2"], params["b2"])


if __name__ == "__main__":
    N, CIN, COUT, H, W = 2, 4, 8, 16, 16

    key = jax.random.PRNGKey(0)
    k_x, k_w1, k_w2, k_g1, k_b1, k_g2, k_b2 = jax.random.split(key, 7)

    x = jax.random.normal(k_x, (N, CIN, H, W), jnp.float32)
    params = {
        "w1": 0.2 * jax.random.normal(k_w1, (COUT, CIN, 3, 3), jnp.float32),
        "w2": 0.15 * jax.random.normal(k_w2, (COUT, COUT, 3, 3), jnp.float32),
        "g1": 1.0 + 0.1 * jax.random.normal(k_g1, (COUT,), jnp.float32),
        "b1": 0.1 * jax.random.normal(k_b1, (COUT,), jnp.float32),
        "g2": 1.0 + 0.1 * jax.random.normal(k_g2, (COUT,), jnp.float32),
        "b2": 0.1 * jax.random.normal(k_b2, (COUT,), jnp.float32),
    }

    ref = _reference(x, params)

    # Exact-numerics path (f32 MXU) -- matches the PyTorch f32 forward.
    out_f32 = jax.block_until_ready(
        jax.jit(functools.partial(conv_layer_forward, use_bf16=False))(x, params))
    assert out_f32.shape == (N, COUT, H, W)
    err_f32 = jnp.max(jnp.abs(out_f32 - ref))
    assert jnp.allclose(out_f32, ref, atol=1e-3, rtol=1e-3), \
        f"f32 path max abs err {err_f32}"

    # Default fast path (bf16 MXU operands, f32 accumulation / BN stats).
    out_bf16 = jax.block_until_ready(jax.jit(conv_layer_forward)(x, params))
    assert out_bf16.shape == (N, COUT, H, W)
    err_bf16 = jnp.max(jnp.abs(out_bf16 - ref))
    assert jnp.allclose(out_bf16, ref, atol=2e-1, rtol=2e-1), \
        f"bf16 path max abs err {err_bf16}"

    print("KERNEL_OK")
</pallas_src>

<mosaic_0001>
module attributes {stable_mosaic.version = 11 : i64} {
  func.func @_conv3x3_kernel(%arg0: i32, %arg1: i32, %arg2: memref<1x16x16x4xf32, #tpu.memory_space<vmem>>, %arg3: memref<1x1x16x4xf32, #tpu.memory_space<vmem>>, %arg4: memref<1x1x16x4xf32, #tpu.memory_space<vmem>>, %arg5: memref<36x8xf32, #tpu.memory_space<vmem>>, %arg6: memref<1x4xf32, #tpu.memory_space<vmem>>, %arg7: memref<1x4xf32, #tpu.memory_space<vmem>>, %arg8: memref<1x16x16x8xf32, #tpu.memory_space<vmem>>, %arg9: memref<1x1x2x8xf32, #tpu.memory_space<vmem>>, %arg10: memref<18x18x4xf32, #tpu.memory_space<vmem>>) attributes {dimension_semantics = [#tpu.dimension_semantics<parallel>, #tpu.dimension_semantics<parallel>], iteration_bounds = array<i64: 2, 1>, scalar_prefetch = 0 : i64, scratch_operands = 1 : i64, tpu.core_type = #tpu.core_type<tc>, window_params = [{transform_indices = @transform_0, window_bounds = array<i64: 1, 16, 16, 4>}, {transform_indices = @transform_1, window_bounds = array<i64: 1, 1, 16, 4>}, {transform_indices = @transform_2, window_bounds = array<i64: 1, 1, 16, 4>}, {pipeline_mode = #tpu.pipeline_mode<synchronous>, transform_indices = @transform_3, window_bounds = array<i64: 36, 8>}, {pipeline_mode = #tpu.pipeline_mode<synchronous>, transform_indices = @transform_4, window_bounds = array<i64: 1, 4>}, {pipeline_mode = #tpu.pipeline_mode<synchronous>, transform_indices = @transform_5, window_bounds = array<i64: 1, 4>}, {transform_indices = @transform_6, window_bounds = array<i64: 1, 16, 16, 8>}, {transform_indices = @transform_7, window_bounds = array<i64: 1, 1, 2, 8>}]} {
    %cst = arith.constant 0.000000e+00 : f32
    %0 = vector.broadcast %cst : f32 to vector<18x1x4xf32>
    %c0 = arith.constant 0 : index
    %c0_0 = arith.constant 0 : index
    %c0_1 = arith.constant 0 : index
    %1 = vector.load %arg10[%c0, %c0_0, %c0_1] : memref<18x18x4xf32, #tpu.memory_space<vmem>>, vector<18x1x4xf32>
    tpu.vector_store %arg10[%c0, %c0_0, %c0_1], %0 {strides = array<i32>} : memref<18x18x4xf32, #tpu.memory_space<vmem>>, vector<18x1x4xf32>,
    %cst_2 = arith.constant 0.000000e+00 : f32
    %2 = vector.broadcast %cst_2 : f32 to vector<18x1x4xf32>
    %c0_3 = arith.constant 0 : index
    %c17 = arith.constant 17 : index
    %c0_4 = arith.constant 0 : index
    %3 = vector.load %arg10[%c0_3, %c17, %c0_4] : memref<18x18x4xf32, #tpu.memory_space<vmem>>, vector<18x1x4xf32>
    tpu.vector_store %arg10[%c0_3, %c17, %c0_4], %2 {strides = array<i32>} : memref<18x18x4xf32, #tpu.memory_space<vmem>>, vector<18x1x4xf32>,
    %c0_5 = arith.constant 0 : index
    %c0_6 = arith.constant 0 : index
    %c0_7 = arith.constant 0 : index
    %c0_8 = arith.constant 0 : index
    %4 = vector.load %arg2[%c0_5, %c0_6, %c0_7, %c0_8] : memref<1x16x16x4xf32, #tpu.memory_space<vmem>>, vector<1x16x16x4xf32>
    %5 = vector.shape_cast %4 : vector<1x16x16x4xf32> to vector<16x16x4xf32>
    %c1 = arith.constant 1 : index
    %c1_9 = arith.constant 1 : index
    %c0_10 = arith.constant 0 : index
    %6 = vector.load %arg10[%c1, %c1_9, %c0_10] : memref<18x18x4xf32, #tpu.memory_space<vmem>>, vector<16x16x4xf32>
    tpu.vector_store %arg10[%c1, %c1_9, %c0_10], %5 {strides = array<i32>} : memref<18x18x4xf32, #tpu.memory_space<vmem>>, vector<16x16x4xf32>,
    %c0_i32 = arith.constant 0 : i32
    %7 = arith.cmpi eq, %arg1, %c0_i32 : i32
    %8 = arith.extui %7 : i1 to i32
    %c0_i32_11 = arith.constant 0 : i32
    %9 = arith.cmpi ne, %8, %c0_i32_11 : i32
    scf.if %9 {
      %cst_34 = arith.constant 0.000000e+00 : f32
      %43 = vector.broadcast %cst_34 : f32 to vector<1x16x4xf32>
      %c0_35 = arith.constant 0 : index
      %c1_36 = arith.constant 1 : index
      %c0_37 = arith.constant 0 : index
      %44 = vector.load %arg10[%c0_35, %c1_36, %c0_37] : memref<18x18x4xf32, #tpu.memory_space<vmem>>, vector<1x16x4xf32>
      tpu.vector_store %arg10[%c0_35, %c1_36, %c0_37], %43 {strides = array<i32>} : memref<18x18x4xf32, #tpu.memory_space<vmem>>, vector<1x16x4xf32>,
    } else {
    }
    %c0_i32_12 = arith.constant 0 : i32
    %10 = arith.cmpi sgt, %arg1, %c0_i32_12 : i32
    %11 = arith.extui %10 : i1 to i32
    %c0_i32_13 = arith.constant 0 : i32
    %12 = arith.cmpi ne, %11, %c0_i32_13 : i32
    scf.if %12 {
      %c0_34 = arith.constant 0 : index
      %c0_35 = arith.constant 0 : index
      %c0_36 = arith.constant 0 : index
      %c0_37 = arith.constant 0 : index
      %43 = vector.load %arg3[%c0_34, %c0_35, %c0_36, %c0_37] : memref<1x1x16x4xf32, #tpu.memory_space<vmem>>, vector<1x1x16x4xf32>
      %44 = vector.shape_cast %43 : vector<1x1x16x4xf32> to vector<1x16x4xf32>
      %c0_38 = arith.constant 0 : index
      %c1_39 = arith.constant 1 : index
      %c0_40 = arith.constant 0 : index
      %45 = vector.load %arg10[%c0_38, %c1_39, %c0_40] : memref<18x18x4xf32, #tpu.memory_space<vmem>>, vector<1x16x4xf32>
      tpu.vector_store %arg10[%c0_38, %c1_39, %c0_40], %44 {strides = array<i32>} : memref<18x18x4xf32, #tpu.memory_space<vmem>>, vector<1x16x4xf32>,
    } else {
    }
    %c0_i32_14 = arith.constant 0 : i32
    %13 = arith.cmpi eq, %arg1, %c0_i32_14 : i32
    %14 = arith.extui %13 : i1 to i32
    %c0_i32_15 = arith.constant 0 : i32
    %15 = arith.cmpi ne, %14, %c0_i32_15 : i32
    scf.if %15 {
      %cst_34 = arith.constant 0.000000e+00 : f32
      %43 = vector.broadcast %cst_34 : f32 to vector<1x16x4xf32>
      %c17_35 = arith.constant 17 : index
      %c1_36 = arith.constant 1 : index
      %c0_37 = arith.constant 0 : index
      %44 = vector.load %arg10[%c17_35, %c1_36, %c0_37] : memref<18x18x4xf32, #tpu.memory_space<vmem>>, vector<1x16x4xf32>
      tpu.vector_store %arg10[%c17_35, %c1_36, %c0_37], %43 {strides = array<i32>} : memref<18x18x4xf32, #tpu.memory_space<vmem>>, vector<1x16x4xf32>,
    } else {
    }
    %c0_i32_16 = arith.constant 0 : i32
    %16 = arith.cmpi slt, %arg1, %c0_i32_16 : i32
    %17 = arith.extui %16 : i1 to i32
    %c0_i32_17 = arith.constant 0 : i32
    %18 = arith.cmpi ne, %17, %c0_i32_17 : i32
    scf.if %18 {
      %c0_34 = arith.constant 0 : index
      %c0_35 = arith.constant 0 : index
      %c0_36 = arith.constant 0 : index
      %c0_37 = arith.constant 0 : index
      %43 = vector.load %arg4[%c0_34, %c0_35, %c0_36, %c0_37] : memref<1x1x16x4xf32, #tpu.memory_space<vmem>>, vector<1x1x16x4xf32>
      %44 = vector.shape_cast %43 : vector<1x1x16x4xf32> to vector<1x16x4xf32>
      %c17_38 = arith.constant 17 : index
      %c1_39 = arith.constant 1 : index
      %c0_40 = arith.constant 0 : index
      %45 = vector.load %arg10[%c17_38, %c1_39, %c0_40] : memref<18x18x4xf32, #tpu.memory_space<vmem>>, vector<1x16x4xf32>
      tpu.vector_store %arg10[%c17_38, %c1_39, %c0_40], %44 {strides = array<i32>} : memref<18x18x4xf32, #tpu.memory_space<vmem>>, vector<1x16x4xf32>,
    } else {
    }
    %c0_18 = arith.constant 0 : index
    %c0_19 = arith.constant 0 : index
    %c0_20 = arith.constant 0 : index
    %19 = vector.load %arg10[%c0_18, %c0_19, %c0_20] : memref<18x18x4xf32, #tpu.memory_space<vmem>>, vector<18x18x4xf32>
    %20 = vector.extract_strided_slice %19 {offsets = [0, 0, 0], sizes = [16, 16, 4], strides = [1, 1, 1]} : vector<18x18x4xf32> to vector<16x16x4xf32>
    %21 = vector.extract_strided_slice %19 {offsets = [0, 1, 0], sizes = [16, 16, 4], strides = [1, 1, 1]} : vector<18x18x4xf32> to vector<16x16x4xf32>
    %22 = vector.extract_strided_slice %19 {offsets = [0, 2, 0], sizes = [16, 16, 4], strides = [1, 1, 1]} : vector<18x18x4xf32> to vector<16x16x4xf32>
    %23 = vector.extract_strided_slice %19 {offsets = [1, 0, 0], sizes = [16, 16, 4], strides = [1, 1, 1]} : vector<18x18x4xf32> to vector<16x16x4xf32>
    %24 = vector.extract_strided_slice %19 {offsets = [1, 1, 0], sizes = [16, 16, 4], strides = [1, 1, 1]} : vector<18x18x4xf32> to vector<16x16x4xf32>
    %25 = vector.extract_strided_slice %19 {offsets = [1, 2, 0], sizes = [16, 16, 4], strides = [1, 1, 1]} : vector<18x18x4xf32> to vector<16x16x4xf32>
    %26 = vector.extract_strided_slice %19 {offsets = [2, 0, 0], sizes = [16, 16, 4], strides = [1, 1, 1]} : vector<18x18x4xf32> to vector<16x16x4xf32>
    %27 = vector.extract_strided_slice %19 {offsets = [2, 1, 0], sizes = [16, 16, 4], strides = [1, 1, 1]} : vector<18x18x4xf32> to vector<16x16x4xf32>
    %28 = vector.extract_strided_slice %19 {offsets = [2, 2, 0], sizes = [16, 16, 4], strides = [1, 1, 1]} : vector<18x18x4xf32> to vector<16x16x4xf32>
    %29 = tpu.concatenate %20, %21, %22, %23, %24, %25, %26, %27, %28 in 2 : vector<16x16x4xf32>, vector<16x16x4xf32>, vector<16x16x4xf32>, vector<16x16x4xf32>, vector<16x16x4xf32>, vector<16x16x4xf32>, vector<16x16x4xf32>, vector<16x16x4xf32>, vector<16x16x4xf32> -> vector<16x16x36xf32>
    %30 = vector.shape_cast %29 : vector<16x16x36xf32> to vector<256x36xf32>
    %c0_21 = arith.constant 0 : index
    %c0_22 = arith.constant 0 : index
    %31 = vector.load %arg5[%c0_21, %c0_22] : memref<36x8xf32, #tpu.memory_space<vmem>>, vector<36x8xf32>
    %cst_23 = arith.constant dense<0.000000e+00> : vector<256x8xf32>
    %32 = tpu.matmul %30, %31, %cst_23 {dimension_numbers = #tpu.dot_dimension_numbers<[1], [0], [0], [1], [0, 0, 1, 1], [], []>} : vector<256x36xf32>, vector<36x8xf32>, vector<256x8xf32> -> vector<256x8xf32>
    %33 = vector.shape_cast %32 : vector<256x8xf32> to vector<1x16x16x8xf32>
    %c0_24 = arith.constant 0 : index
    %c0_25 = arith.constant 0 : index
    %c0_26 = arith.constant 0 : index
    %c0_27 = arith.constant 0 : index
    %34 = vector.load %arg8[%c0_24, %c0_25, %c0_26, %c0_27] : memref<1x16x16x8xf32, #tpu.memory_space<vmem>>, vector<1x16x16x8xf32>
    tpu.vector_store %arg8[%c0_24, %c0_25, %c0_26, %c0_27], %33 {strides = array<i32>} : memref<1x16x16x8xf32, #tpu.memory_space<vmem>>, vector<1x16x16x8xf32>,
    %cst_28 = arith.constant dense<0.000000e+00> : vector<8xf32>
    %35 = vector.multi_reduction <add>, %32, %cst_28 [0] : vector<256x8xf32> to vector<8xf32>
    %36 = vector.shape_cast %35 : vector<8xf32> to vector<1x8xf32>
    %37 = arith.mulf %32, %32 : vector<256x8xf32>
    %cst_29 = arith.constant dense<0.000000e+00> : vector<8xf32>
    %38 = vector.multi_reduction <add>, %37, %cst_29 [0] : vector<256x8xf32> to vector<8xf32>
    %39 = vector.shape_cast %38 : vector<8xf32> to vector<1x8xf32>
    %40 = tpu.concatenate %36, %39 in 0 : vector<1x8xf32>, vector<1x8xf32> -> vector<2x8xf32>
    %41 = vector.shape_cast %40 : vector<2x8xf32> to vector<1x1x2x8xf32>
    %c0_30 = arith.constant 0 : index
    %c0_31 = arith.constant 0 : index
    %c0_32 = arith.constant 0 : index
    %c0_33 = arith.constant 0 : index
    %42 = vector.load %arg9[%c0_30, %c0_31, %c0_32, %c0_33] : memref<1x1x2x8xf32, #tpu.memory_space<vmem>>, vector<1x1x2x8xf32>
    tpu.vector_store %arg9[%c0_30, %c0_31, %c0_32, %c0_33], %41 {strides = array<i32>} : memref<1x1x2x8xf32, #tpu.memory_space<vmem>>, vector<1x1x2x8xf32>,
    return
  }
  func.func @transform_0(%arg0: i32, %arg1: i32) -> (i32, i32, i32, i32) {
    %c0_i32 = arith.constant 0 : i32
    %c0_i32_0 = arith.constant 0 : i32
    %c0_i32_1 = arith.constant 0 : i32
    return %arg0, %arg1, %c0_i32, %c0_i32_0 : i32, i32, i32, i32
  }
  func.func @transform_1(%arg0: i32, %arg1: i32) -> (i32, i32, i32, i32) {
    %c16_i32 = arith.constant 16 : i32
    %0 = arith.muli %arg1, %c16_i32 : i32
    %c1_i32 = arith.constant 1 : i32
    %1 = arith.subi %0, %c1_i32 : i32
    %c0_i32 = arith.constant 0 : i32
    %2 = arith.maxsi %1, %c0_i32 : i32
    %c0_i32_0 = arith.constant 0 : i32
    %c0_i32_1 = arith.constant 0 : i32
    %c0_i32_2 = arith.constant 0 : i32
    return %arg0, %2, %c0_i32_0, %c0_i32_1 : i32, i32, i32, i32
  }
  func.func @transform_2(%arg0: i32, %arg1: i32) -> (i32, i32, i32, i32) {
    %c1_i32 = arith.constant 1 : i32
    %0 = arith.addi %arg1, %c1_i32 : i32
    %c16_i32 = arith.constant 16 : i32
    %1 = arith.muli %0, %c16_i32 : i32
    %c15_i32 = arith.constant 15 : i32
    %2 = arith.minsi %1, %c15_i32 : i32
    %c0_i32 = arith.constant 0 : i32
    %c0_i32_0 = arith.constant 0 : i32
    %c0_i32_1 = arith.constant 0 : i32
    return %arg0, %2, %c0_i32, %c0_i32_0 : i32, i32, i32, i32
  }
  func.func @transform_3(%arg0: i32, %arg1: i32) -> (i32, i32) {
    %c0_i32 = arith.constant 0 : i32
    %c0_i32_0 = arith.constant 0 : i32
    %c0_i32_1 = arith.constant 0 : i32
    return %c0_i32, %c0_i32_0 : i32, i32
  }
  func.func @transform_4(%arg0: i32, %arg1: i32) -> (i32, i32) {
    %c0_i32 = arith.constant 0 : i32
    %c0_i32_0 = arith.constant 0 : i32
    %c0_i32_1 = arith.constant 0 : i32
    return %c0_i32, %c0_i32_0 : i32, i32
  }
  func.func @transform_5(%arg0: i32, %arg1: i32) -> (i32, i32) {
    %c0_i32 = arith.constant 0 : i32
    %c0_i32_0 = arith.constant 0 : i32
    %c0_i32_1 = arith.constant 0 : i32
    return %c0_i32, %c0_i32_0 : i32, i32
  }
  func.func @transform_6(%arg0: i32, %arg1: i32) -> (i32, i32, i32, i32) {
    %c0_i32 = arith.constant 0 : i32
    %c0_i32_0 = arith.constant 0 : i32
    %c0_i32_1 = arith.constant 0 : i32
    return %arg0, %arg1, %c0_i32, %c0_i32_0 : i32, i32, i32, i32
  }
  func.func @transform_7(%arg0: i32, %arg1: i32) -> (i32, i32, i32, i32) {
    %c0_i32 = arith.constant 0 : i32
    %c0_i32_0 = arith.constant 0 : i32
    %c0_i32_1 = arith.constant 0 : i32
    return %arg0, %arg1, %c0_i32, %c0_i32_0 : i32, i32, i32, i32
  }
}

module attributes {stable_mosaic.version = 11 : i64} {
  func.func @_bn_lrelu_kernel(%arg0: i32, %arg1: i32, %arg2: memref<1x16x16x8xf32, #tpu.memory_space<vmem>>, %arg3: memref<1x8xf32, #tpu.memory_space<vmem>>, %arg4: memref<1x8xf32, #tpu.memory_space<vmem>>, %arg5: memref<1x16x16x8xf32, #tpu.memory_space<vmem>>) attributes {dimension_semantics = [#tpu.dimension_semantics<parallel>, #tpu.dimension_semantics<parallel>], iteration_bounds = array<i64: 2, 1>, scalar_prefetch = 0 : i64, scratch_operands = 0 : i64, tpu.core_type = #tpu.core_type<tc>, window_params = [{transform_indices = @transform_0, window_bounds = array<i64: 1, 16, 16, 8>}, {pipeline_mode = #tpu.pipeline_mode<synchronous>, transform_indices = @transform_1, window_bounds = array<i64: 1, 8>}, {pipeline_mode = #tpu.pipeline_mode<synchronous>, transform_indices = @transform_2, window_bounds = array<i64: 1, 8>}, {transform_indices = @transform_3, window_bounds = array<i64: 1, 16, 16, 8>}]} {
    %c0 = arith.constant 0 : index
    %c0_0 = arith.constant 0 : index
    %c0_1 = arith.constant 0 : index
    %c0_2 = arith.constant 0 : index
    %0 = vector.load %arg2[%c0, %c0_0, %c0_1, %c0_2] : memref<1x16x16x8xf32, #tpu.memory_space<vmem>>, vector<1x16x16x8xf32>
    %c0_3 = arith.constant 0 : index
    %c0_4 = arith.constant 0 : index
    %1 = vector.load %arg3[%c0_3, %c0_4] : memref<1x8xf32, #tpu.memory_space<vmem>>, vector<1x8xf32>
    %2 = vector.shape_cast %1 : vector<1x8xf32> to vector<8xf32>
    %3 = vector.shape_cast %2 : vector<8xf32> to vector<1x1x1x8xf32>
    %4 = vector.broadcast %3 : vector<1x1x1x8xf32> to vector<1x16x16x8xf32>
    %5 = arith.mulf %0, %4 : vector<1x16x16x8xf32>
    %c0_5 = arith.constant 0 : index
    %c0_6 = arith.constant 0 : index
    %6 = vector.load %arg4[%c0_5, %c0_6] : memref<1x8xf32, #tpu.memory_space<vmem>>, vector<1x8xf32>
    %7 = vector.shape_cast %6 : vector<1x8xf32> to vector<8xf32>
    %8 = vector.shape_cast %7 : vector<8xf32> to vector<1x1x1x8xf32>
    %9 = vector.broadcast %8 : vector<1x1x1x8xf32> to vector<1x16x16x8xf32>
    %10 = arith.addf %5, %9 : vector<1x16x16x8xf32>
    %cst = arith.constant 0.000000e+00 : f32
    %11 = vector.broadcast %cst : f32 to vector<1x16x16x8xf32>
    %12 = arith.cmpf oge, %10, %11 : vector<1x16x16x8xf32>
    %cst_7 = arith.constant 2.000000e-01 : f32
    %13 = vector.broadcast %cst_7 : f32 to vector<1x16x16x8xf32>
    %14 = arith.mulf %13, %10 : vector<1x16x16x8xf32>
    %15 = arith.select %12, %10, %14 : vector<1x16x16x8xi1>, vector<1x16x16x8xf32>
    %c0_8 = arith.constant 0 : index
    %c0_9 = arith.constant 0 : index
    %c0_10 = arith.constant 0 : index
    %c0_11 = arith.constant 0 : index
    %16 = vector.load %arg5[%c0_8, %c0_9, %c0_10, %c0_11] : memref<1x16x16x8xf32, #tpu.memory_space<vmem>>, vector<1x16x16x8xf32>
    tpu.vector_store %arg5[%c0_8, %c0_9, %c0_10, %c0_11], %15 {strides = array<i32>} : memref<1x16x16x8xf32, #tpu.memory_space<vmem>>, vector<1x16x16x8xf32>,
    return
  }
  func.func @transform_0(%arg0: i32, %arg1: i32) -> (i32, i32, i32, i32) {
    %c0_i32 = arith.constant 0 : i32
    %c0_i32_0 = arith.constant 0 : i32
    %c0_i32_1 = arith.constant 0 : i32
    return %arg0, %arg1, %c0_i32, %c0_i32_0 : i32, i32, i32, i32
  }
  func.func @transform_1(%arg0: i32, %arg1: i32) -> (i32, i32) {
    %c0_i32 = arith.constant 0 : i32
    %c0_i32_0 = arith.constant 0 : i32
    %c0_i32_1 = arith.constant 0 : i32
    return %c0_i32, %c0_i32_0 : i32, i32
  }
  func.func @transform_2(%arg0: i32, %arg1: i32) -> (i32, i32) {
    %c0_i32 = arith.constant 0 : i32
    %c0_i32_0 = arith.constant 0 : i32
    %c0_i32_1 = arith.constant 0 : i32
    return %c0_i32, %c0_i32_0 : i32, i32
  }
  func.func @transform_3(%arg0: i32, %arg1: i32) -> (i32, i32, i32, i32) {
    %c0_i32 = arith.constant 0 : i32
    %c0_i32_0 = arith.constant 0 : i32
    %c0_i32_1 = arith.constant 0 : i32
    return %arg0, %arg1, %c0_i32, %c0_i32_0 : i32, i32, i32, i32
  }
}

module attributes {stable_mosaic.version = 11 : i64} {
  func.func @_conv3x3_kernel(%arg0: i32, %arg1: i32, %arg2: memref<1x16x16x8xf32, #tpu.memory_space<vmem>>, %arg3: memref<1x1x16x8xf32, #tpu.memory_space<vmem>>, %arg4: memref<1x1x16x8xf32, #tpu.memory_space<vmem>>, %arg5: memref<72x8xf32, #tpu.memory_space<vmem>>, %arg6: memref<1x8xf32, #tpu.memory_space<vmem>>, %arg7: memref<1x8xf32, #tpu.memory_space<vmem>>, %arg8: memref<1x16x16x8xf32, #tpu.memory_space<vmem>>, %arg9: memref<1x1x2x8xf32, #tpu.memory_space<vmem>>, %arg10: memref<18x18x8xf32, #tpu.memory_space<vmem>>) attributes {dimension_semantics = [#tpu.dimension_semantics<parallel>, #tpu.dimension_semantics<parallel>], iteration_bounds = array<i64: 2, 1>, scalar_prefetch = 0 : i64, scratch_operands = 1 : i64, tpu.core_type = #tpu.core_type<tc>, window_params = [{transform_indices = @transform_0, window_bounds = array<i64: 1, 16, 16, 8>}, {transform_indices = @transform_1, window_bounds = array<i64: 1, 1, 16, 8>}, {transform_indices = @transform_2, window_bounds = array<i64: 1, 1, 16, 8>}, {pipeline_mode = #tpu.pipeline_mode<synchronous>, transform_indices = @transform_3, window_bounds = array<i64: 72, 8>}, {pipeline_mode = #tpu.pipeline_mode<synchronous>, transform_indices = @transform_4, window_bounds = array<i64: 1, 8>}, {pipeline_mode = #tpu.pipeline_mode<synchronous>, transform_indices = @transform_5, window_bounds = array<i64: 1, 8>}, {transform_indices = @transform_6, window_bounds = array<i64: 1, 16, 16, 8>}, {transform_indices = @transform_7, window_bounds = array<i64: 1, 1, 2, 8>}]} {
    %c0 = arith.constant 0 : index
    %c0_0 = arith.constant 0 : index
    %0 = vector.load %arg6[%c0, %c0_0] : memref<1x8xf32, #tpu.memory_space<vmem>>, vector<1x8xf32>
    %1 = vector.shape_cast %0 : vector<1x8xf32> to vector<8xf32>
    %c0_1 = arith.constant 0 : index
    %c0_2 = arith.constant 0 : index
    %2 = vector.load %arg7[%c0_1, %c0_2] : memref<1x8xf32, #tpu.memory_space<vmem>>, vector<1x8xf32>
    %3 = vector.shape_cast %2 : vector<1x8xf32> to vector<8xf32>
    %cst = arith.constant 0.000000e+00 : f32
    %4 = vector.broadcast %cst : f32 to vector<18x1x8xf32>
    %c0_3 = arith.constant 0 : index
    %c0_4 = arith.constant 0 : index
    %c0_5 = arith.constant 0 : index
    %5 = vector.load %arg10[%c0_3, %c0_4, %c0_5] : memref<18x18x8xf32, #tpu.memory_space<vmem>>, vector<18x1x8xf32>
    tpu.vector_store %arg10[%c0_3, %c0_4, %c0_5], %4 {strides = array<i32>} : memref<18x18x8xf32, #tpu.memory_space<vmem>>, vector<18x1x8xf32>,
    %cst_6 = arith.constant 0.000000e+00 : f32
    %6 = vector.broadcast %cst_6 : f32 to vector<18x1x8xf32>
    %c0_7 = arith.constant 0 : index
    %c17 = arith.constant 17 : index
    %c0_8 = arith.constant 0 : index
    %7 = vector.load %arg10[%c0_7, %c17, %c0_8] : memref<18x18x8xf32, #tpu.memory_space<vmem>>, vector<18x1x8xf32>
    tpu.vector_store %arg10[%c0_7, %c17, %c0_8], %6 {strides = array<i32>} : memref<18x18x8xf32, #tpu.memory_space<vmem>>, vector<18x1x8xf32>,
    %c0_9 = arith.constant 0 : index
    %c0_10 = arith.constant 0 : index
    %c0_11 = arith.constant 0 : index
    %c0_12 = arith.constant 0 : index
    %8 = vector.load %arg2[%c0_9, %c0_10, %c0_11, %c0_12] : memref<1x16x16x8xf32, #tpu.memory_space<vmem>>, vector<1x16x16x8xf32>
    %9 = vector.shape_cast %8 : vector<1x16x16x8xf32> to vector<16x16x8xf32>
    %10 = vector.shape_cast %1 : vector<8xf32> to vector<1x1x8xf32>
    %11 = vector.broadcast %10 : vector<1x1x8xf32> to vector<16x16x8xf32>
    %12 = arith.mulf %9, %11 : vector<16x16x8xf32>
    %13 = vector.shape_cast %3 : vector<8xf32> to vector<1x1x8xf32>
    %14 = vector.broadcast %13 : vector<1x1x8xf32> to vector<16x16x8xf32>
    %15 = arith.addf %12, %14 : vector<16x16x8xf32>
    %cst_13 = arith.constant 0.000000e+00 : f32
    %16 = vector.broadcast %cst_13 : f32 to vector<16x16x8xf32>
    %17 = arith.cmpf oge, %15, %16 : vector<16x16x8xf32>
    %cst_14 = arith.constant 2.000000e-01 : f32
    %18 = vector.broadcast %cst_14 : f32 to vector<16x16x8xf32>
    %19 = arith.mulf %18, %15 : vector<16x16x8xf32>
    %20 = arith.select %17, %15, %19 : vector<16x16x8xi1>, vector<16x16x8xf32>
    %c1 = arith.constant 1 : index
    %c1_15 = arith.constant 1 : index
    %c0_16 = arith.constant 0 : index
    %21 = vector.load %arg10[%c1, %c1_15, %c0_16] : memref<18x18x8xf32, #tpu.memory_space<vmem>>, vector<16x16x8xf32>
    tpu.vector_store %arg10[%c1, %c1_15, %c0_16], %20 {strides = array<i32>} : memref<18x18x8xf32, #tpu.memory_space<vmem>>, vector<16x16x8xf32>,
    %c0_i32 = arith.constant 0 : i32
    %22 = arith.cmpi eq, %arg1, %c0_i32 : i32
    %23 = arith.extui %22 : i1 to i32
    %c0_i32_17 = arith.constant 0 : i32
    %24 = arith.cmpi ne, %23, %c0_i32_17 : i32
    scf.if %24 {
      %cst_40 = arith.constant 0.000000e+00 : f32
      %58 = vector.broadcast %cst_40 : f32 to vector<1x16x8xf32>
      %c0_41 = arith.constant 0 : index
      %c1_42 = arith.constant 1 : index
      %c0_43 = arith.constant 0 : index
      %59 = vector.load %arg10[%c0_41, %c1_42, %c0_43] : memref<18x18x8xf32, #tpu.memory_space<vmem>>, vector<1x16x8xf32>
      tpu.vector_store %arg10[%c0_41, %c1_42, %c0_43], %58 {strides = array<i32>} : memref<18x18x8xf32, #tpu.memory_space<vmem>>, vector<1x16x8xf32>,
    } else {
    }
    %c0_i32_18 = arith.constant 0 : i32
    %25 = arith.cmpi sgt, %arg1, %c0_i32_18 : i32
    %26 = arith.extui %25 : i1 to i32
    %c0_i32_19 = arith.constant 0 : i32
    %27 = arith.cmpi ne, %26, %c0_i32_19 : i32
    scf.if %27 {
      %c0_40 = arith.constant 0 : index
      %c0_41 = arith.constant 0 : index
      %c0_42 = arith.constant 0 : index
      %c0_43 = arith.constant 0 : index
      %58 = vector.load %arg3[%c0_40, %c0_41, %c0_42, %c0_43] : memref<1x1x16x8xf32, #tpu.memory_space<vmem>>, vector<1x1x16x8xf32>
      %59 = vector.shape_cast %58 : vector<1x1x16x8xf32> to vector<1x16x8xf32>
      %60 = vector.shape_cast %1 : vector<8xf32> to vector<1x1x8xf32>
      %61 = vector.broadcast %60 : vector<1x1x8xf32> to vector<1x16x8xf32>
      %62 = arith.mulf %59, %61 : vector<1x16x8xf32>
      %63 = vector.shape_cast %3 : vector<8xf32> to vector<1x1x8xf32>
      %64 = vector.broadcast %63 : vector<1x1x8xf32> to vector<1x16x8xf32>
      %65 = arith.addf %62, %64 : vector<1x16x8xf32>
      %cst_44 = arith.constant 0.000000e+00 : f32
      %66 = vector.broadcast %cst_44 : f32 to vector<1x16x8xf32>
      %67 = arith.cmpf oge, %65, %66 : vector<1x16x8xf32>
      %cst_45 = arith.constant 2.000000e-01 : f32
      %68 = vector.broadcast %cst_45 : f32 to vector<1x16x8xf32>
      %69 = arith.mulf %68, %65 : vector<1x16x8xf32>
      %70 = arith.select %67, %65, %69 : vector<1x16x8xi1>, vector<1x16x8xf32>
      %c0_46 = arith.constant 0 : index
      %c1_47 = arith.constant 1 : index
      %c0_48 = arith.constant 0 : index
      %71 = vector.load %arg10[%c0_46, %c1_47, %c0_48] : memref<18x18x8xf32, #tpu.memory_space<vmem>>, vector<1x16x8xf32>
      tpu.vector_store %arg10[%c0_46, %c1_47, %c0_48], %70 {strides = array<i32>} : memref<18x18x8xf32, #tpu.memory_space<vmem>>, vector<1x16x8xf32>,
    } else {
    }
    %c0_i32_20 = arith.constant 0 : i32
    %28 = arith.cmpi eq, %arg1, %c0_i32_20 : i32
    %29 = arith.extui %28 : i1 to i32
    %c0_i32_21 = arith.constant 0 : i32
    %30 = arith.cmpi ne, %29, %c0_i32_21 : i32
    scf.if %30 {
      %cst_40 = arith.constant 0.000000e+00 : f32
      %58 = vector.broadcast %cst_40 : f32 to vector<1x16x8xf32>
      %c17_41 = arith.constant 17 : index
      %c1_42 = arith.constant 1 : index
      %c0_43 = arith.constant 0 : index
      %59 = vector.load %arg10[%c17_41, %c1_42, %c0_43] : memref<18x18x8xf32, #tpu.memory_space<vmem>>, vector<1x16x8xf32>
      tpu.vector_store %arg10[%c17_41, %c1_42, %c0_43], %58 {strides = array<i32>} : memref<18x18x8xf32, #tpu.memory_space<vmem>>, vector<1x16x8xf32>,
    } else {
    }
    %c0_i32_22 = arith.constant 0 : i32
    %31 = arith.cmpi slt, %arg1, %c0_i32_22 : i32
    %32 = arith.extui %31 : i1 to i32
    %c0_i32_23 = arith.constant 0 : i32
    %33 = arith.cmpi ne, %32, %c0_i32_23 : i32
    scf.if %33 {
      %c0_40 = arith.constant 0 : index
      %c0_41 = arith.constant 0 : index
      %c0_42 = arith.constant 0 : index
      %c0_43 = arith.constant 0 : index
      %58 = vector.load %arg4[%c0_40, %c0_41, %c0_42, %c0_43] : memref<1x1x16x8xf32, #tpu.memory_space<vmem>>, vector<1x1x16x8xf32>
      %59 = vector.shape_cast %58 : vector<1x1x16x8xf32> to vector<1x16x8xf32>
      %60 = vector.shape_cast %1 : vector<8xf32> to vector<1x1x8xf32>
      %61 = vector.broadcast %60 : vector<1x1x8xf32> to vector<1x16x8xf32>
      %62 = arith.mulf %59, %61 : vector<1x16x8xf32>
      %63 = vector.shape_cast %3 : vector<8xf32> to vector<1x1x8xf32>
      %64 = vector.broadcast %63 : vector<1x1x8xf32> to vector<1x16x8xf32>
      %65 = arith.addf %62, %64 : vector<1x16x8xf32>
      %cst_44 = arith.constant 0.000000e+00 : f32
      %66 = vector.broadcast %cst_44 : f32 to vector<1x16x8xf32>
      %67 = arith.cmpf oge, %65, %66 : vector<1x16x8xf32>
      %cst_45 = arith.constant 2.000000e-01 : f32
      %68 = vector.broadcast %cst_45 : f32 to vector<1x16x8xf32>
      %69 = arith.mulf %68, %65 : vector<1x16x8xf32>
      %70 = arith.select %67, %65, %69 : vector<1x16x8xi1>, vector<1x16x8xf32>
      %c17_46 = arith.constant 17 : index
      %c1_47 = arith.constant 1 : index
      %c0_48 = arith.constant 0 : index
      %71 = vector.load %arg10[%c17_46, %c1_47, %c0_48] : memref<18x18x8xf32, #tpu.memory_space<vmem>>, vector<1x16x8xf32>
      tpu.vector_store %arg10[%c17_46, %c1_47, %c0_48], %70 {strides = array<i32>} : memref<18x18x8xf32, #tpu.memory_space<vmem>>, vector<1x16x8xf32>,
    } else {
    }
    %c0_24 = arith.constant 0 : index
    %c0_25 = arith.constant 0 : index
    %c0_26 = arith.constant 0 : index
    %34 = vector.load %arg10[%c0_24, %c0_25, %c0_26] : memref<18x18x8xf32, #tpu.memory_space<vmem>>, vector<18x18x8xf32>
    %35 = vector.extract_strided_slice %34 {offsets = [0, 0, 0], sizes = [16, 16, 8], strides = [1, 1, 1]} : vector<18x18x8xf32> to vector<16x16x8xf32>
    %36 = vector.extract_strided_slice %34 {offsets = [0, 1, 0], sizes = [16, 16, 8], strides = [1, 1, 1]} : vector<18x18x8xf32> to vector<16x16x8xf32>
    %37 = vector.extract_strided_slice %34 {offsets = [0, 2, 0], sizes = [16, 16, 8], strides = [1, 1, 1]} : vector<18x18x8xf32> to vector<16x16x8xf32>
    %38 = vector.extract_strided_slice %34 {offsets = [1, 0, 0], sizes = [16, 16, 8], strides = [1, 1, 1]} : vector<18x18x8xf32> to vector<16x16x8xf32>
    %39 = vector.extract_strided_slice %34 {offsets = [1, 1, 0], sizes = [16, 16, 8], strides = [1, 1, 1]} : vector<18x18x8xf32> to vector<16x16x8xf32>
    %40 = vector.extract_strided_slice %34 {offsets = [1, 2, 0], sizes = [16, 16, 8], strides = [1, 1, 1]} : vector<18x18x8xf32> to vector<16x16x8xf32>
    %41 = vector.extract_strided_slice %34 {offsets = [2, 0, 0], sizes = [16, 16, 8], strides = [1, 1, 1]} : vector<18x18x8xf32> to vector<16x16x8xf32>
    %42 = vector.extract_strided_slice %34 {offsets = [2, 1, 0], sizes = [16, 16, 8], strides = [1, 1, 1]} : vector<18x18x8xf32> to vector<16x16x8xf32>
    %43 = vector.extract_strided_slice %34 {offsets = [2, 2, 0], sizes = [16, 16, 8], strides = [1, 1, 1]} : vector<18x18x8xf32> to vector<16x16x8xf32>
    %44 = tpu.concatenate %35, %36, %37, %38, %39, %40, %41, %42, %43 in 2 : vector<16x16x8xf32>, vector<16x16x8xf32>, vector<16x16x8xf32>, vector<16x16x8xf32>, vector<16x16x8xf32>, vector<16x16x8xf32>, vector<16x16x8xf32>, vector<16x16x8xf32>, vector<16x16x8xf32> -> vector<16x16x72xf32>
    %45 = vector.shape_cast %44 : vector<16x16x72xf32> to vector<256x72xf32>
    %c0_27 = arith.constant 0 : index
    %c0_28 = arith.constant 0 : index
    %46 = vector.load %arg5[%c0_27, %c0_28] : memref<72x8xf32, #tpu.memory_space<vmem>>, vector<72x8xf32>
    %cst_29 = arith.constant dense<0.000000e+00> : vector<256x8xf32>
    %47 = tpu.matmul %45, %46, %cst_29 {dimension_numbers = #tpu.dot_dimension_numbers<[1], [0], [0], [1], [0, 0, 1, 1], [], []>} : vector<256x72xf32>, vector<72x8xf32>, vector<256x8xf32> -> vector<256x8xf32>
    %48 = vector.shape_cast %47 : vector<256x8xf32> to vector<1x16x16x8xf32>
    %c0_30 = arith.constant 0 : index
    %c0_31 = arith.constant 0 : index
    %c0_32 = arith.constant 0 : index
    %c0_33 = arith.constant 0 : index
    %49 = vector.load %arg8[%c0_30, %c0_31, %c0_32, %c0_33] : memref<1x16x16x8xf32, #tpu.memory_space<vmem>>, vector<1x16x16x8xf32>
    tpu.vector_store %arg8[%c0_30, %c0_31, %c0_32, %c0_33], %48 {strides = array<i32>} : memref<1x16x16x8xf32, #tpu.memory_space<vmem>>, vector<1x16x16x8xf32>,
    %cst_34 = arith.constant dense<0.000000e+00> : vector<8xf32>
    %50 = vector.multi_reduction <add>, %47, %cst_34 [0] : vector<256x8xf32> to vector<8xf32>
    %51 = vector.shape_cast %50 : vector<8xf32> to vector<1x8xf32>
    %52 = arith.mulf %47, %47 : vector<256x8xf32>
    %cst_35 = arith.constant dense<0.000000e+00> : vector<8xf32>
    %53 = vector.multi_reduction <add>, %52, %cst_35 [0] : vector<256x8xf32> to vector<8xf32>
    %54 = vector.shape_cast %53 : vector<8xf32> to vector<1x8xf32>
    %55 = tpu.concatenate %51, %54 in 0 : vector<1x8xf32>, vector<1x8xf32> -> vector<2x8xf32>
    %56 = vector.shape_cast %55 : vector<2x8xf32> to vector<1x1x2x8xf32>
    %c0_36 = arith.constant 0 : index
    %c0_37 = arith.constant 0 : index
    %c0_38 = arith.constant 0 : index
    %c0_39 = arith.constant 0 : index
    %57 = vector.load %arg9[%c0_36, %c0_37, %c0_38, %c0_39] : memref<1x1x2x8xf32, #tpu.memory_space<vmem>>, vector<1x1x2x8xf32>
    tpu.vector_store %arg9[%c0_36, %c0_37, %c0_38, %c0_39], %56 {strides = array<i32>} : memref<1x1x2x8xf32, #tpu.memory_space<vmem>>, vector<1x1x2x8xf32>,
    return
  }
  func.func @transform_0(%arg0: i32, %arg1: i32) -> (i32, i32, i32, i32) {
    %c0_i32 = arith.constant 0 : i32
    %c0_i32_0 = arith.constant 0 : i32
    %c0_i32_1 = arith.constant 0 : i32
    return %arg0, %arg1, %c0_i32, %c0_i32_0 : i32, i32, i32, i32
  }
  func.func @transform_1(%arg0: i32, %arg1: i32) -> (i32, i32, i32, i32) {
    %c16_i32 = arith.constant 16 : i32
    %0 = arith.muli %arg1, %c16_i32 : i32
    %c1_i32 = arith.constant 1 : i32
    %1 = arith.subi %0, %c1_i32 : i32
    %c0_i32 = arith.constant 0 : i32
    %2 = arith.maxsi %1, %c0_i32 : i32
    %c0_i32_0 = arith.constant 0 : i32
    %c0_i32_1 = arith.constant 0 : i32
    %c0_i32_2 = arith.constant 0 : i32
    return %arg0, %2, %c0_i32_0, %c0_i32_1 : i32, i32, i32, i32
  }
  func.func @transform_2(%arg0: i32, %arg1: i32) -> (i32, i32, i32, i32) {
    %c1_i32 = arith.constant 1 : i32
    %0 = arith.addi %arg1, %c1_i32 : i32
    %c16_i32 = arith.constant 16 : i32
    %1 = arith.muli %0, %c16_i32 : i32
    %c15_i32 = arith.constant 15 : i32
    %2 = arith.minsi %1, %c15_i32 : i32
    %c0_i32 = arith.constant 0 : i32
    %c0_i32_0 = arith.constant 0 : i32
    %c0_i32_1 = arith.constant 0 : i32
    return %arg0, %2, %c0_i32, %c0_i32_0 : i32, i32, i32, i32
  }
  func.func @transform_3(%arg0: i32, %arg1: i32) -> (i32, i32) {
    %c0_i32 = arith.constant 0 : i32
    %c0_i32_0 = arith.constant 0 : i32
    %c0_i32_1 = arith.constant 0 : i32
    return %c0_i32, %c0_i32_0 : i32, i32
  }
  func.func @transform_4(%arg0: i32, %arg1: i32) -> (i32, i32) {
    %c0_i32 = arith.constant 0 : i32
    %c0_i32_0 = arith.constant 0 : i32
    %c0_i32_1 = arith.constant 0 : i32
    return %c0_i32, %c0_i32_0 : i32, i32
  }
  func.func @transform_5(%arg0: i32, %arg1: i32) -> (i32, i32) {
    %c0_i32 = arith.constant 0 : i32
    %c0_i32_0 = arith.constant 0 : i32
    %c0_i32_1 = arith.constant 0 : i32
    return %c0_i32, %c0_i32_0 : i32, i32
  }
  func.func @transform_6(%arg0: i32, %arg1: i32) -> (i32, i32, i32, i32) {
    %c0_i32 = arith.constant 0 : i32
    %c0_i32_0 = arith.constant 0 : i32
    %c0_i32_1 = arith.constant 0 : i32
    return %arg0, %arg1, %c0_i32, %c0_i32_0 : i32, i32, i32, i32
  }
  func.func @transform_7(%arg0: i32, %arg1: i32) -> (i32, i32, i32, i32) {
    %c0_i32 = arith.constant 0 : i32
    %c0_i32_0 = arith.constant 0 : i32
    %c0_i32_1 = arith.constant 0 : i32
    return %arg0, %arg1, %c0_i32, %c0_i32_0 : i32, i32, i32, i32
  }
}

</mosaic_0001>

<llo_original>
// kernel: conv_layer_forward.5
$region0: #{conv_layer_forward.5}
  #allocation0 [shape = 'u32[]', space=smem, size = 0x4, offset = 0x4, fixed_abs, tag = 'smem constant byte address 0x4 - core index']
  #allocation1 [shape = 'u32[144,128]{1,0:T(1,128)}', space=vmem, size = 0x12000, scoped, tag = 'internal scratch']
  %s0 = inlined_call_operand.vmem [shape: f32[2,16,16,8], index: 0, kind: input, shape index: {}]
  %s1 = inlined_call_operand.vmem [shape: f32[1,8], index: 1, kind: input, shape index: {}]
  %s2 = inlined_call_operand.vmem [shape: f32[1,8], index: 2, kind: input, shape index: {}]
  %s3 = inlined_call_operand.vmem [shape: f32[2,16,16,8], index: 3, kind: output, shape index: {}]
  %s4 = sld [smem:[#allocation0]]
  $region45: #{conv_layer_forward.5} parent=0
    _
  %s6 = ssub.s32 1, %s4
  %s7 = scalar_select 0, %s6, %s4
  loop: start=0, step=1, limit=4
  $region2: #{conv_layer_forward.5} parent=0 // loop_pre_header
    _
  $region3: #{conv_layer_forward.5} parent=0 // loop_header
    %s9 = sphi 0, %s13
    %p10 = scmp.ge.s32.totalorder %s9, 4
    %s16 = sphi 0, %s28
    %s17 = sphi 0, %s24
    %s18 = sphi 0, %s16
    %s19 = sphi 0, %s17
    %s20 = sphi 0, %s18
    %s21 = sphi 0, %s19
    %s33 = sphi 0, %s35
    %s36 = sphi 0, %s33
    %s37 = sphi 0, %s36
    %s53 = sphi 0, %s37
    %s57 = sphi 0, %s57
    %s59 = sphi 0, %s57
    %s60 = sphi 0, %s59
    %s74 = sphi 0, %s60
    %s78 = sphi 0, %s78
    %s80 = sphi 0, %s78
    %s81 = sphi 0, %s80
    %s95 = sphi 0, %s81
    %s103 = sphi 0, %s105
    %s106 = sphi 0, %s103
    %s107 = sphi 0, %s106
    %s123 = sphi 0, %s107
  $region4: #{conv_layer_forward.5} parent=0 // loop_header_branch
    %12 = sbr.rel (%p10) target = $region8
  $region5: #{conv_layer_forward.5} parent=0 // loop_body
    %s14 = ssub.s32 %s9, 1
    %s15 = ssub.s32 %s9, 2
    %s22 = sadd.s32 1, %s17
    %p23 = scmp.ge.s32.totalorder %s22, 1
    %s24 = scalar_select %p23, 0, %s22
    %s25 = sadd.s32 1, %s16
    %s26 = scalar_select %p23, %s25, %s16
    %p27 = scmp.ge.s32.totalorder %s26, 2
    %s28 = scalar_select %p27, 0, %s26
    %s29 = ssub.s32 %s16, %s28
    %s30 = ssub.s32 %s17, %s24
    %s31 = sor.u32 %s29, %s30
    %p32 = scmp.eq.s32.totalorder %s31, 0
    %s34 = sadd.s32 %s33, 1
    %s35 = scalar_select %p32, %s33, %s34
    %p38 = pneg %p32
    %p39 = scmp.eq.s32.totalorder %s9, 1
    %p40 = por %p38, %p39
    %p41 = scmp.ne.s32.totalorder %s33, %s36
    %p42 = scmp.eq.s32.totalorder %s9, 0
    %p43 = por %p41, %p42
    %p44 = scmp.ne.s32.totalorder %s33, %s36
    %p45 = scmp.eq.s32.totalorder %s14, 1
    %p46 = por %p44, %p45
    %p47 = scmp.ne.s32.totalorder %s36, %s37
    %p48 = scmp.eq.s32.totalorder %s14, 0
    %p49 = por %p47, %p48
    %p50 = scmp.ne.s32.totalorder %s36, %s37
    %p51 = scmp.eq.s32.totalorder %s15, 1
    %p52 = por %p50, %p51
    %p54 = scmp.ne.s32.totalorder %s37, %s53
    %p55 = scmp.eq.s32.totalorder %s15, 0
    %p56 = por %p54, %p55
    %s58 = sadd.s32 %s57, 1
    %p61 = scmp.eq.s32.totalorder %s9, 1
    %p62 = scmp.ne.s32.totalorder %s57, %s59
    %p63 = scmp.eq.s32.totalorder %s9, 0
    %p64 = por %p62, %p63
    %p65 = scmp.ne.s32.totalorder %s57, %s59
    %p66 = scmp.eq.s32.totalorder %s14, 1
    %p67 = por %p65, %p66
    %p68 = scmp.ne.s32.totalorder %s59, %s60
    %p69 = scmp.eq.s32.totalorder %s14, 0
    %p70 = por %p68, %p69
    %p71 = scmp.ne.s32.totalorder %s59, %s60
    %p72 = scmp.eq.s32.totalorder %s15, 1
    %p73 = por %p71, %p72
    %p75 = scmp.ne.s32.totalorder %s60, %s74
    %p76 = scmp.eq.s32.totalorder %s15, 0
    %p77 = por %p75, %p76
    %s79 = sadd.s32 %s78, 1
    %p82 = scmp.eq.s32.totalorder %s9, 1
    %p83 = scmp.ne.s32.totalorder %s78, %s80
    %p84 = scmp.eq.s32.totalorder %s9, 0
    %p85 = por %p83, %p84
    %p86 = scmp.ne.s32.totalorder %s78, %s80
    %p87 = scmp.eq.s32.totalorder %s14, 1
    %p88 = por %p86, %p87
    %p89 = scmp.ne.s32.totalorder %s80, %s81
    %p90 = scmp.eq.s32.totalorder %s14, 0
    %p91 = por %p89, %p90
    %p92 = scmp.ne.s32.totalorder %s80, %s81
    %p93 = scmp.eq.s32.totalorder %s15, 1
    %p94 = por %p92, %p93
    %p96 = scmp.ne.s32.totalorder %s81, %s95
    %p97 = scmp.eq.s32.totalorder %s15, 0
    %p98 = por %p96, %p97
    %s99 = ssub.s32 %s16, %s28
    %s100 = ssub.s32 %s17, %s24
    %s101 = sor.u32 %s99, %s100
    %p102 = scmp.eq.s32.totalorder %s101, 0
    %s104 = sadd.s32 %s103, 1
    %s105 = scalar_select %p102, %s103, %s104
    %p108 = pneg %p102
    %p109 = scmp.eq.s32.totalorder %s9, 1
    %p110 = por %p108, %p109
    %p111 = scmp.ne.s32.totalorder %s103, %s106
    %p112 = scmp.eq.s32.totalorder %s9, 0
    %p113 = por %p111, %p112
    %p114 = scmp.ne.s32.totalorder %s103, %s106
    %p115 = scmp.eq.s32.totalorder %s14, 1
    %p116 = por %p114, %p115
    %p117 = scmp.ne.s32.totalorder %s106, %s107
    %p118 = scmp.eq.s32.totalorder %s14, 0
    %p119 = por %p117, %p118
    %p120 = scmp.ne.s32.totalorder %s106, %s107
    %p121 = scmp.eq.s32.totalorder %s15, 1
    %p122 = por %p120, %p121
    %p124 = scmp.ne.s32.totalorder %s107, %s123
    %p125 = scmp.eq.s32.totalorder %s15, 0
    %p126 = por %p124, %p125
    %p127 = scmp.le.s32.totalorder 1, %s9
    %p128 = scmp.lt.s32.totalorder %s9, 3
    %p129 = pnand %p127, %p128
    %p130 = pneg %p129
    // Predicated region
    $region9: #{conv_layer_forward.5} parent=5 // pred_check
      _
    $region10: #{conv_layer_forward.5} parent=5 // pred_check_branch
      %132 = sbr.rel (%p129) target = $region12
    $region11: #{conv_layer_forward.5} parent=5 // pred_region
      %s133 = ssub.s32 %s9, 1
      // Predicated region
      $region13: #{conv_layer_forward.5} parent=11 // pred_check
        %p134 = pneg %p70
      $region14: #{conv_layer_forward.5} parent=11 // pred_check_branch
        %136 = sbr.rel (%p134) target = $region16
      $region15: #{conv_layer_forward.5} parent=11 // pred_region
        _
      $region16: #{conv_layer_forward.5} parent=11 // pred_fallthru
        _
      // Predicated region
      $region17: #{conv_layer_forward.5} parent=11 // pred_check
        %p137 = pneg %p91
      $region18: #{conv_layer_forward.5} parent=11 // pred_check_branch
        %139 = sbr.rel (%p137) target = $region20
      $region19: #{conv_layer_forward.5} parent=11 // pred_region
        _
      $region20: #{conv_layer_forward.5} parent=11 // pred_fallthru
        _
    $region12: #{conv_layer_forward.5} parent=5 // pred_fallthru
      _
    %p140 = scmp.lt.s32.totalorder %s9, 2
    // Predicated region
    $region21: #{conv_layer_forward.5} parent=5 // pred_check
      %p141 = pneg %p140
    $region22: #{conv_layer_forward.5} parent=5 // pred_check_branch
      %143 = sbr.rel (%p141) target = $region24
    $region23: #{conv_layer_forward.5} parent=5 // pred_region
      // Predicated region
      $region25: #{conv_layer_forward.5} parent=23 // pred_check
        %p144 = pneg %p43
      $region26: #{conv_layer_forward.5} parent=23 // pred_check_branch
        %146 = sbr.rel (%p144) target = $region28
      $region27: #{conv_layer_forward.5} parent=23 // pred_region
        %s147 = smul.u32 16, %s17
        %p148 = scmp.lt.s32.totalorder %s16, 1
        %s149 = scalar_select %p148, %s16, 1
        %p150 = scmp.lt.s32.totalorder %s147, 15
        %s151 = scalar_select %p150, %s147, 15
        %s152 = smul.addr %s151, 2
        %s153 = smul.addr %s149, 32
        %s154 = sadd.s32 %s152, %s153
        %s155 = smul.addr %s154, 8
        %s156 = scalar_lea.vmem %s0, %s155
        %s157 = smul.u32 16, %s17
      $region28: #{conv_layer_forward.5} parent=23 // pred_fallthru
        _
    $region24: #{conv_layer_forward.5} parent=5 // pred_fallthru
      _
    %p158 = scmp.le.s32.totalorder 1, %s9
    %p159 = scmp.lt.s32.totalorder %s9, 3
    %p160 = pnand %p158, %p159
    %p161 = pneg %p160
    // Predicated region
    $region29: #{conv_layer_forward.5} parent=5 // pred_check
      _
    $region30: #{conv_layer_forward.5} parent=5 // pred_check_branch
      %163 = sbr.rel (%p160) target = $region32
    $region31: #{conv_layer_forward.5} parent=5 // pred_region
      %s164 = ssub.s32 %s9, 1
      %s165 = smul.u32 16, %s19
      %p166 = scmp.lt.s32.totalorder %s18, 1
      %s167 = scalar_select %p166, %s18, 1
      %p168 = scmp.lt.s32.totalorder %s165, 15
      %s169 = scalar_select %p168, %s165, 15
      %s170 = smul.addr %s169, 2
      %s171 = smul.addr %s167, 32
      %s172 = sadd.s32 %s170, %s171
      %s173 = smul.addr %s172, 8
      %s174 = scalar_lea.vmem %s0, %s173
      %p175 = pneg %p49
      %p176 = pneg %p46
      %p177 = pneg %p70
      %p178 = pneg %p67
      %p179 = pneg %p91
      %p180 = pneg %p88
      %p181 = pneg %p119
      %p182 = pneg %p116
      %s183 = smul.u32 16, %s19
      %p184 = scmp.lt.s32.totalorder %s18, 1
      %s185 = scalar_select %p184, %s18, 1
      %p186 = scmp.lt.s32.totalorder %s183, 15
      %s187 = scalar_select %p186, %s183, 15
      %s188 = smul.addr %s187, 2
      %s189 = smul.addr %s185, 32
      %s190 = sadd.s32 %s188, %s189
      %s191 = smul.addr %s190, 8
      %s192 = scalar_lea.vmem %s3, %s191
      %s193 = smul.u32 16, %s19
      %p194 = scmp.lt.s32.totalorder %s18, 1
      %s195 = scalar_select %p194, %s18, 1
      %p196 = scmp.lt.s32.totalorder %s193, 15
      %s197 = scalar_select %p196, %s193, 15
      %s198 = smul.addr %s197, 2
      %s199 = smul.addr %s195, 32
      %s200 = sadd.s32 %s198, %s199
      %s201 = smul.addr %s200, 8
      %s202 = scalar_lea.vmem %s0, %s201
      %s203 = smul.u32 16, %s19
      %s204 = smul.u32 16, %s19
      %p205 = scmp.lt.s32.totalorder %s18, 1
      %s206 = scalar_select %p205, %s18, 1
      %p207 = scmp.lt.s32.totalorder %s204, 15
      %s208 = scalar_select %p207, %s204, 15
      %s209 = smul.addr %s208, 2
      %s210 = smul.addr %s206, 32
      %s211 = sadd.s32 %s209, %s210
      %s212 = smul.addr %s211, 8
      %s213 = scalar_lea.vmem %s3, %s212
      %s214 = smul.u32 16, %s19
      %v215 = vld [vmem:[%s202] sm:$0xff]
      %v216 = vld [vmem:[%s202 + $0x8] sm:$0xff]
      %v217 = vld [vmem:[%s202 + $0x10] sm:$0xff]
      %v218 = vld [vmem:[%s202 + $0x18] sm:$0xff]
      %v219 = vld [vmem:[%s202 + $0x20] sm:$0xff]
      %v220 = vld [vmem:[%s202 + $0x28] sm:$0xff]
      %v221 = vld [vmem:[%s202 + $0x30] sm:$0xff]
      %v222 = vld [vmem:[%s202 + $0x38] sm:$0xff]
      %v223 = vld [vmem:[%s202 + $0x40] sm:$0xff]
      %v224 = vld [vmem:[%s202 + $0x48] sm:$0xff]
      %v225 = vld [vmem:[%s202 + $0x50] sm:$0xff]
      %v226 = vld [vmem:[%s202 + $0x58] sm:$0xff]
      %v227 = vld [vmem:[%s202 + $0x60] sm:$0xff]
      %v228 = vld [vmem:[%s202 + $0x68] sm:$0xff]
      %v229 = vld [vmem:[%s202 + $0x70] sm:$0xff]
      %v230 = vld [vmem:[%s202 + $0x78] sm:$0xff]
      %v231 = vld [vmem:[%s202 + $0x80] sm:$0xff]
      %v232 = vld [vmem:[%s202 + $0x88] sm:$0xff]
      %v233 = vld [vmem:[%s202 + $0x90] sm:$0xff]
      %v234 = vld [vmem:[%s202 + $0x98] sm:$0xff]
      %v235 = vld [vmem:[%s202 + $0xa0] sm:$0xff]
      %v236 = vld [vmem:[%s202 + $0xa8] sm:$0xff]
      %v237 = vld [vmem:[%s202 + $0xb0] sm:$0xff]
      %v238 = vld [vmem:[%s202 + $0xb8] sm:$0xff]
      %v239 = vld [vmem:[%s202 + $0xc0] sm:$0xff]
      %v240 = vld [vmem:[%s202 + $0xc8] sm:$0xff]
      %v241 = vld [vmem:[%s202 + $0xd0] sm:$0xff]
      %v242 = vld [vmem:[%s202 + $0xd8] sm:$0xff]
      %v243 = vld [vmem:[%s202 + $0xe0] sm:$0xff]
      %v244 = vld [vmem:[%s202 + $0xe8] sm:$0xff]
      %v245 = vld [vmem:[%s202 + $0xf0] sm:$0xff]
      %v246 = vld [vmem:[%s202 + $0xf8] sm:$0xff]
      %v247 = vld [vmem:[%s1] sm:$0x1]
      %v249 = vlaneseq
      %v250 = vshrl.u32 %v249, 7
      %v251 = vsub.s32 0, %v250
      %v252 = vrot.slane %v247, %v251
      %v254 = vmul.f32 %v215, %v252
      %v255 = vmul.f32 %v216, %v252
      %v256 = vmul.f32 %v217, %v252
      %v257 = vmul.f32 %v218, %v252
      %v258 = vmul.f32 %v219, %v252
      %v259 = vmul.f32 %v220, %v252
      %v260 = vmul.f32 %v221, %v252
      %v261 = vmul.f32 %v222, %v252
      %v262 = vmul.f32 %v223, %v252
      %v263 = vmul.f32 %v224, %v252
      %v264 = vmul.f32 %v225, %v252
      %v265 = vmul.f32 %v226, %v252
      %v266 = vmul.f32 %v227, %v252
      %v267 = vmul.f32 %v228, %v252
      %v268 = vmul.f32 %v229, %v252
      %v269 = vmul.f32 %v230, %v252
      %v270 = vmul.f32 %v231, %v252
      %v271 = vmul.f32 %v232, %v252
      %v272 = vmul.f32 %v233, %v252
      %v273 = vmul.f32 %v234, %v252
      %v274 = vmul.f32 %v235, %v252
      %v275 = vmul.f32 %v236, %v252
      %v276 = vmul.f32 %v237, %v252
      %v277 = vmul.f32 %v238, %v252
      %v278 = vmul.f32 %v239, %v252
      %v279 = vmul.f32 %v240, %v252
      %v280 = vmul.f32 %v241, %v252
      %v281 = vmul.f32 %v242, %v252
      %v282 = vmul.f32 %v243, %v252
      %v283 = vmul.f32 %v244, %v252
      %v284 = vmul.f32 %v245, %v252
      %v285 = vmul.f32 %v246, %v252
      %v286 = vld [vmem:[%s2] sm:$0x1]
      %v288 = vlaneseq
      %v289 = vshrl.u32 %v288, 7
      %v290 = vsub.s32 0, %v289
      %v291 = vrot.slane %v286, %v290
      %v293 = vadd.f32 %v254, %v291
      %v294 = vadd.f32 %v255, %v291
      %v295 = vadd.f32 %v256, %v291
      %v296 = vadd.f32 %v257, %v291
      %v297 = vadd.f32 %v258, %v291
      %v298 = vadd.f32 %v259, %v291
      %v299 = vadd.f32 %v260, %v291
      %v300 = vadd.f32 %v261, %v291
      %v301 = vadd.f32 %v262, %v291
      %v302 = vadd.f32 %v263, %v291
      %v303 = vadd.f32 %v264, %v291
      %v304 = vadd.f32 %v265, %v291
      %v305 = vadd.f32 %v266, %v291
      %v306 = vadd.f32 %v267, %v291
      %v307 = vadd.f32 %v268, %v291
      %v308 = vadd.f32 %v269, %v291
      %v309 = vadd.f32 %v270, %v291
      %v310 = vadd.f32 %v271, %v291
      %v311 = vadd.f32 %v272, %v291
      %v312 = vadd.f32 %v273, %v291
      %v313 = vadd.f32 %v274, %v291
      %v314 = vadd.f32 %v275, %v291
      %v315 = vadd.f32 %v276, %v291
      %v316 = vadd.f32 %v277, %v291
      %v317 = vadd.f32 %v278, %v291
      %v318 = vadd.f32 %v279, %v291
      %v319 = vadd.f32 %v280, %v291
      %v320 = vadd.f32 %v281, %v291
      %v321 = vadd.f32 %v282, %v291
      %v322 = vadd.f32 %v283, %v291
      %v323 = vadd.f32 %v284, %v291
      %v324 = vadd.f32 %v285, %v291
      %vm325 = vcmp.ge.f32.partialorder %v293, 0.0
      %vm326 = vcmp.ge.f32.partialorder %v294, 0.0
      %vm327 = vcmp.ge.f32.partialorder %v295, 0.0
      %vm328 = vcmp.ge.f32.partialorder %v296, 0.0
      %vm329 = vcmp.ge.f32.partialorder %v297, 0.0
      %vm330 = vcmp.ge.f32.partialorder %v298, 0.0
      %vm331 = vcmp.ge.f32.partialorder %v299, 0.0
      %vm332 = vcmp.ge.f32.partialorder %v300, 0.0
      %vm333 = vcmp.ge.f32.partialorder %v301, 0.0
      %vm334 = vcmp.ge.f32.partialorder %v302, 0.0
      %vm335 = vcmp.ge.f32.partialorder %v303, 0.0
      %vm336 = vcmp.ge.f32.partialorder %v304, 0.0
      %vm337 = vcmp.ge.f32.partialorder %v305, 0.0
      %vm338 = vcmp.ge.f32.partialorder %v306, 0.0
      %vm339 = vcmp.ge.f32.partialorder %v307, 0.0
      %vm340 = vcmp.ge.f32.partialorder %v308, 0.0
      %vm341 = vcmp.ge.f32.partialorder %v309, 0.0
      %vm342 = vcmp.ge.f32.partialorder %v310, 0.0
      %vm343 = vcmp.ge.f32.partialorder %v311, 0.0
      %vm344 = vcmp.ge.f32.partialorder %v312, 0.0
      %vm345 = vcmp.ge.f32.partialorder %v313, 0.0
      %vm346 = vcmp.ge.f32.partialorder %v314, 0.0
      %vm347 = vcmp.ge.f32.partialorder %v315, 0.0
      %vm348 = vcmp.ge.f32.partialorder %v316, 0.0
      %vm349 = vcmp.ge.f32.partialorder %v317, 0.0
      %vm350 = vcmp.ge.f32.partialorder %v318, 0.0
      %vm351 = vcmp.ge.f32.partialorder %v319, 0.0
      %vm352 = vcmp.ge.f32.partialorder %v320, 0.0
      %vm353 = vcmp.ge.f32.partialorder %v321, 0.0
      %vm354 = vcmp.ge.f32.partialorder %v322, 0.0
      %vm355 = vcmp.ge.f32.partialorder %v323, 0.0
      %vm356 = vcmp.ge.f32.partialorder %v324, 0.0
      %v357 = vmul.f32 %v293, 0.2
      %v358 = vmul.f32 %v294, 0.2
      %v359 = vmul.f32 %v295, 0.2
      %v360 = vmul.f32 %v296, 0.2
      %v361 = vmul.f32 %v297, 0.2
      %v362 = vmul.f32 %v298, 0.2
      %v363 = vmul.f32 %v299, 0.2
      %v364 = vmul.f32 %v300, 0.2
      %v365 = vmul.f32 %v301, 0.2
      %v366 = vmul.f32 %v302, 0.2
      %v367 = vmul.f32 %v303, 0.2
      %v368 = vmul.f32 %v304, 0.2
      %v369 = vmul.f32 %v305, 0.2
      %v370 = vmul.f32 %v306, 0.2
      %v371 = vmul.f32 %v307, 0.2
      %v372 = vmul.f32 %v308, 0.2
      %v373 = vmul.f32 %v309, 0.2
      %v374 = vmul.f32 %v310, 0.2
      %v375 = vmul.f32 %v311, 0.2
      %v376 = vmul.f32 %v312, 0.2
      %v377 = vmul.f32 %v313, 0.2
      %v378 = vmul.f32 %v314, 0.2
      %v379 = vmul.f32 %v315, 0.2
      %v380 = vmul.f32 %v316, 0.2
      %v381 = vmul.f32 %v317, 0.2
      %v382 = vmul.f32 %v318, 0.2
      %v383 = vmul.f32 %v319, 0.2
      %v384 = vmul.f32 %v320, 0.2
      %v385 = vmul.f32 %v321, 0.2
      %v386 = vmul.f32 %v322, 0.2
      %v387 = vmul.f32 %v323, 0.2
      %v388 = vmul.f32 %v324, 0.2
      %v389 = vsel %vm325, %v293, %v357
      %v390 = vsel %vm326, %v294, %v358
      %v391 = vsel %vm327, %v295, %v359
      %v392 = vsel %vm328, %v296, %v360
      %v393 = vsel %vm329, %v297, %v361
      %v394 = vsel %vm330, %v298, %v362
      %v395 = vsel %vm331, %v299, %v363
      %v396 = vsel %vm332, %v300, %v364
      %v397 = vsel %vm333, %v301, %v365
      %v398 = vsel %vm334, %v302, %v366
      %v399 = vsel %vm335, %v303, %v367
      %v400 = vsel %vm336, %v304, %v368
      %v401 = vsel %vm337, %v305, %v369
      %v402 = vsel %vm338, %v306, %v370
      %v403 = vsel %vm339, %v307, %v371
      %v404 = vsel %vm340, %v308, %v372
      %v405 = vsel %vm341, %v309, %v373
      %v406 = vsel %vm342, %v310, %v374
      %v407 = vsel %vm343, %v311, %v375
      %v408 = vsel %vm344, %v312, %v376
      %v409 = vsel %vm345, %v313, %v377
      %v410 = vsel %vm346, %v314, %v378
      %v411 = vsel %vm347, %v315, %v379
      %v412 = vsel %vm348, %v316, %v380
      %v413 = vsel %vm349, %v317, %v381
      %v414 = vsel %vm350, %v318, %v382
      %v415 = vsel %vm351, %v319, %v383
      %v416 = vsel %vm352, %v320, %v384
      %v417 = vsel %vm353, %v321, %v385
      %v418 = vsel %vm354, %v322, %v386
      %v419 = vsel %vm355, %v323, %v387
      %v420 = vsel %vm356, %v324, %v388
      %vm421 = vcmask 64512
      %422 = vst.msk [vmem:[%s213] sm:$0xff] %vm421, %v389
      %423 = vst.msk [vmem:[%s213 + $0x8] sm:$0xff] %vm421, %v390
      %424 = vst.msk [vmem:[%s213 + $0x10] sm:$0xff] %vm421, %v391
      %425 = vst.msk [vmem:[%s213 + $0x18] sm:$0xff] %vm421, %v392
      %426 = vst.msk [vmem:[%s213 + $0x20] sm:$0xff] %vm421, %v393
      %427 = vst.msk [vmem:[%s213 + $0x28] sm:$0xff] %vm421, %v394
      %428 = vst.msk [vmem:[%s213 + $0x30] sm:$0xff] %vm421, %v395
      %429 = vst.msk [vmem:[%s213 + $0x38] sm:$0xff] %vm421, %v396
      %430 = vst.msk [vmem:[%s213 + $0x40] sm:$0xff] %vm421, %v397
      %431 = vst.msk [vmem:[%s213 + $0x48] sm:$0xff] %vm421, %v398
      %432 = vst.msk [vmem:[%s213 + $0x50] sm:$0xff] %vm421, %v399
      %433 = vst.msk [vmem:[%s213 + $0x58] sm:$0xff] %vm421, %v400
      %434 = vst.msk [vmem:[%s213 + $0x60] sm:$0xff] %vm421, %v401
      %435 = vst.msk [vmem:[%s213 + $0x68] sm:$0xff] %vm421, %v402
      %436 = vst.msk [vmem:[%s213 + $0x70] sm:$0xff] %vm421, %v403
      %437 = vst.msk [vmem:[%s213 + $0x78] sm:$0xff] %vm421, %v404
      %438 = vst.msk [vmem:[%s213 + $0x80] sm:$0xff] %vm421, %v405
      %439 = vst.msk [vmem:[%s213 + $0x88] sm:$0xff] %vm421, %v406
      %440 = vst.msk [vmem:[%s213 + $0x90] sm:$0xff] %vm421, %v407
      %441 = vst.msk [vmem:[%s213 + $0x98] sm:$0xff] %vm421, %v408
      %442 = vst.msk [vmem:[%s213 + $0xa0] sm:$0xff] %vm421, %v409
      %443 = vst.msk [vmem:[%s213 + $0xa8] sm:$0xff] %vm421, %v410
      %444 = vst.msk [vmem:[%s213 + $0xb0] sm:$0xff] %vm421, %v411
      %445 = vst.msk [vmem:[%s213 + $0xb8] sm:$0xff] %vm421, %v412
      %446 = vst.msk [vmem:[%s213 + $0xc0] sm:$0xff] %vm421, %v413
      %447 = vst.msk [vmem:[%s213 + $0xc8] sm:$0xff] %vm421, %v414
      %448 = vst.msk [vmem:[%s213 + $0xd0] sm:$0xff] %vm421, %v415
      %449 = vst.msk [vmem:[%s213 + $0xd8] sm:$0xff] %vm421, %v416
      %450 = vst.msk [vmem:[%s213 + $0xe0] sm:$0xff] %vm421, %v417
      %451 = vst.msk [vmem:[%s213 + $0xe8] sm:$0xff] %vm421, %v418
      %452 = vst.msk [vmem:[%s213 + $0xf0] sm:$0xff] %vm421, %v419
      %453 = vst.msk [vmem:[%s213 + $0xf8] sm:$0xff] %vm421, %v420
      %s454 = smul.u32 16, %s19
      %p455 = scmp.lt.s32.totalorder %s18, 1
      %s456 = scalar_select %p455, %s18, 1
      %p457 = scmp.lt.s32.totalorder %s454, 15
      %s458 = scalar_select %p457, %s454, 15
      %s459 = smul.addr %s458, 2
      %s460 = smul.addr %s456, 32
      %s461 = sadd.s32 %s459, %s460
      %s462 = smul.addr %s461, 8
      %s463 = scalar_lea.vmem %s3, %s462
      // Predicated region
      $region33: #{conv_layer_forward.5} parent=31 // pred_check
        %p464 = pneg %p116
      $region34: #{conv_layer_forward.5} parent=31 // pred_check_branch
        %466 = sbr.rel (%p464) target = $region36
      $region35: #{conv_layer_forward.5} parent=31 // pred_region
        %s467 = smul.u32 16, %s19
      $region36: #{conv_layer_forward.5} parent=31 // pred_fallthru
        _
    $region32: #{conv_layer_forward.5} parent=5 // pred_fallthru
      _
    %p468 = scmp.le.s32.totalorder 2, %s9
    // Predicated region
    $region37: #{conv_layer_forward.5} parent=5 // pred_check
      %p469 = pneg %p468
    $region38: #{conv_layer_forward.5} parent=5 // pred_check_branch
      %471 = sbr.rel (%p469) target = $region40
    $region39: #{conv_layer_forward.5} parent=5 // pred_region
      %s472 = ssub.s32 %s9, 2
      // Predicated region
      $region41: #{conv_layer_forward.5} parent=39 // pred_check
        %p473 = pneg %p122
      $region42: #{conv_layer_forward.5} parent=39 // pred_check_branch
        %475 = sbr.rel (%p473) target = $region44
      $region43: #{conv_layer_forward.5} parent=39 // pred_region
        %s476 = smul.u32 16, %s21
        %p477 = scmp.lt.s32.totalorder %s20, 1
        %s478 = scalar_select %p477, %s20, 1
        %p479 = scmp.lt.s32.totalorder %s476, 15
        %s480 = scalar_select %p479, %s476, 15
        %s481 = smul.addr %s480, 2
        %s482 = smul.addr %s478, 32
        %s483 = sadd.s32 %s481, %s482
        %s484 = smul.addr %s483, 8
        %s485 = scalar_lea.vmem %s3, %s484
      $region44: #{conv_layer_forward.5} parent=39 // pred_fallthru
        _
    $region40: #{conv_layer_forward.5} parent=5 // pred_fallthru
      _
  $region6: #{conv_layer_forward.5} parent=0 // loop_footer
    %s13 = sadd.s32 1, %s9
  $region7: #{conv_layer_forward.5} parent=0 // loop_footer_branch
    %8 = sbr.rel target = $region3
  $region8: #{conv_layer_forward.5} parent=0 // loop_exit
    _

// kernel: conv_layer_forward.4
$region0: #{conv_layer_forward.4}
  #allocation0 [shape = 'u32[]', space=smem, size = 0x4, offset = 0x4, fixed_abs, tag = 'smem constant byte address 0x4 - core index']
  #allocation1 [shape = 'u32[144,128]{1,0:T(1,128)}', space=vmem, size = 0x12000, scoped, tag = 'internal scratch']
  #allocation2 [shape = 'f32[18,18,8]{2,1,0:T(8,128)}', space=vmem, size = 0x36000, scoped, tag = 'scratch operand']
  %s0 = inlined_call_operand.vmem [shape: f32[2,16,16,8], index: 0, kind: input, shape index: {}, may-alias: {0,1,2}]
  %s1 = inlined_call_operand.vmem [shape: f32[2,16,16,8], index: 1, kind: input, shape index: {}, may-alias: {0,1,2}]
  %s2 = inlined_call_operand.vmem [shape: f32[2,16,16,8], index: 2, kind: input, shape index: {}, may-alias: {0,1,2}]
  %s3 = inlined_call_operand.vmem [shape: f32[72,8], index: 3, kind: input, shape index: {}]
  %s4 = inlined_call_operand.vmem [shape: f32[1,8], index: 4, kind: input, shape index: {}]
  %s5 = inlined_call_operand.vmem [shape: f32[1,8], index: 5, kind: input, shape index: {}]
  %s6 = inlined_call_operand.vmem [shape: f32[2,16,16,8], index: 6, kind: output, shape index: {0}]
  %s7 = inlined_call_operand.vmem [shape: f32[2,1,2,8], index: 7, kind: output, shape index: {1}]
  %8 = xla_tuple %s6, %s7
  %s9 = sld [smem:[#allocation0]]
  $region81: #{conv_layer_forward.4} parent=0
    _
  %s11 = ssub.s32 1, %s9
  %s12 = scalar_select 0, %s11, %s9
  loop: start=0, step=1, limit=4
  $region2: #{conv_layer_forward.4} parent=0 // loop_pre_header
    _
  $region3: #{conv_layer_forward.4} parent=0 // loop_header
    %s14 = sphi 0, %s18
    %p15 = scmp.ge.s32.totalorder %s14, 4
    %s21 = sphi 0, %s33
    %s22 = sphi 0, %s29
    %s23 = sphi 0, %s21
    %s24 = sphi 0, %s22
    %s25 = sphi 0, %s23
    %s26 = sphi 0, %s24
    %s38 = sphi 0, %s40
    %s41 = sphi 0, %s38
    %s42 = sphi 0, %s41
    %s58 = sphi 0, %s42
    %s74 = sphi 0, %s76
    %s77 = sphi 0, %s74
    %s78 = sphi 0, %s77
    %s94 = sphi 0, %s78
    %s110 = sphi 0, %s112
    %s113 = sphi 0, %s110
    %s114 = sphi 0, %s113
    %s130 = sphi 0, %s114
    %s134 = sphi 0, %s134
    %s136 = sphi 0, %s134
    %s137 = sphi 0, %s136
    %s151 = sphi 0, %s137
    %s155 = sphi 0, %s155
    %s157 = sphi 0, %s155
    %s158 = sphi 0, %s157
    %s172 = sphi 0, %s158
    %s176 = sphi 0, %s176
    %s178 = sphi 0, %s176
    %s179 = sphi 0, %s178
    %s193 = sphi 0, %s179
    %s201 = sphi 0, %s203
    %s204 = sphi 0, %s201
    %s205 = sphi 0, %s204
    %s221 = sphi 0, %s205
    %s229 = sphi 0, %s231
    %s232 = sphi 0, %s229
    %s233 = sphi 0, %s232
    %s249 = sphi 0, %s233
  $region4: #{conv_layer_forward.4} parent=0 // loop_header_branch
    %17 = sbr.rel (%p15) target = $region8
  $region5: #{conv_layer_forward.4} parent=0 // loop_body
    %s19 = ssub.s32 %s14, 1
    %s20 = ssub.s32 %s14, 2
    %s27 = sadd.s32 1, %s22
    %p28 = scmp.ge.s32.totalorder %s27, 1
    %s29 = scalar_select %p28, 0, %s27
    %s30 = sadd.s32 1, %s21
    %s31 = scalar_select %p28, %s30, %s21
    %p32 = scmp.ge.s32.totalorder %s31, 2
    %s33 = scalar_select %p32, 0, %s31
    %s34 = ssub.s32 %s21, %s33
    %s35 = ssub.s32 %s22, %s29
    %s36 = sor.u32 %s34, %s35
    %p37 = scmp.eq.s32.totalorder %s36, 0
    %s39 = sadd.s32 %s38, 1
    %s40 = scalar_select %p37, %s38, %s39
    %p43 = pneg %p37
    %p44 = scmp.eq.s32.totalorder %s14, 1
    %p45 = por %p43, %p44
    %p46 = scmp.ne.s32.totalorder %s38, %s41
    %p47 = scmp.eq.s32.totalorder %s14, 0
    %p48 = por %p46, %p47
    %p49 = scmp.ne.s32.totalorder %s38, %s41
    %p50 = scmp.eq.s32.totalorder %s19, 1
    %p51 = por %p49, %p50
    %p52 = scmp.ne.s32.totalorder %s41, %s42
    %p53 = scmp.eq.s32.totalorder %s19, 0
    %p54 = por %p52, %p53
    %p55 = scmp.ne.s32.totalorder %s41, %s42
    %p56 = scmp.eq.s32.totalorder %s20, 1
    %p57 = por %p55, %p56
    %p59 = scmp.ne.s32.totalorder %s42, %s58
    %p60 = scmp.eq.s32.totalorder %s20, 0
    %p61 = por %p59, %p60
    %s62 = smul.u32 %s22, 16
    %s63 = ssub.s32 %s62, 1
    %p64 = scmp.gt.s32.totalorder %s63, 0
    %s65 = scalar_select %p64, %s63, 0
    %s66 = smul.u32 %s29, 16
    %s67 = ssub.s32 %s66, 1
    %p68 = scmp.gt.s32.totalorder %s67, 0
    %s69 = scalar_select %p68, %s67, 0
    %s70 = ssub.s32 %s21, %s33
    %s71 = ssub.s32 %s65, %s69
    %s72 = sor.u32 %s70, %s71
    %p73 = scmp.eq.s32.totalorder %s72, 0
    %s75 = sadd.s32 %s74, 1
    %s76 = scalar_select %p73, %s74, %s75
    %p79 = pneg %p73
    %p80 = scmp.eq.s32.totalorder %s14, 1
    %p81 = por %p79, %p80
    %p82 = scmp.ne.s32.totalorder %s74, %s77
    %p83 = scmp.eq.s32.totalorder %s14, 0
    %p84 = por %p82, %p83
    %p85 = scmp.ne.s32.totalorder %s74, %s77
    %p86 = scmp.eq.s32.totalorder %s19, 1
    %p87 = por %p85, %p86
    %p88 = scmp.ne.s32.totalorder %s77, %s78
    %p89 = scmp.eq.s32.totalorder %s19, 0
    %p90 = por %p88, %p89
    %p91 = scmp.ne.s32.totalorder %s77, %s78
    %p92 = scmp.eq.s32.totalorder %s20, 1
    %p93 = por %p91, %p92
    %p95 = scmp.ne.s32.totalorder %s78, %s94
    %p96 = scmp.eq.s32.totalorder %s20, 0
    %p97 = por %p95, %p96
    %s98 = sadd.s32 %s22, 1
    %s99 = smul.u32 %s98, 16
    %p100 = scmp.lt.s32.totalorder %s99, 15
    %s101 = scalar_select %p100, %s99, 15
    %s102 = sadd.s32 %s29, 1
    %s103 = smul.u32 %s102, 16
    %p104 = scmp.lt.s32.totalorder %s103, 15
    %s105 = scalar_select %p104, %s103, 15
    %s106 = ssub.s32 %s21, %s33
    %s107 = ssub.s32 %s101, %s105
    %s108 = sor.u32 %s106, %s107
    %p109 = scmp.eq.s32.totalorder %s108, 0
    %s111 = sadd.s32 %s110, 1
    %s112 = scalar_select %p109, %s110, %s111
    %p115 = pneg %p109
    %p116 = scmp.eq.s32.totalorder %s14, 1
    %p117 = por %p115, %p116
    %p118 = scmp.ne.s32.totalorder %s110, %s113
    %p119 = scmp.eq.s32.totalorder %s14, 0
    %p120 = por %p118, %p119
    %p121 = scmp.ne.s32.totalorder %s110, %s113
    %p122 = scmp.eq.s32.totalorder %s19, 1
    %p123 = por %p121, %p122
    %p124 = scmp.ne.s32.totalorder %s113, %s114
    %p125 = scmp.eq.s32.totalorder %s19, 0
    %p126 = por %p124, %p125
    %p127 = scmp.ne.s32.totalorder %s113, %s114
    %p128 = scmp.eq.s32.totalorder %s20, 1
    %p129 = por %p127, %p128
    %p131 = scmp.ne.s32.totalorder %s114, %s130
    %p132 = scmp.eq.s32.totalorder %s20, 0
    %p133 = por %p131, %p132
    %s135 = sadd.s32 %s134, 1
    %p138 = scmp.eq.s32.totalorder %s14, 1
    %p139 = scmp.ne.s32.totalorder %s134, %s136
    %p140 = scmp.eq.s32.totalorder %s14, 0
    %p141 = por %p139, %p140
    %p142 = scmp.ne.s32.totalorder %s134, %s136
    %p143 = scmp.eq.s32.totalorder %s19, 1
    %p144 = por %p142, %p143
    %p145 = scmp.ne.s32.totalorder %s136, %s137
    %p146 = scmp.eq.s32.totalorder %s19, 0
    %p147 = por %p145, %p146
    %p148 = scmp.ne.s32.totalorder %s136, %s137
    %p149 = scmp.eq.s32.totalorder %s20, 1
    %p150 = por %p148, %p149
    %p152 = scmp.ne.s32.totalorder %s137, %s151
    %p153 = scmp.eq.s32.totalorder %s20, 0
    %p154 = por %p152, %p153
    %s156 = sadd.s32 %s155, 1
    %p159 = scmp.eq.s32.totalorder %s14, 1
    %p160 = scmp.ne.s32.totalorder %s155, %s157
    %p161 = scmp.eq.s32.totalorder %s14, 0
    %p162 = por %p160, %p161
    %p163 = scmp.ne.s32.totalorder %s155, %s157
    %p164 = scmp.eq.s32.totalorder %s19, 1
    %p165 = por %p163, %p164
    %p166 = scmp.ne.s32.totalorder %s157, %s158
    %p167 = scmp.eq.s32.totalorder %s19, 0
    %p168 = por %p166, %p167
    %p169 = scmp.ne.s32.totalorder %s157, %s158
    %p170 = scmp.eq.s32.totalorder %s20, 1
    %p171 = por %p169, %p170
    %p173 = scmp.ne.s32.totalorder %s158, %s172
    %p174 = scmp.eq.s32.totalorder %s20, 0
    %p175 = por %p173, %p174
    %s177 = sadd.s32 %s176, 1
    %p180 = scmp.eq.s32.totalorder %s14, 1
    %p181 = scmp.ne.s32.totalorder %s176, %s178
    %p182 = scmp.eq.s32.totalorder %s14, 0
    %p183 = por %p181, %p182
    %p184 = scmp.ne.s32.totalorder %s176, %s178
    %p185 = scmp.eq.s32.totalorder %s19, 1
    %p186 = por %p184, %p185
    %p187 = scmp.ne.s32.totalorder %s178, %s179
    %p188 = scmp.eq.s32.totalorder %s19, 0
    %p189 = por %p187, %p188
    %p190 = scmp.ne.s32.totalorder %s178, %s179
    %p191 = scmp.eq.s32.totalorder %s20, 1
    %p192 = por %p190, %p191
    %p194 = scmp.ne.s32.totalorder %s179, %s193
    %p195 = scmp.eq.s32.totalorder %s20, 0
    %p196 = por %p194, %p195
    %s197 = ssub.s32 %s21, %s33
    %s198 = ssub.s32 %s22, %s29
    %s199 = sor.u32 %s197, %s198
    %p200 = scmp.eq.s32.totalorder %s199, 0
    %s202 = sadd.s32 %s201, 1
    %s203 = scalar_select %p200, %s201, %s202
    %p206 = pneg %p200
    %p207 = scmp.eq.s32.totalorder %s14, 1
    %p208 = por %p206, %p207
    %p209 = scmp.ne.s32.totalorder %s201, %s204
    %p210 = scmp.eq.s32.totalorder %s14, 0
    %p211 = por %p209, %p210
    %p212 = scmp.ne.s32.totalorder %s201, %s204
    %p213 = scmp.eq.s32.totalorder %s19, 1
    %p214 = por %p212, %p213
    %p215 = scmp.ne.s32.totalorder %s204, %s205
    %p216 = scmp.eq.s32.totalorder %s19, 0
    %p217 = por %p215, %p216
    %p218 = scmp.ne.s32.totalorder %s204, %s205
    %p219 = scmp.eq.s32.totalorder %s20, 1
    %p220 = por %p218, %p219
    %p222 = scmp.ne.s32.totalorder %s205, %s221
    %p223 = scmp.eq.s32.totalorder %s20, 0
    %p224 = por %p222, %p223
    %s225 = ssub.s32 %s21, %s33
    %s226 = ssub.s32 %s22, %s29
    %s227 = sor.u32 %s225, %s226
    %p228 = scmp.eq.s32.totalorder %s227, 0
    %s230 = sadd.s32 %s229, 1
    %s231 = scalar_select %p228, %s229, %s230
    %p234 = pneg %p228
    %p235 = scmp.eq.s32.totalorder %s14, 1
    %p236 = por %p234, %p235
    %p237 = scmp.ne.s32.totalorder %s229, %s232
    %p238 = scmp.eq.s32.totalorder %s14, 0
    %p239 = por %p237, %p238
    %p240 = scmp.ne.s32.totalorder %s229, %s232
    %p241 = scmp.eq.s32.totalorder %s19, 1
    %p242 = por %p240, %p241
    %p243 = scmp.ne.s32.totalorder %s232, %s233
    %p244 = scmp.eq.s32.totalorder %s19, 0
    %p245 = por %p243, %p244
    %p246 = scmp.ne.s32.totalorder %s232, %s233
    %p247 = scmp.eq.s32.totalorder %s20, 1
    %p248 = por %p246, %p247
    %p250 = scmp.ne.s32.totalorder %s233, %s249
    %p251 = scmp.eq.s32.totalorder %s20, 0
    %p252 = por %p250, %p251
    %p253 = scmp.le.s32.totalorder 1, %s14
    %p254 = scmp.lt.s32.totalorder %s14, 3
    %p255 = pnand %p253, %p254
    %p256 = pneg %p255
    // Predicated region
    $region9: #{conv_layer_forward.4} parent=5 // pred_check
      _
    $region10: #{conv_layer_forward.4} parent=5 // pred_check_branch
      %258 = sbr.rel (%p255) target = $region12
    $region11: #{conv_layer_forward.4} parent=5 // pred_region
      %s259 = ssub.s32 %s14, 1
      // Predicated region
      $region13: #{conv_layer_forward.4} parent=11 // pred_check
        %p260 = pneg %p147
      $region14: #{conv_layer_forward.4} parent=11 // pred_check_branch
        %262 = sbr.rel (%p260) target = $region16
      $region15: #{conv_layer_forward.4} parent=11 // pred_region
        _
      $region16: #{conv_layer_forward.4} parent=11 // pred_fallthru
        _
      // Predicated region
      $region17: #{conv_layer_forward.4} parent=11 // pred_check
        %p263 = pneg %p168
      $region18: #{conv_layer_forward.4} parent=11 // pred_check_branch
        %265 = sbr.rel (%p263) target = $region20
      $region19: #{conv_layer_forward.4} parent=11 // pred_region
        _
      $region20: #{conv_layer_forward.4} parent=11 // pred_fallthru
        _
      // Predicated region
      $region21: #{conv_layer_forward.4} parent=11 // pred_check
        %p266 = pneg %p189
      $region22: #{conv_layer_forward.4} parent=11 // pred_check_branch
        %268 = sbr.rel (%p266) target = $region24
      $region23: #{conv_layer_forward.4} parent=11 // pred_region
        _
      $region24: #{conv_layer_forward.4} parent=11 // pred_fallthru
        _
    $region12: #{conv_layer_forward.4} parent=5 // pred_fallthru
      _
    %p269 = scmp.lt.s32.totalorder %s14, 2
    // Predicated region
    $region25: #{conv_layer_forward.4} parent=5 // pred_check
      %p270 = pneg %p269
    $region26: #{conv_layer_forward.4} parent=5 // pred_check_branch
      %272 = sbr.rel (%p270) target = $region28
    $region27: #{conv_layer_forward.4} parent=5 // pred_region
      // Predicated region
      $region29: #{conv_layer_forward.4} parent=27 // pred_check
        %p273 = pneg %p48
      $region30: #{conv_layer_forward.4} parent=27 // pred_check_branch
        %275 = sbr.rel (%p273) target = $region32
      $region31: #{conv_layer_forward.4} parent=27 // pred_region
        %s276 = smul.u32 16, %s22
        %p277 = scmp.lt.s32.totalorder %s21, 1
        %s278 = scalar_select %p277, %s21, 1
        %p279 = scmp.lt.s32.totalorder %s276, 15
        %s280 = scalar_select %p279, %s276, 15
        %s281 = smul.addr %s280, 2
        %s282 = smul.addr %s278, 32
        %s283 = sadd.s32 %s281, %s282
        %s284 = smul.addr %s283, 8
        %s285 = scalar_lea.vmem %s0, %s284
        %s286 = smul.u32 16, %s22
      $region32: #{conv_layer_forward.4} parent=27 // pred_fallthru
        _
      // Predicated region
      $region33: #{conv_layer_forward.4} parent=27 // pred_check
        %p287 = pneg %p84
      $region34: #{conv_layer_forward.4} parent=27 // pred_check_branch
        %289 = sbr.rel (%p287) target = $region36
      $region35: #{conv_layer_forward.4} parent=27 // pred_region
        %s290 = smul.u32 %s22, 16
        %s291 = ssub.s32 %s290, 1
        %p292 = scmp.gt.s32.totalorder %s291, 0
        %s293 = scalar_select %p292, %s291, 0
        %p294 = scmp.lt.s32.totalorder %s21, 1
        %s295 = scalar_select %p294, %s21, 1
        %p296 = scmp.lt.s32.totalorder %s293, 15
        %s297 = scalar_select %p296, %s293, 15
        %s298 = smul.addr %s297, 2
        %s299 = smul.addr %s295, 32
        %s300 = sadd.s32 %s298, %s299
        %s301 = smul.addr %s300, 8
        %s302 = scalar_lea.vmem %s1, %s301
        %s303 = smul.u32 %s22, 16
        %s304 = ssub.s32 %s303, 1
        %p305 = scmp.gt.s32.totalorder %s304, 0
        %s306 = scalar_select %p305, %s304, 0
      $region36: #{conv_layer_forward.4} parent=27 // pred_fallthru
        _
      // Predicated region
      $region37: #{conv_layer_forward.4} parent=27 // pred_check
        %p307 = pneg %p120
      $region38: #{conv_layer_forward.4} parent=27 // pred_check_branch
        %309 = sbr.rel (%p307) target = $region40
      $region39: #{conv_layer_forward.4} parent=27 // pred_region
        %s310 = sadd.s32 %s22, 1
        %s311 = smul.u32 %s310, 16
        %p312 = scmp.lt.s32.totalorder %s311, 15
        %s313 = scalar_select %p312, %s311, 15
        %p314 = scmp.lt.s32.totalorder %s21, 1
        %s315 = scalar_select %p314, %s21, 1
        %p316 = scmp.lt.s32.totalorder %s313, 15
        %s317 = scalar_select %p316, %s313, 15
        %s318 = smul.addr %s317, 2
        %s319 = smul.addr %s315, 32
        %s320 = sadd.s32 %s318, %s319
        %s321 = smul.addr %s320, 8
        %s322 = scalar_lea.vmem %s2, %s321
        %s323 = sadd.s32 %s22, 1
        %s324 = smul.u32 %s323, 16
        %p325 = scmp.lt.s32.totalorder %s324, 15
        %s326 = scalar_select %p325, %s324, 15
      $region40: #{conv_layer_forward.4} parent=27 // pred_fallthru
        _
    $region28: #{conv_layer_forward.4} parent=5 // pred_fallthru
      _
    %p327 = scmp.le.s32.totalorder 1, %s14
    %p328 = scmp.lt.s32.totalorder %s14, 3
    %p329 = pnand %p327, %p328
    %p330 = pneg %p329
    // Predicated region
    $region41: #{conv_layer_forward.4} parent=5 // pred_check
      _
    $region42: #{conv_layer_forward.4} parent=5 // pred_check_branch
      %332 = sbr.rel (%p329) target = $region44
    $region43: #{conv_layer_forward.4} parent=5 // pred_region
      %s333 = ssub.s32 %s14, 1
      %s334 = smul.u32 16, %s24
      %p335 = scmp.lt.s32.totalorder %s23, 1
      %s336 = scalar_select %p335, %s23, 1
      %p337 = scmp.lt.s32.totalorder %s334, 15
      %s338 = scalar_select %p337, %s334, 15
      %s339 = smul.addr %s338, 2
      %s340 = smul.addr %s336, 32
      %s341 = sadd.s32 %s339, %s340
      %s342 = smul.addr %s341, 8
      %s343 = scalar_lea.vmem %s0, %s342
      %p344 = pneg %p54
      %p345 = pneg %p51
      %s346 = smul.u32 %s24, 16
      %s347 = ssub.s32 %s346, 1
      %p348 = scmp.gt.s32.totalorder %s347, 0
      %s349 = scalar_select %p348, %s347, 0
      %p350 = scmp.lt.s32.totalorder %s23, 1
      %s351 = scalar_select %p350, %s23, 1
      %p352 = scmp.lt.s32.totalorder %s349, 15
      %s353 = scalar_select %p352, %s349, 15
      %s354 = smul.addr %s353, 2
      %s355 = smul.addr %s351, 32
      %s356 = sadd.s32 %s354, %s355
      %s357 = smul.addr %s356, 8
      %s358 = scalar_lea.vmem %s1, %s357
      %p359 = pneg %p90
      %p360 = pneg %p87
      %s361 = sadd.s32 %s24, 1
      %s362 = smul.u32 %s361, 16
      %p363 = scmp.lt.s32.totalorder %s362, 15
      %s364 = scalar_select %p363, %s362, 15
      %p365 = scmp.lt.s32.totalorder %s23, 1
      %s366 = scalar_select %p365, %s23, 1
      %p367 = scmp.lt.s32.totalorder %s364, 15
      %s368 = scalar_select %p367, %s364, 15
      %s369 = smul.addr %s368, 2
      %s370 = smul.addr %s366, 32
      %s371 = sadd.s32 %s369, %s370
      %s372 = smul.addr %s371, 8
      %s373 = scalar_lea.vmem %s2, %s372
      %p374 = pneg %p126
      %p375 = pneg %p123
      %p376 = pneg %p147
      %p377 = pneg %p144
      %p378 = pneg %p168
      %p379 = pneg %p165
      %p380 = pneg %p189
      %p381 = pneg %p186
      %p382 = pneg %p217
      %p383 = pneg %p214
      %s384 = smul.u32 16, %s24
      %p385 = scmp.lt.s32.totalorder %s23, 1
      %s386 = scalar_select %p385, %s23, 1
      %p387 = scmp.lt.s32.totalorder %s384, 15
      %s388 = scalar_select %p387, %s384, 15
      %s389 = smul.addr %s388, 2
      %s390 = smul.addr %s386, 32
      %s391 = sadd.s32 %s389, %s390
      %s392 = smul.addr %s391, 8
      %s393 = scalar_lea.vmem %s6, %s392
      %p394 = pneg %p245
      %p395 = pneg %p242
      %p396 = scmp.lt.s32.totalorder %s23, 1
      %s397 = scalar_select %p396, %s23, 1
      %p398 = scmp.lt.s32.totalorder %s24, 0
      %s399 = scalar_select %p398, %s24, 0
      %s400 = sadd.s32 %s399, %s397
      %s401 = smul.addr %s400, 2
      %s402 = scalar_lea.vmem %s7, %s401
      %s403 = smul.u32 16, %s24
      %p404 = scmp.lt.s32.totalorder %s23, 1
      %s405 = scalar_select %p404, %s23, 1
      %p406 = scmp.lt.s32.totalorder %s403, 15
      %s407 = scalar_select %p406, %s403, 15
      %s408 = smul.addr %s407, 2
      %s409 = smul.addr %s405, 32
      %s410 = sadd.s32 %s408, %s409
      %s411 = smul.addr %s410, 8
      %s412 = scalar_lea.vmem %s0, %s411
      %s413 = smul.u32 16, %s24
      %s414 = smul.u32 %s24, 16
      %s415 = ssub.s32 %s414, 1
      %p416 = scmp.gt.s32.totalorder %s415, 0
      %s417 = scalar_select %p416, %s415, 0
      %p418 = scmp.lt.s32.totalorder %s23, 1
      %s419 = scalar_select %p418, %s23, 1
      %p420 = scmp.lt.s32.totalorder %s417, 15
      %s421 = scalar_select %p420, %s417, 15
      %s422 = smul.addr %s421, 2
      %s423 = smul.addr %s419, 32
      %s424 = sadd.s32 %s422, %s423
      %s425 = smul.addr %s424, 8
      %s426 = scalar_lea.vmem %s1, %s425
      %s427 = smul.u32 %s24, 16
      %s428 = ssub.s32 %s427, 1
      %p429 = scmp.gt.s32.totalorder %s428, 0
      %s430 = scalar_select %p429, %s428, 0
      %s431 = sadd.s32 %s24, 1
      %s432 = smul.u32 %s431, 16
      %p433 = scmp.lt.s32.totalorder %s432, 15
      %s434 = scalar_select %p433, %s432, 15
      %p435 = scmp.lt.s32.totalorder %s23, 1
      %s436 = scalar_select %p435, %s23, 1
      %p437 = scmp.lt.s32.totalorder %s434, 15
      %s438 = scalar_select %p437, %s434, 15
      %s439 = smul.addr %s438, 2
      %s440 = smul.addr %s436, 32
      %s441 = sadd.s32 %s439, %s440
      %s442 = smul.addr %s441, 8
      %s443 = scalar_lea.vmem %s2, %s442
      %s444 = sadd.s32 %s24, 1
      %s445 = smul.u32 %s444, 16
      %p446 = scmp.lt.s32.totalorder %s445, 15
      %s447 = scalar_select %p446, %s445, 15
      %s448 = smul.u32 16, %s24
      %p449 = scmp.lt.s32.totalorder %s23, 1
      %s450 = scalar_select %p449, %s23, 1
      %p451 = scmp.lt.s32.totalorder %s448, 15
      %s452 = scalar_select %p451, %s448, 15
      %s453 = smul.addr %s452, 2
      %s454 = smul.addr %s450, 32
      %s455 = sadd.s32 %s453, %s454
      %s456 = smul.addr %s455, 8
      %s457 = scalar_lea.vmem %s6, %s456
      %s458 = smul.u32 16, %s24
      %p459 = scmp.lt.s32.totalorder %s23, 1
      %s460 = scalar_select %p459, %s23, 1
      %p461 = scmp.lt.s32.totalorder %s24, 0
      %s462 = scalar_select %p461, %s24, 0
      %s463 = sadd.s32 %s462, %s460
      %s464 = smul.addr %s463, 2
      %s465 = scalar_lea.vmem %s7, %s464
      %v466 = vld [vmem:[%s4] sm:$0x1]
      %v467 = vld [vmem:[%s5] sm:$0x1]
      %vm468 = vcmask 57344
      %469 = vst.msk [vmem:[#allocation2] sm:$0x1] %vm468, 0.0
      %470 = vst.msk [vmem:[#allocation2 + $0x18] sm:$0x1] %vm468, 0.0
      %471 = vst.msk [vmem:[#allocation2 + $0x30] sm:$0x1] %vm468, 0.0
      %472 = vst.msk [vmem:[#allocation2 + $0x48] sm:$0x1] %vm468, 0.0
      %473 = vst.msk [vmem:[#allocation2 + $0x60] sm:$0x1] %vm468, 0.0
      %474 = vst.msk [vmem:[#allocation2 + $0x78] sm:$0x1] %vm468, 0.0
      %475 = vst.msk [vmem:[#allocation2 + $0x90] sm:$0x1] %vm468, 0.0
      %476 = vst.msk [vmem:[#allocation2 + $0xa8] sm:$0x1] %vm468, 0.0
      %477 = vst.msk [vmem:[#allocation2 + $0xc0] sm:$0x1] %vm468, 0.0
      %478 = vst.msk [vmem:[#allocation2 + $0xd8] sm:$0x1] %vm468, 0.0
      %479 = vst.msk [vmem:[#allocation2 + $0xf0] sm:$0x1] %vm468, 0.0
      %480 = vst.msk [vmem:[#allocation2 + $0x108] sm:$0x1] %vm468, 0.0
      %481 = vst.msk [vmem:[#allocation2 + $0x120] sm:$0x1] %vm468, 0.0
      %482 = vst.msk [vmem:[#allocation2 + $0x138] sm:$0x1] %vm468, 0.0
      %483 = vst.msk [vmem:[#allocation2 + $0x150] sm:$0x1] %vm468, 0.0
      %484 = vst.msk [vmem:[#allocation2 + $0x168] sm:$0x1] %vm468, 0.0
      %485 = vst.msk [vmem:[#allocation2 + $0x180] sm:$0x1] %vm468, 0.0
      %486 = vst.msk [vmem:[#allocation2 + $0x198] sm:$0x1] %vm468, 0.0
      %487 = vst.msk [vmem:[#allocation2 + $0x11] sm:$0x1] %vm468, 0.0
      %488 = vst.msk [vmem:[#allocation2 + $0x29] sm:$0x1] %vm468, 0.0
      %489 = vst.msk [vmem:[#allocation2 + $0x41] sm:$0x1] %vm468, 0.0
      %490 = vst.msk [vmem:[#allocation2 + $0x59] sm:$0x1] %vm468, 0.0
      %491 = vst.msk [vmem:[#allocation2 + $0x71] sm:$0x1] %vm468, 0.0
      %492 = vst.msk [vmem:[#allocation2 + $0x89] sm:$0x1] %vm468, 0.0
      %493 = vst.msk [vmem:[#allocation2 + $0xa1] sm:$0x1] %vm468, 0.0
      %494 = vst.msk [vmem:[#allocation2 + $0xb9] sm:$0x1] %vm468, 0.0
      %495 = vst.msk [vmem:[#allocation2 + $0xd1] sm:$0x1] %vm468, 0.0
      %496 = vst.msk [vmem:[#allocation2 + $0xe9] sm:$0x1] %vm468, 0.0
      %497 = vst.msk [vmem:[#allocation2 + $0x101] sm:$0x1] %vm468, 0.0
      %498 = vst.msk [vmem:[#allocation2 + $0x119] sm:$0x1] %vm468, 0.0
      %499 = vst.msk [vmem:[#allocation2 + $0x131] sm:$0x1] %vm468, 0.0
      %500 = vst.msk [vmem:[#allocation2 + $0x149] sm:$0x1] %vm468, 0.0
      %501 = vst.msk [vmem:[#allocation2 + $0x161] sm:$0x1] %vm468, 0.0
      %502 = vst.msk [vmem:[#allocation2 + $0x179] sm:$0x1] %vm468, 0.0
      %503 = vst.msk [vmem:[#allocation2 + $0x191] sm:$0x1] %vm468, 0.0
      %504 = vst.msk [vmem:[#allocation2 + $0x1a9] sm:$0x1] %vm468, 0.0
      %v505 = vld [vmem:[%s412] sm:$0xff]
      %v506 = vld [vmem:[%s412 + $0x8] sm:$0xff]
      %v507 = vld [vmem:[%s412 + $0x10] sm:$0xff]
      %v508 = vld [vmem:[%s412 + $0x18] sm:$0xff]
      %v509 = vld [vmem:[%s412 + $0x20] sm:$0xff]
      %v510 = vld [vmem:[%s412 + $0x28] sm:$0xff]
      %v511 = vld [vmem:[%s412 + $0x30] sm:$0xff]
      %v512 = vld [vmem:[%s412 + $0x38] sm:$0xff]
      %v513 = vld [vmem:[%s412 + $0x40] sm:$0xff]
      %v514 = vld [vmem:[%s412 + $0x48] sm:$0xff]
      %v515 = vld [vmem:[%s412 + $0x50] sm:$0xff]
      %v516 = vld [vmem:[%s412 + $0x58] sm:$0xff]
      %v517 = vld [vmem:[%s412 + $0x60] sm:$0xff]
      %v518 = vld [vmem:[%s412 + $0x68] sm:$0xff]
      %v519 = vld [vmem:[%s412 + $0x70] sm:$0xff]
      %v520 = vld [vmem:[%s412 + $0x78] sm:$0xff]
      %v521 = vld [vmem:[%s412 + $0x80] sm:$0xff]
      %v522 = vld [vmem:[%s412 + $0x88] sm:$0xff]
      %v523 = vld [vmem:[%s412 + $0x90] sm:$0xff]
      %v524 = vld [vmem:[%s412 + $0x98] sm:$0xff]
      %v525 = vld [vmem:[%s412 + $0xa0] sm:$0xff]
      %v526 = vld [vmem:[%s412 + $0xa8] sm:$0xff]
      %v527 = vld [vmem:[%s412 + $0xb0] sm:$0xff]
      %v528 = vld [vmem:[%s412 + $0xb8] sm:$0xff]
      %v529 = vld [vmem:[%s412 + $0xc0] sm:$0xff]
      %v530 = vld [vmem:[%s412 + $0xc8] sm:$0xff]
      %v531 = vld [vmem:[%s412 + $0xd0] sm:$0xff]
      %v532 = vld [vmem:[%s412 + $0xd8] sm:$0xff]
      %v533 = vld [vmem:[%s412 + $0xe0] sm:$0xff]
      %v534 = vld [vmem:[%s412 + $0xe8] sm:$0xff]
      %v535 = vld [vmem:[%s412 + $0xf0] sm:$0xff]
      %v536 = vld [vmem:[%s412 + $0xf8] sm:$0xff]
      %v538 = vlaneseq
      %v539 = vshrl.u32 %v538, 7
      %v540 = vsub.s32 0, %v539
      %v541 = vrot.slane %v466, %v540
      %v543 = vmul.f32 %v505, %v541
      %v544 = vmul.f32 %v506, %v541
      %v545 = vmul.f32 %v507, %v541
      %v546 = vmul.f32 %v508, %v541
      %v547 = vmul.f32 %v509, %v541
      %v548 = vmul.f32 %v510, %v541
      %v549 = vmul.f32 %v511, %v541
      %v550 = vmul.f32 %v512, %v541
      %v551 = vmul.f32 %v513, %v541
      %v552 = vmul.f32 %v514, %v541
      %v553 = vmul.f32 %v515, %v541
      %v554 = vmul.f32 %v516, %v541
      %v555 = vmul.f32 %v517, %v541
      %v556 = vmul.f32 %v518, %v541
      %v557 = vmul.f32 %v519, %v541
      %v558 = vmul.f32 %v520, %v541
      %v559 = vmul.f32 %v521, %v541
      %v560 = vmul.f32 %v522, %v541
      %v561 = vmul.f32 %v523, %v541
      %v562 = vmul.f32 %v524, %v541
      %v563 = vmul.f32 %v525, %v541
      %v564 = vmul.f32 %v526, %v541
      %v565 = vmul.f32 %v527, %v541
      %v566 = vmul.f32 %v528, %v541
      %v567 = vmul.f32 %v529, %v541
      %v568 = vmul.f32 %v530, %v541
      %v569 = vmul.f32 %v531, %v541
      %v570 = vmul.f32 %v532, %v541
      %v571 = vmul.f32 %v533, %v541
      %v572 = vmul.f32 %v534, %v541
      %v573 = vmul.f32 %v535, %v541
      %v574 = vmul.f32 %v536, %v541
      %v576 = vlaneseq
      %v577 = vshrl.u32 %v576, 7
      %v578 = vsub.s32 0, %v577
      %v579 = vrot.slane %v467, %v578
      %v581 = vadd.f32 %v543, %v579
      %v582 = vadd.f32 %v544, %v579
      %v583 = vadd.f32 %v545, %v579
      %v584 = vadd.f32 %v546, %v579
      %v585 = vadd.f32 %v547, %v579
      %v586 = vadd.f32 %v548, %v579
      %v587 = vadd.f32 %v549, %v579
      %v588 = vadd.f32 %v550, %v579
      %v589 = vadd.f32 %v551, %v579
      %v590 = vadd.f32 %v552, %v579
      %v591 = vadd.f32 %v553, %v579
      %v592 = vadd.f32 %v554, %v579
      %v593 = vadd.f32 %v555, %v579
      %v594 = vadd.f32 %v556, %v579
      %v595 = vadd.f32 %v557, %v579
      %v596 = vadd.f32 %v558, %v579
      %v597 = vadd.f32 %v559, %v579
      %v598 = vadd.f32 %v560, %v579
      %v599 = vadd.f32 %v561, %v579
      %v600 = vadd.f32 %v562, %v579
      %v601 = vadd.f32 %v563, %v579
      %v602 = vadd.f32 %v564, %v579
      %v603 = vadd.f32 %v565, %v579
      %v604 = vadd.f32 %v566, %v579
      %v605 = vadd.f32 %v567, %v579
      %v606 = vadd.f32 %v568, %v579
      %v607 = vadd.f32 %v569, %v579
      %v608 = vadd.f32 %v570, %v579
      %v609 = vadd.f32 %v571, %v579
      %v610 = vadd.f32 %v572, %v579
      %v611 = vadd.f32 %v573, %v579
      %v612 = vadd.f32 %v574, %v579
      %vm613 = vcmp.ge.f32.partialorder %v581, 0.0
      %vm614 = vcmp.ge.f32.partialorder %v582, 0.0
      %vm615 = vcmp.ge.f32.partialorder %v583, 0.0
      %vm616 = vcmp.ge.f32.partialorder %v584, 0.0
      %vm617 = vcmp.ge.f32.partialorder %v585, 0.0
      %vm618 = vcmp.ge.f32.partialorder %v586, 0.0
      %vm619 = vcmp.ge.f32.partialorder %v587, 0.0
      %vm620 = vcmp.ge.f32.partialorder %v588, 0.0
      %vm621 = vcmp.ge.f32.partialorder %v589, 0.0
      %vm622 = vcmp.ge.f32.partialorder %v590, 0.0
      %vm623 = vcmp.ge.f32.partialorder %v591, 0.0
      %vm624 = vcmp.ge.f32.partialorder %v592, 0.0
      %vm625 = vcmp.ge.f32.partialorder %v593, 0.0
      %vm626 = vcmp.ge.f32.partialorder %v594, 0.0
      %vm627 = vcmp.ge.f32.partialorder %v595, 0.0
      %vm628 = vcmp.ge.f32.partialorder %v596, 0.0
      %vm629 = vcmp.ge.f32.partialorder %v597, 0.0
      %vm630 = vcmp.ge.f32.partialorder %v598, 0.0
      %vm631 = vcmp.ge.f32.partialorder %v599, 0.0
      %vm632 = vcmp.ge.f32.partialorder %v600, 0.0
      %vm633 = vcmp.ge.f32.partialorder %v601, 0.0
      %vm634 = vcmp.ge.f32.partialorder %v602, 0.0
      %vm635 = vcmp.ge.f32.partialorder %v603, 0.0
      %vm636 = vcmp.ge.f32.partialorder %v604, 0.0
      %vm637 = vcmp.ge.f32.partialorder %v605, 0.0
      %vm638 = vcmp.ge.f32.partialorder %v606, 0.0
      %vm639 = vcmp.ge.f32.partialorder %v607, 0.0
      %vm640 = vcmp.ge.f32.partialorder %v608, 0.0
      %vm641 = vcmp.ge.f32.partialorder %v609, 0.0
      %vm642 = vcmp.ge.f32.partialorder %v610, 0.0
      %vm643 = vcmp.ge.f32.partialorder %v611, 0.0
      %vm644 = vcmp.ge.f32.partialorder %v612, 0.0
      %v645 = vmul.f32 %v581, 0.2
      %v646 = vmul.f32 %v582, 0.2
      %v647 = vmul.f32 %v583, 0.2
      %v648 = vmul.f32 %v584, 0.2
      %v649 = vmul.f32 %v585, 0.2
      %v650 = vmul.f32 %v586, 0.2
      %v651 = vmul.f32 %v587, 0.2
      %v652 = vmul.f32 %v588, 0.2
      %v653 = vmul.f32 %v589, 0.2
      %v654 = vmul.f32 %v590, 0.2
      %v655 = vmul.f32 %v591, 0.2
      %v656 = vmul.f32 %v592, 0.2
      %v657 = vmul.f32 %v593, 0.2
      %v658 = vmul.f32 %v594, 0.2
      %v659 = vmul.f32 %v595, 0.2
      %v660 = vmul.f32 %v596, 0.2
      %v661 = vmul.f32 %v597, 0.2
      %v662 = vmul.f32 %v598, 0.2
      %v663 = vmul.f32 %v599, 0.2
      %v664 = vmul.f32 %v600, 0.2
      %v665 = vmul.f32 %v601, 0.2
      %v666 = vmul.f32 %v602, 0.2
      %v667 = vmul.f32 %v603, 0.2
      %v668 = vmul.f32 %v604, 0.2
      %v669 = vmul.f32 %v605, 0.2
      %v670 = vmul.f32 %v606, 0.2
      %v671 = vmul.f32 %v607, 0.2
      %v672 = vmul.f32 %v608, 0.2
      %v673 = vmul.f32 %v609, 0.2
      %v674 = vmul.f32 %v610, 0.2
      %v675 = vmul.f32 %v611, 0.2
      %v676 = vmul.f32 %v612, 0.2
      %v677 = vsel %vm613, %v581, %v645
      %v678 = vsel %vm614, %v582, %v646
      %v679 = vsel %vm615, %v583, %v647
      %v680 = vsel %vm616, %v584, %v648
      %v681 = vsel %vm617, %v585, %v649
      %v682 = vsel %vm618, %v586, %v650
      %v683 = vsel %vm619, %v587, %v651
      %v684 = vsel %vm620, %v588, %v652
      %v685 = vsel %vm621, %v589, %v653
      %v686 = vsel %vm622, %v590, %v654
      %v687 = vsel %vm623, %v591, %v655
      %v688 = vsel %vm624, %v592, %v656
      %v689 = vsel %vm625, %v593, %v657
      %v690 = vsel %vm626, %v594, %v658
      %v691 = vsel %vm627, %v595, %v659
      %v692 = vsel %vm628, %v596, %v660
      %v693 = vsel %vm629, %v597, %v661
      %v694 = vsel %vm630, %v598, %v662
      %v695 = vsel %vm631, %v599, %v663
      %v696 = vsel %vm632, %v600, %v664
      %v697 = vsel %vm633, %v601, %v665
      %v698 = vsel %vm634, %v602, %v666
      %v699 = vsel %vm635, %v603, %v667
      %v700 = vsel %vm636, %v604, %v668
      %v701 = vsel %vm637, %v605, %v669
      %v702 = vsel %vm638, %v606, %v670
      %v703 = vsel %vm639, %v607, %v671
      %v704 = vsel %vm640, %v608, %v672
      %v705 = vsel %vm641, %v609, %v673
      %v706 = vsel %vm642, %v610, %v674
      %v707 = vsel %vm643, %v611, %v675
      %v708 = vsel %vm644, %v612, %v676
      %s709 = scalar_lea.vmem [#allocation2], 24
      %vm710 = vcmask 64512
      %711 = vst.msk [vmem:[%s709 + $0x1] sm:$0xff] %vm710, %v677
      %712 = vst.msk [vmem:[%s709 + $0x9] sm:$0xff] %vm710, %v678
      %713 = vst.msk [vmem:[%s709 + $0x19] sm:$0xff] %vm710, %v679
      %714 = vst.msk [vmem:[%s709 + $0x21] sm:$0xff] %vm710, %v680
      %715 = vst.msk [vmem:[%s709 + $0x31] sm:$0xff] %vm710, %v681
      %716 = vst.msk [vmem:[%s709 + $0x39] sm:$0xff] %vm710, %v682
      %717 = vst.msk [vmem:[%s709 + $0x49] sm:$0xff] %vm710, %v683
      %718 = vst.msk [vmem:[%s709 + $0x51] sm:$0xff] %vm710, %v684
      %719 = vst.msk [vmem:[%s709 + $0x61] sm:$0xff] %vm710, %v685
      %720 = vst.msk [vmem:[%s709 + $0x69] sm:$0xff] %vm710, %v686
      %721 = vst.msk [vmem:[%s709 + $0x79] sm:$0xff] %vm710, %v687
      %722 = vst.msk [vmem:[%s709 + $0x81] sm:$0xff] %vm710, %v688
      %723 = vst.msk [vmem:[%s709 + $0x91] sm:$0xff] %vm710, %v689
      %724 = vst.msk [vmem:[%s709 + $0x99] sm:$0xff] %vm710, %v690
      %725 = vst.msk [vmem:[%s709 + $0xa9] sm:$0xff] %vm710, %v691
      %726 = vst.msk [vmem:[%s709 + $0xb1] sm:$0xff] %vm710, %v692
      %727 = vst.msk [vmem:[%s709 + $0xc1] sm:$0xff] %vm710, %v693
      %728 = vst.msk [vmem:[%s709 + $0xc9] sm:$0xff] %vm710, %v694
      %729 = vst.msk [vmem:[%s709 + $0xd9] sm:$0xff] %vm710, %v695
      %730 = vst.msk [vmem:[%s709 + $0xe1] sm:$0xff] %vm710, %v696
      %731 = vst.msk [vmem:[%s709 + $0xf1] sm:$0xff] %vm710, %v697
      %732 = vst.msk [vmem:[%s709 + $0xf9] sm:$0xff] %vm710, %v698
      %733 = vst.msk [vmem:[%s709 + $0x109] sm:$0xff] %vm710, %v699
      %734 = vst.msk [vmem:[%s709 + $0x111] sm:$0xff] %vm710, %v700
      %735 = vst.msk [vmem:[%s709 + $0x121] sm:$0xff] %vm710, %v701
      %736 = vst.msk [vmem:[%s709 + $0x129] sm:$0xff] %vm710, %v702
      %737 = vst.msk [vmem:[%s709 + $0x139] sm:$0xff] %vm710, %v703
      %738 = vst.msk [vmem:[%s709 + $0x141] sm:$0xff] %vm710, %v704
      %739 = vst.msk [vmem:[%s709 + $0x151] sm:$0xff] %vm710, %v705
      %740 = vst.msk [vmem:[%s709 + $0x159] sm:$0xff] %vm710, %v706
      %741 = vst.msk [vmem:[%s709 + $0x169] sm:$0xff] %vm710, %v707
      %742 = vst.msk [vmem:[%s709 + $0x171] sm:$0xff] %vm710, %v708
      %p743 = scmp.eq.s32.totalorder %s24, 0
      // Predicated region
      $region45: #{conv_layer_forward.4} parent=43 // pred_check
        %p744 = pneg %p743
      $region46: #{conv_layer_forward.4} parent=43 // pred_check_branch
        %746 = sbr.rel (%p744) target = $region48
      $region47: #{conv_layer_forward.4} parent=43 // pred_region
        %747 = vst.msk [vmem:[#allocation2 + $0x1] sm:$0xff] %vm710, 0.0
        %748 = vst.msk [vmem:[#allocation2 + $0x9] sm:$0xff] %vm710, 0.0
      $region48: #{conv_layer_forward.4} parent=43 // pred_fallthru
        _
      %p749 = scmp.gt.s32.totalorder %s24, 0
      // Predicated region
      $region49: #{conv_layer_forward.4} parent=43 // pred_check
        %p750 = pneg %p749
      $region50: #{conv_layer_forward.4} parent=43 // pred_check_branch
        %752 = sbr.rel (%p750) target = $region52
      $region51: #{conv_layer_forward.4} parent=43 // pred_region
        %v753 = vld [vmem:[%s426] sm:$0xff]
        %v754 = vld [vmem:[%s426 + $0x8] sm:$0xff]
        %v755 = vmul.f32 %v753, %v541
        %v756 = vmul.f32 %v754, %v541
        %v757 = vadd.f32 %v755, %v579
        %v758 = vadd.f32 %v756, %v579
        %vm759 = vcmp.ge.f32.partialorder %v757, 0.0
        %vm760 = vcmp.ge.f32.partialorder %v758, 0.0
        %v761 = vmul.f32 %v757, 0.2
        %v762 = vmul.f32 %v758, 0.2
        %v763 = vsel %vm759, %v757, %v761
        %v764 = vsel %vm760, %v758, %v762
        %765 = vst.msk [vmem:[#allocation2 + $0x1] sm:$0xff] %vm710, %v763
        %766 = vst.msk [vmem:[#allocation2 + $0x9] sm:$0xff] %vm710, %v764
      $region52: #{conv_layer_forward.4} parent=43 // pred_fallthru
        _
      // Predicated region
      $region53: #{conv_layer_forward.4} parent=43 // pred_check
        %p767 = pneg %p743
      $region54: #{conv_layer_forward.4} parent=43 // pred_check_branch
        %769 = sbr.rel (%p767) target = $region56
      $region55: #{conv_layer_forward.4} parent=43 // pred_region
        %s770 = scalar_lea.vmem [#allocation2], 408
        %771 = vst.msk [vmem:[%s770 + $0x1] sm:$0xff] %vm710, 0.0
        %772 = vst.msk [vmem:[%s770 + $0x9] sm:$0xff] %vm710, 0.0
      $region56: #{conv_layer_forward.4} parent=43 // pred_fallthru
        _
      %p773 = scmp.lt.s32.totalorder %s24, 0
      // Predicated region
      $region57: #{conv_layer_forward.4} parent=43 // pred_check
        %p774 = pneg %p773
      $region58: #{conv_layer_forward.4} parent=43 // pred_check_branch
        %776 = sbr.rel (%p774) target = $region60
      $region59: #{conv_layer_forward.4} parent=43 // pred_region
        %v777 = vld [vmem:[%s443] sm:$0xff]
        %v778 = vld [vmem:[%s443 + $0x8] sm:$0xff]
        %v779 = vmul.f32 %v777, %v541
        %v780 = vmul.f32 %v778, %v541
        %v781 = vadd.f32 %v779, %v579
        %v782 = vadd.f32 %v780, %v579
        %vm783 = vcmp.ge.f32.partialorder %v781, 0.0
        %vm784 = vcmp.ge.f32.partialorder %v782, 0.0
        %v785 = vmul.f32 %v781, 0.2
        %v786 = vmul.f32 %v782, 0.2
        %v787 = vsel %vm783, %v781, %v785
        %v788 = vsel %vm784, %v782, %v786
        %s789 = scalar_lea.vmem [#allocation2], 408
        %790 = vst.msk [vmem:[%s789 + $0x1] sm:$0xff] %vm710, %v787
        %791 = vst.msk [vmem:[%s789 + $0x9] sm:$0xff] %vm710, %v788
      $region60: #{conv_layer_forward.4} parent=43 // pred_fallthru
        _
      %v792 = vld [vmem:[#allocation2] sm:$0xff]
      %v793 = vld [vmem:[#allocation2 + $0x8] sm:$0xff]
      %v794 = vld [vmem:[#allocation2 + $0x10] sm:$0x3]
      %v795 = vld [vmem:[#allocation2 + $0x18] sm:$0xff]
      %v796 = vld [vmem:[#allocation2 + $0x20] sm:$0xff]
      %v797 = vld [vmem:[#allocation2 + $0x28] sm:$0x3]
      %v798 = vld [vmem:[#allocation2 + $0x30] sm:$0xff]
      %v799 = vld [vmem:[#allocation2 + $0x38] sm:$0xff]
      %v800 = vld [vmem:[#allocation2 + $0x40] sm:$0x3]
      %v801 = vld [vmem:[#allocation2 + $0x48] sm:$0xff]
      %v802 = vld [vmem:[#allocation2 + $0x50] sm:$0xff]
      %v803 = vld [vmem:[#allocation2 + $0x58] sm:$0x3]
      %v804 = vld [vmem:[#allocation2 + $0x60] sm:$0xff]
      %v805 = vld [vmem:[#allocation2 + $0x68] sm:$0xff]
      %v806 = vld [vmem:[#allocation2 + $0x70] sm:$0x3]
      %v807 = vld [vmem:[#allocation2 + $0x78] sm:$0xff]
      %v808 = vld [vmem:[#allocation2 + $0x80] sm:$0xff]
      %v809 = vld [vmem:[#allocation2 + $0x88] sm:$0x3]
      %v810 = vld [vmem:[#allocation2 + $0x90] sm:$0xff]
      %v811 = vld [vmem:[#allocation2 + $0x98] sm:$0xff]
      %v812 = vld [vmem:[#allocation2 + $0xa0] sm:$0x3]
      %v813 = vld [vmem:[#allocation2 + $0xa8] sm:$0xff]
      %v814 = vld [vmem:[#allocation2 + $0xb0] sm:$0xff]
      %v815 = vld [vmem:[#allocation2 + $0xb8] sm:$0x3]
      %v816 = vld [vmem:[#allocation2 + $0xc0] sm:$0xff]
      %v817 = vld [vmem:[#allocation2 + $0xc8] sm:$0xff]
      %v818 = vld [vmem:[#allocation2 + $0xd0] sm:$0x3]
      %v819 = vld [vmem:[#allocation2 + $0xd8] sm:$0xff]
      %v820 = vld [vmem:[#allocation2 + $0xe0] sm:$0xff]
      %v821 = vld [vmem:[#allocation2 + $0xe8] sm:$0x3]
      %v822 = vld [vmem:[#allocation2 + $0xf0] sm:$0xff]
      %v823 = vld [vmem:[#allocation2 + $0xf8] sm:$0xff]
      %v824 = vld [vmem:[#allocation2 + $0x100] sm:$0x3]
      %v825 = vld [vmem:[#allocation2 + $0x108] sm:$0xff]
      %v826 = vld [vmem:[#allocation2 + $0x110] sm:$0xff]
      %v827 = vld [vmem:[#allocation2 + $0x118] sm:$0x3]
      %v828 = vld [vmem:[#allocation2 + $0x120] sm:$0xff]
      %v829 = vld [vmem:[#allocation2 + $0x128] sm:$0xff]
      %v830 = vld [vmem:[#allocation2 + $0x130] sm:$0x3]
      %v831 = vld [vmem:[#allocation2 + $0x138] sm:$0xff]
      %v832 = vld [vmem:[#allocation2 + $0x140] sm:$0xff]
      %v833 = vld [vmem:[#allocation2 + $0x148] sm:$0x3]
      %v834 = vld [vmem:[#allocation2 + $0x150] sm:$0xff]
      %v835 = vld [vmem:[#allocation2 + $0x158] sm:$0xff]
      %v836 = vld [vmem:[#allocation2 + $0x160] sm:$0x3]
      %v837 = vld [vmem:[#allocation2 + $0x168] sm:$0xff]
      %v838 = vld [vmem:[#allocation2 + $0x170] sm:$0xff]
      %v839 = vld [vmem:[#allocation2 + $0x178] sm:$0x3]
      %v840 = vld [vmem:[#allocation2 + $0x180] sm:$0xff]
      %v841 = vld [vmem:[#allocation2 + $0x188] sm:$0xff]
      %v842 = vld [vmem:[#allocation2 + $0x190] sm:$0x3]
      %v843 = vld [vmem:[#allocation2 + $0x198] sm:$0xff]
      %v844 = vld [vmem:[#allocation2 + $0x1a0] sm:$0xff]
      %v845 = vld [vmem:[#allocation2 + $0x1a8] sm:$0x3]
      %vm894 = vcmask 1046528
      %v895 = vrot.slane %v792, 1
      %v896 = vrot.slane %v793, 1
      %v897 = vsel %vm894, %v895, %v896
      %v898 = vrot.slane %v794, 1
      %v899 = vsel %vm894, %v896, %v898
      %v900 = vrot.slane %v795, 1
      %v901 = vrot.slane %v796, 1
      %v902 = vsel %vm894, %v900, %v901
      %v903 = vrot.slane %v797, 1
      %v904 = vsel %vm894, %v901, %v903
      %v905 = vrot.slane %v798, 1
      %v906 = vrot.slane %v799, 1
      %v907 = vsel %vm894, %v905, %v906
      %v908 = vrot.slane %v800, 1
      %v909 = vsel %vm894, %v906, %v908
      %v910 = vrot.slane %v801, 1
      %v911 = vrot.slane %v802, 1
      %v912 = vsel %vm894, %v910, %v911
      %v913 = vrot.slane %v803, 1
      %v914 = vsel %vm894, %v911, %v913
      %v915 = vrot.slane %v804, 1
      %v916 = vrot.slane %v805, 1
      %v917 = vsel %vm894, %v915, %v916
      %v918 = vrot.slane %v806, 1
      %v919 = vsel %vm894, %v916, %v918
      %v920 = vrot.slane %v807, 1
      %v921 = vrot.slane %v808, 1
      %v922 = vsel %vm894, %v920, %v921
      %v923 = vrot.slane %v809, 1
      %v924 = vsel %vm894, %v921, %v923
      %v925 = vrot.slane %v810, 1
      %v926 = vrot.slane %v811, 1
      %v927 = vsel %vm894, %v925, %v926
      %v928 = vrot.slane %v812, 1
      %v929 = vsel %vm894, %v926, %v928
      %v930 = vrot.slane %v813, 1
      %v931 = vrot.slane %v814, 1
      %v932 = vsel %vm894, %v930, %v931
      %v933 = vrot.slane %v815, 1
      %v934 = vsel %vm894, %v931, %v933
      %v935 = vrot.slane %v816, 1
      %v936 = vrot.slane %v817, 1
      %v937 = vsel %vm894, %v935, %v936
      %v938 = vrot.slane %v818, 1
      %v939 = vsel %vm894, %v936, %v938
      %v940 = vrot.slane %v819, 1
      %v941 = vrot.slane %v820, 1
      %v942 = vsel %vm894, %v940, %v941
      %v943 = vrot.slane %v821, 1
      %v944 = vsel %vm894, %v941, %v943
      %v945 = vrot.slane %v822, 1
      %v946 = vrot.slane %v823, 1
      %v947 = vsel %vm894, %v945, %v946
      %v948 = vrot.slane %v824, 1
      %v949 = vsel %vm894, %v946, %v948
      %v950 = vrot.slane %v825, 1
      %v951 = vrot.slane %v826, 1
      %v952 = vsel %vm894, %v950, %v951
      %v953 = vrot.slane %v827, 1
      %v954 = vsel %vm894, %v951, %v953
      %v955 = vrot.slane %v828, 1
      %v956 = vrot.slane %v829, 1
      %v957 = vsel %vm894, %v955, %v956
      %v958 = vrot.slane %v830, 1
      %v959 = vsel %vm894, %v956, %v958
      %v960 = vrot.slane %v831, 1
      %v961 = vrot.slane %v832, 1
      %v962 = vsel %vm894, %v960, %v961
      %v963 = vrot.slane %v833, 1
      %v964 = vsel %vm894, %v961, %v963
      %v965 = vrot.slane %v834, 1
      %v966 = vrot.slane %v835, 1
      %v967 = vsel %vm894, %v965, %v966
      %v968 = vrot.slane %v836, 1
      %v969 = vsel %vm894, %v966, %v968
      %v970 = vrot.slane %v837, 1
      %v971 = vrot.slane %v838, 1
      %v972 = vsel %vm894, %v970, %v971
      %v973 = vrot.slane %v839, 1
      %v974 = vsel %vm894, %v971, %v973
      %975 = vrot.lane.b32.xlu0 %v897, 8
      %v976 = vpop.permute.xlu0 %975
      %977 = vrot.lane.b32.xlu0 %v899, 8
      %v978 = vpop.permute.xlu0 %977
      %979 = vrot.lane.b32.xlu0 %v902, 8
      %v980 = vpop.permute.xlu0 %979
      %981 = vrot.lane.b32.xlu0 %v904, 8
      %v982 = vpop.permute.xlu0 %981
      %983 = vrot.lane.b32.xlu0 %v907, 8
      %v984 = vpop.permute.xlu0 %983
      %985 = vrot.lane.b32.xlu0 %v909, 8
      %v986 = vpop.permute.xlu0 %985
      %987 = vrot.lane.b32.xlu0 %v912, 8
      %v988 = vpop.permute.xlu0 %987
      %989 = vrot.lane.b32.xlu0 %v914, 8
      %v990 = vpop.permute.xlu0 %989
      %991 = vrot.lane.b32.xlu0 %v917, 8
      %v992 = vpop.permute.xlu0 %991
      %993 = vrot.lane.b32.xlu0 %v919, 8
      %v994 = vpop.permute.xlu0 %993
      %995 = vrot.lane.b32.xlu0 %v922, 8
      %v996 = vpop.permute.xlu0 %995
      %997 = vrot.lane.b32.xlu0 %v924, 8
      %v998 = vpop.permute.xlu0 %997
      %999 = vrot.lane.b32.xlu0 %v927, 8
      %v1000 = vpop.permute.xlu0 %999
      %1001 = vrot.lane.b32.xlu0 %v929, 8
      %v1002 = vpop.permute.xlu0 %1001
      %1003 = vrot.lane.b32.xlu0 %v932, 8
      %v1004 = vpop.permute.xlu0 %1003
      %1005 = vrot.lane.b32.xlu0 %v934, 8
      %v1006 = vpop.permute.xlu0 %1005
      %1007 = vrot.lane.b32.xlu0 %v937, 8
      %v1008 = vpop.permute.xlu0 %1007
      %1009 = vrot.lane.b32.xlu0 %v939, 8
      %v1010 = vpop.permute.xlu0 %1009
      %1011 = vrot.lane.b32.xlu0 %v942, 8
      %v1012 = vpop.permute.xlu0 %1011
      %1013 = vrot.lane.b32.xlu0 %v944, 8
      %v1014 = vpop.permute.xlu0 %1013
      %1015 = vrot.lane.b32.xlu0 %v947, 8
      %v1016 = vpop.permute.xlu0 %1015
      %1017 = vrot.lane.b32.xlu0 %v949, 8
      %v1018 = vpop.permute.xlu0 %1017
      %1019 = vrot.lane.b32.xlu0 %v952, 8
      %v1020 = vpop.permute.xlu0 %1019
      %1021 = vrot.lane.b32.xlu0 %v954, 8
      %v1022 = vpop.permute.xlu0 %1021
      %1023 = vrot.lane.b32.xlu0 %v957, 8
      %v1024 = vpop.permute.xlu0 %1023
      %1025 = vrot.lane.b32.xlu0 %v959, 8
      %v1026 = vpop.permute.xlu0 %1025
      %1027 = vrot.lane.b32.xlu0 %v962, 8
      %v1028 = vpop.permute.xlu0 %1027
      %1029 = vrot.lane.b32.xlu0 %v964, 8
      %v1030 = vpop.permute.xlu0 %1029
      %1031 = vrot.lane.b32.xlu0 %v967, 8
      %v1032 = vpop.permute.xlu0 %1031
      %1033 = vrot.lane.b32.xlu0 %v969, 8
      %v1034 = vpop.permute.xlu0 %1033
      %1035 = vrot.lane.b32.xlu0 %v972, 8
      %v1036 = vpop.permute.xlu0 %1035
      %1037 = vrot.lane.b32.xlu0 %v974, 8
      %v1038 = vpop.permute.xlu0 %1037
      %vm1071 = vcmask 1045504
      %v1072 = vrot.slane %v792, 2
      %v1073 = vrot.slane %v793, 2
      %v1074 = vsel %vm1071, %v1072, %v1073
      %v1075 = vrot.slane %v794, 2
      %v1076 = vsel %vm1071, %v1073, %v1075
      %v1077 = vrot.slane %v795, 2
      %v1078 = vrot.slane %v796, 2
      %v1079 = vsel %vm1071, %v1077, %v1078
      %v1080 = vrot.slane %v797, 2
      %v1081 = vsel %vm1071, %v1078, %v1080
      %v1082 = vrot.slane %v798, 2
      %v1083 = vrot.slane %v799, 2
      %v1084 = vsel %vm1071, %v1082, %v1083
      %v1085 = vrot.slane %v800, 2
      %v1086 = vsel %vm1071, %v1083, %v1085
      %v1087 = vrot.slane %v801, 2
      %v1088 = vrot.slane %v802, 2
      %v1089 = vsel %vm1071, %v1087, %v1088
      %v1090 = vrot.slane %v803, 2
      %v1091 = vsel %vm1071, %v1088, %v1090
      %v1092 = vrot.slane %v804, 2
      %v1093 = vrot.slane %v805, 2
      %v1094 = vsel %vm1071, %v1092, %v1093
      %v1095 = vrot.slane %v806, 2
      %v1096 = vsel %vm1071, %v1093, %v1095
      %v1097 = vrot.slane %v807, 2
      %v1098 = vrot.slane %v808, 2
      %v1099 = vsel %vm1071, %v1097, %v1098
      %v1100 = vrot.slane %v809, 2
      %v1101 = vsel %vm1071, %v1098, %v1100
      %v1102 = vrot.slane %v810, 2
      %v1103 = vrot.slane %v811, 2
      %v1104 = vsel %vm1071, %v1102, %v1103
      %v1105 = vrot.slane %v812, 2
      %v1106 = vsel %vm1071, %v1103, %v1105
      %v1107 = vrot.slane %v813, 2
      %v1108 = vrot.slane %v814, 2
      %v1109 = vsel %vm1071, %v1107, %v1108
      %v1110 = vrot.slane %v815, 2
      %v1111 = vsel %vm1071, %v1108, %v1110
      %v1112 = vrot.slane %v816, 2
      %v1113 = vrot.slane %v817, 2
      %v1114 = vsel %vm1071, %v1112, %v1113
      %v1115 = vrot.slane %v818, 2
      %v1116 = vsel %vm1071, %v1113, %v1115
      %v1117 = vrot.slane %v819, 2
      %v1118 = vrot.slane %v820, 2
      %v1119 = vsel %vm1071, %v1117, %v1118
      %v1120 = vrot.slane %v821, 2
      %v1121 = vsel %vm1071, %v1118, %v1120
      %v1122 = vrot.slane %v822, 2
      %v1123 = vrot.slane %v823, 2
      %v1124 = vsel %vm1071, %v1122, %v1123
      %v1125 = vrot.slane %v824, 2
      %v1126 = vsel %vm1071, %v1123, %v1125
      %v1127 = vrot.slane %v825, 2
      %v1128 = vrot.slane %v826, 2
      %v1129 = vsel %vm1071, %v1127, %v1128
      %v1130 = vrot.slane %v827, 2
      %v1131 = vsel %vm1071, %v1128, %v1130
      %v1132 = vrot.slane %v828, 2
      %v1133 = vrot.slane %v829, 2
      %v1134 = vsel %vm1071, %v1132, %v1133
      %v1135 = vrot.slane %v830, 2
      %v1136 = vsel %vm1071, %v1133, %v1135
      %v1137 = vrot.slane %v831, 2
      %v1138 = vrot.slane %v832, 2
      %v1139 = vsel %vm1071, %v1137, %v1138
      %v1140 = vrot.slane %v833, 2
      %v1141 = vsel %vm1071, %v1138, %v1140
      %v1142 = vrot.slane %v834, 2
      %v1143 = vrot.slane %v835, 2
      %v1144 = vsel %vm1071, %v1142, %v1143
      %v1145 = vrot.slane %v836, 2
      %v1146 = vsel %vm1071, %v1143, %v1145
      %v1147 = vrot.slane %v837, 2
      %v1148 = vrot.slane %v838, 2
      %v1149 = vsel %vm1071, %v1147, %v1148
      %v1150 = vrot.slane %v839, 2
      %v1151 = vsel %vm1071, %v1148, %v1150
      %1152 = vrot.lane.b32.xlu0 %v1074, 16
      %v1153 = vpop.permute.xlu0 %1152
      %1154 = vrot.lane.b32.xlu0 %v1076, 16
      %v1155 = vpop.permute.xlu0 %1154
      %1156 = vrot.lane.b32.xlu0 %v1079, 16
      %v1157 = vpop.permute.xlu0 %1156
      %1158 = vrot.lane.b32.xlu0 %v1081, 16
      %v1159 = vpop.permute.xlu0 %1158
      %1160 = vrot.lane.b32.xlu0 %v1084, 16
      %v1161 = vpop.permute.xlu0 %1160
      %1162 = vrot.lane.b32.xlu0 %v1086, 16
      %v1163 = vpop.permute.xlu0 %1162
      %1164 = vrot.lane.b32.xlu0 %v1089, 16
      %v1165 = vpop.permute.xlu0 %1164
      %1166 = vrot.lane.b32.xlu0 %v1091, 16
      %v1167 = vpop.permute.xlu0 %1166
      %1168 = vrot.lane.b32.xlu0 %v1094, 16
      %v1169 = vpop.permute.xlu0 %1168
      %1170 = vrot.lane.b32.xlu0 %v1096, 16
      %v1171 = vpop.permute.xlu0 %1170
      %1172 = vrot.lane.b32.xlu0 %v1099, 16
      %v1173 = vpop.permute.xlu0 %1172
      %1174 = vrot.lane.b32.xlu0 %v1101, 16
      %v1175 = vpop.permute.xlu0 %1174
      %1176 = vrot.lane.b32.xlu0 %v1104, 16
      %v1177 = vpop.permute.xlu0 %1176
      %1178 = vrot.lane.b32.xlu0 %v1106, 16
      %v1179 = vpop.permute.xlu0 %1178
      %1180 = vrot.lane.b32.xlu0 %v1109, 16
      %v1181 = vpop.permute.xlu0 %1180
      %1182 = vrot.lane.b32.xlu0 %v1111, 16
      %v1183 = vpop.permute.xlu0 %1182
      %1184 = vrot.lane.b32.xlu0 %v1114, 16
      %v1185 = vpop.permute.xlu0 %1184
      %1186 = vrot.lane.b32.xlu0 %v1116, 16
      %v1187 = vpop.permute.xlu0 %1186
      %1188 = vrot.lane.b32.xlu0 %v1119, 16
      %v1189 = vpop.permute.xlu0 %1188
      %1190 = vrot.lane.b32.xlu0 %v1121, 16
      %v1191 = vpop.permute.xlu0 %1190
      %1192 = vrot.lane.b32.xlu0 %v1124, 16
      %v1193 = vpop.permute.xlu0 %1192
      %1194 = vrot.lane.b32.xlu0 %v1126, 16
      %v1195 = vpop.permute.xlu0 %1194
      %1196 = vrot.lane.b32.xlu0 %v1129, 16
      %v1197 = vpop.permute.xlu0 %1196
      %1198 = vrot.lane.b32.xlu0 %v1131, 16
      %v1199 = vpop.permute.xlu0 %1198
      %1200 = vrot.lane.b32.xlu0 %v1134, 16
      %v1201 = vpop.permute.xlu0 %1200
      %1202 = vrot.lane.b32.xlu0 %v1136, 16
      %v1203 = vpop.permute.xlu0 %1202
      %1204 = vrot.lane.b32.xlu0 %v1139, 16
      %v1205 = vpop.permute.xlu0 %1204
      %1206 = vrot.lane.b32.xlu0 %v1141, 16
      %v1207 = vpop.permute.xlu0 %1206
      %1208 = vrot.lane.b32.xlu0 %v1144, 16
      %v1209 = vpop.permute.xlu0 %1208
      %1210 = vrot.lane.b32.xlu0 %v1146, 16
      %v1211 = vpop.permute.xlu0 %1210
      %1212 = vrot.lane.b32.xlu0 %v1149, 16
      %v1213 = vpop.permute.xlu0 %1212
      %1214 = vrot.lane.b32.xlu0 %v1151, 16
      %v1215 = vpop.permute.xlu0 %1214
      %1250 = vrot.lane.b32.xlu0 %v795, 24
      %v1251 = vpop.permute.xlu0 %1250
      %1252 = vrot.lane.b32.xlu0 %v796, 24
      %v1253 = vpop.permute.xlu0 %1252
      %1254 = vrot.lane.b32.xlu0 %v798, 24
      %v1255 = vpop.permute.xlu0 %1254
      %1256 = vrot.lane.b32.xlu0 %v799, 24
      %v1257 = vpop.permute.xlu0 %1256
      %1258 = vrot.lane.b32.xlu0 %v801, 24
      %v1259 = vpop.permute.xlu0 %1258
      %1260 = vrot.lane.b32.xlu0 %v802, 24
      %v1261 = vpop.permute.xlu0 %1260
      %1262 = vrot.lane.b32.xlu0 %v804, 24
      %v1263 = vpop.permute.xlu0 %1262
      %1264 = vrot.lane.b32.xlu0 %v805, 24
      %v1265 = vpop.permute.xlu0 %1264
      %1266 = vrot.lane.b32.xlu0 %v807, 24
      %v1267 = vpop.permute.xlu0 %1266
      %1268 = vrot.lane.b32.xlu0 %v808, 24
      %v1269 = vpop.permute.xlu0 %1268
      %1270 = vrot.lane.b32.xlu0 %v810, 24
      %v1271 = vpop.permute.xlu0 %1270
      %1272 = vrot.lane.b32.xlu0 %v811, 24
      %v1273 = vpop.permute.xlu0 %1272
      %1274 = vrot.lane.b32.xlu0 %v813, 24
      %v1275 = vpop.permute.xlu0 %1274
      %1276 = vrot.lane.b32.xlu0 %v814, 24
      %v1277 = vpop.permute.xlu0 %1276
      %1278 = vrot.lane.b32.xlu0 %v816, 24
      %v1279 = vpop.permute.xlu0 %1278
      %1280 = vrot.lane.b32.xlu0 %v817, 24
      %v1281 = vpop.permute.xlu0 %1280
      %1282 = vrot.lane.b32.xlu0 %v819, 24
      %v1283 = vpop.permute.xlu0 %1282
      %1284 = vrot.lane.b32.xlu0 %v820, 24
      %v1285 = vpop.permute.xlu0 %1284
      %1286 = vrot.lane.b32.xlu0 %v822, 24
      %v1287 = vpop.permute.xlu0 %1286
      %1288 = vrot.lane.b32.xlu0 %v823, 24
      %v1289 = vpop.permute.xlu0 %1288
      %1290 = vrot.lane.b32.xlu0 %v825, 24
      %v1291 = vpop.permute.xlu0 %1290
      %1292 = vrot.lane.b32.xlu0 %v826, 24
      %v1293 = vpop.permute.xlu0 %1292
      %1294 = vrot.lane.b32.xlu0 %v828, 24
      %v1295 = vpop.permute.xlu0 %1294
      %1296 = vrot.lane.b32.xlu0 %v829, 24
      %v1297 = vpop.permute.xlu0 %1296
      %1298 = vrot.lane.b32.xlu0 %v831, 24
      %v1299 = vpop.permute.xlu0 %1298
      %1300 = vrot.lane.b32.xlu0 %v832, 24
      %v1301 = vpop.permute.xlu0 %1300
      %1302 = vrot.lane.b32.xlu0 %v834, 24
      %v1303 = vpop.permute.xlu0 %1302
      %1304 = vrot.lane.b32.xlu0 %v835, 24
      %v1305 = vpop.permute.xlu0 %1304
      %1306 = vrot.lane.b32.xlu0 %v837, 24
      %v1307 = vpop.permute.xlu0 %1306
      %1308 = vrot.lane.b32.xlu0 %v838, 24
      %v1309 = vpop.permute.xlu0 %1308
      %1310 = vrot.lane.b32.xlu0 %v840, 24
      %v1311 = vpop.permute.xlu0 %1310
      %1312 = vrot.lane.b32.xlu0 %v841, 24
      %v1313 = vpop.permute.xlu0 %1312
      %v1347 = vrot.slane %v840, 1
      %v1348 = vrot.slane %v841, 1
      %v1349 = vsel %vm894, %v1347, %v1348
      %v1350 = vrot.slane %v842, 1
      %v1351 = vsel %vm894, %v1348, %v1350
      %1352 = vrot.lane.b32.xlu0 %v902, 32
      %v1353 = vpop.permute.xlu0 %1352
      %1354 = vrot.lane.b32.xlu0 %v904, 32
      %v1355 = vpop.permute.xlu0 %1354
      %1356 = vrot.lane.b32.xlu0 %v907, 32
      %v1357 = vpop.permute.xlu0 %1356
      %1358 = vrot.lane.b32.xlu0 %v909, 32
      %v1359 = vpop.permute.xlu0 %1358
      %1360 = vrot.lane.b32.xlu0 %v912, 32
      %v1361 = vpop.permute.xlu0 %1360
      %1362 = vrot.lane.b32.xlu0 %v914, 32
      %v1363 = vpop.permute.xlu0 %1362
      %1364 = vrot.lane.b32.xlu0 %v917, 32
      %v1365 = vpop.permute.xlu0 %1364
      %1366 = vrot.lane.b32.xlu0 %v919, 32
      %v1367 = vpop.permute.xlu0 %1366
      %1368 = vrot.lane.b32.xlu0 %v922, 32
      %v1369 = vpop.permute.xlu0 %1368
      %1370 = vrot.lane.b32.xlu0 %v924, 32
      %v1371 = vpop.permute.xlu0 %1370
      %1372 = vrot.lane.b32.xlu0 %v927, 32
      %v1373 = vpop.permute.xlu0 %1372
      %1374 = vrot.lane.b32.xlu0 %v929, 32
      %v1375 = vpop.permute.xlu0 %1374
      %1376 = vrot.lane.b32.xlu0 %v932, 32
      %v1377 = vpop.permute.xlu0 %1376
      %1378 = vrot.lane.b32.xlu0 %v934, 32
      %v1379 = vpop.permute.xlu0 %1378
      %1380 = vrot.lane.b32.xlu0 %v937, 32
      %v1381 = vpop.permute.xlu0 %1380
      %1382 = vrot.lane.b32.xlu0 %v939, 32
      %v1383 = vpop.permute.xlu0 %1382
      %1384 = vrot.lane.b32.xlu0 %v942, 32
      %v1385 = vpop.permute.xlu0 %1384
      %1386 = vrot.lane.b32.xlu0 %v944, 32
      %v1387 = vpop.permute.xlu0 %1386
      %1388 = vrot.lane.b32.xlu0 %v947, 32
      %v1389 = vpop.permute.xlu0 %1388
      %1390 = vrot.lane.b32.xlu0 %v949, 32
      %v1391 = vpop.permute.xlu0 %1390
      %1392 = vrot.lane.b32.xlu0 %v952, 32
      %v1393 = vpop.permute.xlu0 %1392
      %1394 = vrot.lane.b32.xlu0 %v954, 32
      %v1395 = vpop.permute.xlu0 %1394
      %1396 = vrot.lane.b32.xlu0 %v957, 32
      %v1397 = vpop.permute.xlu0 %1396
      %1398 = vrot.lane.b32.xlu0 %v959, 32
      %v1399 = vpop.permute.xlu0 %1398
      %1400 = vrot.lane.b32.xlu0 %v962, 32
      %v1401 = vpop.permute.xlu0 %1400
      %1402 = vrot.lane.b32.xlu0 %v964, 32
      %v1403 = vpop.permute.xlu0 %1402
      %1404 = vrot.lane.b32.xlu0 %v967, 32
      %v1405 = vpop.permute.xlu0 %1404
      %1406 = vrot.lane.b32.xlu0 %v969, 32
      %v1407 = vpop.permute.xlu0 %1406
      %1408 = vrot.lane.b32.xlu0 %v972, 32
      %v1409 = vpop.permute.xlu0 %1408
      %1410 = vrot.lane.b32.xlu0 %v974, 32
      %v1411 = vpop.permute.xlu0 %1410
      %1412 = vrot.lane.b32.xlu0 %v1349, 32
      %v1413 = vpop.permute.xlu0 %1412
      %1414 = vrot.lane.b32.xlu0 %v1351, 32
      %v1415 = vpop.permute.xlu0 %1414
      %v1448 = vrot.slane %v840, 2
      %v1449 = vrot.slane %v841, 2
      %v1450 = vsel %vm1071, %v1448, %v1449
      %v1451 = vrot.slane %v842, 2
      %v1452 = vsel %vm1071, %v1449, %v1451
      %1453 = vrot.lane.b32.xlu0 %v1079, 40
      %v1454 = vpop.permute.xlu0 %1453
      %1455 = vrot.lane.b32.xlu0 %v1081, 40
      %v1456 = vpop.permute.xlu0 %1455
      %1457 = vrot.lane.b32.xlu0 %v1084, 40
      %v1458 = vpop.permute.xlu0 %1457
      %1459 = vrot.lane.b32.xlu0 %v1086, 40
      %v1460 = vpop.permute.xlu0 %1459
      %1461 = vrot.lane.b32.xlu0 %v1089, 40
      %v1462 = vpop.permute.xlu0 %1461
      %1463 = vrot.lane.b32.xlu0 %v1091, 40
      %v1464 = vpop.permute.xlu0 %1463
      %1465 = vrot.lane.b32.xlu0 %v1094, 40
      %v1466 = vpop.permute.xlu0 %1465
      %1467 = vrot.lane.b32.xlu0 %v1096, 40
      %v1468 = vpop.permute.xlu0 %1467
      %1469 = vrot.lane.b32.xlu0 %v1099, 40
      %v1470 = vpop.permute.xlu0 %1469
      %1471 = vrot.lane.b32.xlu0 %v1101, 40
      %v1472 = vpop.permute.xlu0 %1471
      %1473 = vrot.lane.b32.xlu0 %v1104, 40
      %v1474 = vpop.permute.xlu0 %1473
      %1475 = vrot.lane.b32.xlu0 %v1106, 40
      %v1476 = vpop.permute.xlu0 %1475
      %1477 = vrot.lane.b32.xlu0 %v1109, 40
      %v1478 = vpop.permute.xlu0 %1477
      %1479 = vrot.lane.b32.xlu0 %v1111, 40
      %v1480 = vpop.permute.xlu0 %1479
      %1481 = vrot.lane.b32.xlu0 %v1114, 40
      %v1482 = vpop.permute.xlu0 %1481
      %1483 = vrot.lane.b32.xlu0 %v1116, 40
      %v1484 = vpop.permute.xlu0 %1483
      %1485 = vrot.lane.b32.xlu0 %v1119, 40
      %v1486 = vpop.permute.xlu0 %1485
      %1487 = vrot.lane.b32.xlu0 %v1121, 40
      %v1488 = vpop.permute.xlu0 %1487
      %1489 = vrot.lane.b32.xlu0 %v1124, 40
      %v1490 = vpop.permute.xlu0 %1489
      %1491 = vrot.lane.b32.xlu0 %v1126, 40
      %v1492 = vpop.permute.xlu0 %1491
      %1493 = vrot.lane.b32.xlu0 %v1129, 40
      %v1494 = vpop.permute.xlu0 %1493
      %1495 = vrot.lane.b32.xlu0 %v1131, 40
      %v1496 = vpop.permute.xlu0 %1495
      %1497 = vrot.lane.b32.xlu0 %v1134, 40
      %v1498 = vpop.permute.xlu0 %1497
      %1499 = vrot.lane.b32.xlu0 %v1136, 40
      %v1500 = vpop.permute.xlu0 %1499
      %1501 = vrot.lane.b32.xlu0 %v1139, 40
      %v1502 = vpop.permute.xlu0 %1501
      %1503 = vrot.lane.b32.xlu0 %v1141, 40
      %v1504 = vpop.permute.xlu0 %1503
      %1505 = vrot.lane.b32.xlu0 %v1144, 40
      %v1506 = vpop.permute.xlu0 %1505
      %1507 = vrot.lane.b32.xlu0 %v1146, 40
      %v1508 = vpop.permute.xlu0 %1507
      %1509 = vrot.lane.b32.xlu0 %v1149, 40
      %v1510 = vpop.permute.xlu0 %1509
      %1511 = vrot.lane.b32.xlu0 %v1151, 40
      %v1512 = vpop.permute.xlu0 %1511
      %1513 = vrot.lane.b32.xlu0 %v1450, 40
      %v1514 = vpop.permute.xlu0 %1513
      %1515 = vrot.lane.b32.xlu0 %v1452, 40
      %v1516 = vpop.permute.xlu0 %1515
      %1551 = vrot.lane.b32.xlu0 %v798, 48
      %v1552 = vpop.permute.xlu0 %1551
      %1553 = vrot.lane.b32.xlu0 %v799, 48
      %v1554 = vpop.permute.xlu0 %1553
      %1555 = vrot.lane.b32.xlu0 %v801, 48
      %v1556 = vpop.permute.xlu0 %1555
      %1557 = vrot.lane.b32.xlu0 %v802, 48
      %v1558 = vpop.permute.xlu0 %1557
      %1559 = vrot.lane.b32.xlu0 %v804, 48
      %v1560 = vpop.permute.xlu0 %1559
      %1561 = vrot.lane.b32.xlu0 %v805, 48
      %v1562 = vpop.permute.xlu0 %1561
      %1563 = vrot.lane.b32.xlu0 %v807, 48
      %v1564 = vpop.permute.xlu0 %1563
      %1565 = vrot.lane.b32.xlu0 %v808, 48
      %v1566 = vpop.permute.xlu0 %1565
      %1567 = vrot.lane.b32.xlu0 %v810, 48
      %v1568 = vpop.permute.xlu0 %1567
      %1569 = vrot.lane.b32.xlu0 %v811, 48
      %v1570 = vpop.permute.xlu0 %1569
      %1571 = vrot.lane.b32.xlu0 %v813, 48
      %v1572 = vpop.permute.xlu0 %1571
      %1573 = vrot.lane.b32.xlu0 %v814, 48
      %v1574 = vpop.permute.xlu0 %1573
      %1575 = vrot.lane.b32.xlu0 %v816, 48
      %v1576 = vpop.permute.xlu0 %1575
      %1577 = vrot.lane.b32.xlu0 %v817, 48
      %v1578 = vpop.permute.xlu0 %1577
      %1579 = vrot.lane.b32.xlu0 %v819, 48
      %v1580 = vpop.permute.xlu0 %1579
      %1581 = vrot.lane.b32.xlu0 %v820, 48
      %v1582 = vpop.permute.xlu0 %1581
      %1583 = vrot.lane.b32.xlu0 %v822, 48
      %v1584 = vpop.permute.xlu0 %1583
      %1585 = vrot.lane.b32.xlu0 %v823, 48
      %v1586 = vpop.permute.xlu0 %1585
      %1587 = vrot.lane.b32.xlu0 %v825, 48
      %v1588 = vpop.permute.xlu0 %1587
      %1589 = vrot.lane.b32.xlu0 %v826, 48
      %v1590 = vpop.permute.xlu0 %1589
      %1591 = vrot.lane.b32.xlu0 %v828, 48
      %v1592 = vpop.permute.xlu0 %1591
      %1593 = vrot.lane.b32.xlu0 %v829, 48
      %v1594 = vpop.permute.xlu0 %1593
      %1595 = vrot.lane.b32.xlu0 %v831, 48
      %v1596 = vpop.permute.xlu0 %1595
      %1597 = vrot.lane.b32.xlu0 %v832, 48
      %v1598 = vpop.permute.xlu0 %1597
      %1599 = vrot.lane.b32.xlu0 %v834, 48
      %v1600 = vpop.permute.xlu0 %1599
      %1601 = vrot.lane.b32.xlu0 %v835, 48
      %v1602 = vpop.permute.xlu0 %1601
      %1603 = vrot.lane.b32.xlu0 %v837, 48
      %v1604 = vpop.permute.xlu0 %1603
      %1605 = vrot.lane.b32.xlu0 %v838, 48
      %v1606 = vpop.permute.xlu0 %1605
      %1607 = vrot.lane.b32.xlu0 %v840, 48
      %v1608 = vpop.permute.xlu0 %1607
      %1609 = vrot.lane.b32.xlu0 %v841, 48
      %v1610 = vpop.permute.xlu0 %1609
      %1611 = vrot.lane.b32.xlu0 %v843, 48
      %v1612 = vpop.permute.xlu0 %1611
      %1613 = vrot.lane.b32.xlu0 %v844, 48
      %v1614 = vpop.permute.xlu0 %1613
      %v1648 = vrot.slane %v843, 1
      %v1649 = vrot.slane %v844, 1
      %v1650 = vsel %vm894, %v1648, %v1649
      %v1651 = vrot.slane %v845, 1
      %v1652 = vsel %vm894, %v1649, %v1651
      %1653 = vrot.lane.b32.xlu0 %v907, 56
      %v1654 = vpop.permute.xlu0 %1653
      %1655 = vrot.lane.b32.xlu0 %v909, 56
      %v1656 = vpop.permute.xlu0 %1655
      %1657 = vrot.lane.b32.xlu0 %v912, 56
      %v1658 = vpop.permute.xlu0 %1657
      %1659 = vrot.lane.b32.xlu0 %v914, 56
      %v1660 = vpop.permute.xlu0 %1659
      %1661 = vrot.lane.b32.xlu0 %v917, 56
      %v1662 = vpop.permute.xlu0 %1661
      %1663 = vrot.lane.b32.xlu0 %v919, 56
      %v1664 = vpop.permute.xlu0 %1663
      %1665 = vrot.lane.b32.xlu0 %v922, 56
      %v1666 = vpop.permute.xlu0 %1665
      %1667 = vrot.lane.b32.xlu0 %v924, 56
      %v1668 = vpop.permute.xlu0 %1667
      %1669 = vrot.lane.b32.xlu0 %v927, 56
      %v1670 = vpop.permute.xlu0 %1669
      %1671 = vrot.lane.b32.xlu0 %v929, 56
      %v1672 = vpop.permute.xlu0 %1671
      %1673 = vrot.lane.b32.xlu0 %v932, 56
      %v1674 = vpop.permute.xlu0 %1673
      %1675 = vrot.lane.b32.xlu0 %v934, 56
      %v1676 = vpop.permute.xlu0 %1675
      %1677 = vrot.lane.b32.xlu0 %v937, 56
      %v1678 = vpop.permute.xlu0 %1677
      %1679 = vrot.lane.b32.xlu0 %v939, 56
      %v1680 = vpop.permute.xlu0 %1679
      %1681 = vrot.lane.b32.xlu0 %v942, 56
      %v1682 = vpop.permute.xlu0 %1681
      %1683 = vrot.lane.b32.xlu0 %v944, 56
      %v1684 = vpop.permute.xlu0 %1683
      %1685 = vrot.lane.b32.xlu0 %v947, 56
      %v1686 = vpop.permute.xlu0 %1685
      %1687 = vrot.lane.b32.xlu0 %v949, 56
      %v1688 = vpop.permute.xlu0 %1687
      %1689 = vrot.lane.b32.xlu0 %v952, 56
      %v1690 = vpop.permute.xlu0 %1689
      %1691 = vrot.lane.b32.xlu0 %v954, 56
      %v1692 = vpop.permute.xlu0 %1691
      %1693 = vrot.lane.b32.xlu0 %v957, 56
      %v1694 = vpop.permute.xlu0 %1693
      %1695 = vrot.lane.b32.xlu0 %v959, 56
      %v1696 = vpop.permute.xlu0 %1695
      %1697 = vrot.lane.b32.xlu0 %v962, 56
      %v1698 = vpop.permute.xlu0 %1697
      %1699 = vrot.lane.b32.xlu0 %v964, 56
      %v1700 = vpop.permute.xlu0 %1699
      %1701 = vrot.lane.b32.xlu0 %v967, 56
      %v1702 = vpop.permute.xlu0 %1701
      %1703 = vrot.lane.b32.xlu0 %v969, 56
      %v1704 = vpop.permute.xlu0 %1703
      %1705 = vrot.lane.b32.xlu0 %v972, 56
      %v1706 = vpop.permute.xlu0 %1705
      %1707 = vrot.lane.b32.xlu0 %v974, 56
      %v1708 = vpop.permute.xlu0 %1707
      %1709 = vrot.lane.b32.xlu0 %v1349, 56
      %v1710 = vpop.permute.xlu0 %1709
      %1711 = vrot.lane.b32.xlu0 %v1351, 56
      %v1712 = vpop.permute.xlu0 %1711
      %1713 = vrot.lane.b32.xlu0 %v1650, 56
      %v1714 = vpop.permute.xlu0 %1713
      %1715 = vrot.lane.b32.xlu0 %v1652, 56
      %v1716 = vpop.permute.xlu0 %1715
      %v1749 = vrot.slane %v843, 2
      %v1750 = vrot.slane %v844, 2
      %v1751 = vsel %vm1071, %v1749, %v1750
      %v1752 = vrot.slane %v845, 2
      %v1753 = vsel %vm1071, %v1750, %v1752
      %1754 = vrot.lane.b32.xlu0 %v1084, 64
      %v1755 = vpop.permute.xlu0 %1754
      %1756 = vrot.lane.b32.xlu0 %v1086, 64
      %v1757 = vpop.permute.xlu0 %1756
      %1758 = vrot.lane.b32.xlu0 %v1089, 64
      %v1759 = vpop.permute.xlu0 %1758
      %1760 = vrot.lane.b32.xlu0 %v1091, 64
      %v1761 = vpop.permute.xlu0 %1760
      %1762 = vrot.lane.b32.xlu0 %v1094, 64
      %v1763 = vpop.permute.xlu0 %1762
      %1764 = vrot.lane.b32.xlu0 %v1096, 64
      %v1765 = vpop.permute.xlu0 %1764
      %1766 = vrot.lane.b32.xlu0 %v1099, 64
      %v1767 = vpop.permute.xlu0 %1766
      %1768 = vrot.lane.b32.xlu0 %v1101, 64
      %v1769 = vpop.permute.xlu0 %1768
      %1770 = vrot.lane.b32.xlu0 %v1104, 64
      %v1771 = vpop.permute.xlu0 %1770
      %1772 = vrot.lane.b32.xlu0 %v1106, 64
      %v1773 = vpop.permute.xlu0 %1772
      %1774 = vrot.lane.b32.xlu0 %v1109, 64
      %v1775 = vpop.permute.xlu0 %1774
      %1776 = vrot.lane.b32.xlu0 %v1111, 64
      %v1777 = vpop.permute.xlu0 %1776
      %1778 = vrot.lane.b32.xlu0 %v1114, 64
      %v1779 = vpop.permute.xlu0 %1778
      %1780 = vrot.lane.b32.xlu0 %v1116, 64
      %v1781 = vpop.permute.xlu0 %1780
      %1782 = vrot.lane.b32.xlu0 %v1119, 64
      %v1783 = vpop.permute.xlu0 %1782
      %1784 = vrot.lane.b32.xlu0 %v1121, 64
      %v1785 = vpop.permute.xlu0 %1784
      %1786 = vrot.lane.b32.xlu0 %v1124, 64
      %v1787 = vpop.permute.xlu0 %1786
      %1788 = vrot.lane.b32.xlu0 %v1126, 64
      %v1789 = vpop.permute.xlu0 %1788
      %1790 = vrot.lane.b32.xlu0 %v1129, 64
      %v1791 = vpop.permute.xlu0 %1790
      %1792 = vrot.lane.b32.xlu0 %v1131, 64
      %v1793 = vpop.permute.xlu0 %1792
      %1794 = vrot.lane.b32.xlu0 %v1134, 64
      %v1795 = vpop.permute.xlu0 %1794
      %1796 = vrot.lane.b32.xlu0 %v1136, 64
      %v1797 = vpop.permute.xlu0 %1796
      %1798 = vrot.lane.b32.xlu0 %v1139, 64
      %v1799 = vpop.permute.xlu0 %1798
      %1800 = vrot.lane.b32.xlu0 %v1141, 64
      %v1801 = vpop.permute.xlu0 %1800
      %1802 = vrot.lane.b32.xlu0 %v1144, 64
      %v1803 = vpop.permute.xlu0 %1802
      %1804 = vrot.lane.b32.xlu0 %v1146, 64
      %v1805 = vpop.permute.xlu0 %1804
      %1806 = vrot.lane.b32.xlu0 %v1149, 64
      %v1807 = vpop.permute.xlu0 %1806
      %1808 = vrot.lane.b32.xlu0 %v1151, 64
      %v1809 = vpop.permute.xlu0 %1808
      %1810 = vrot.lane.b32.xlu0 %v1450, 64
      %v1811 = vpop.permute.xlu0 %1810
      %1812 = vrot.lane.b32.xlu0 %v1452, 64
      %v1813 = vpop.permute.xlu0 %1812
      %1814 = vrot.lane.b32.xlu0 %v1751, 64
      %v1815 = vpop.permute.xlu0 %1814
      %1816 = vrot.lane.b32.xlu0 %v1753, 64
      %v1817 = vpop.permute.xlu0 %1816
      %v1850 = vsel %vm710, %v792, %v976
      %v1851 = vsel %vm710, %v793, %v978
      %v1852 = vsel %vm710, %v795, %v980
      %v1853 = vsel %vm710, %v796, %v982
      %v1854 = vsel %vm710, %v798, %v984
      %v1855 = vsel %vm710, %v799, %v986
      %v1856 = vsel %vm710, %v801, %v988
      %v1857 = vsel %vm710, %v802, %v990
      %v1858 = vsel %vm710, %v804, %v992
      %v1859 = vsel %vm710, %v805, %v994
      %v1860 = vsel %vm710, %v807, %v996
      %v1861 = vsel %vm710, %v808, %v998
      %v1862 = vsel %vm710, %v810, %v1000
      %v1863 = vsel %vm710, %v811, %v1002
      %v1864 = vsel %vm710, %v813, %v1004
      %v1865 = vsel %vm710, %v814, %v1006
      %v1866 = vsel %vm710, %v816, %v1008
      %v1867 = vsel %vm710, %v817, %v1010
      %v1868 = vsel %vm710, %v819, %v1012
      %v1869 = vsel %vm710, %v820, %v1014
      %v1870 = vsel %vm710, %v822, %v1016
      %v1871 = vsel %vm710, %v823, %v1018
      %v1872 = vsel %vm710, %v825, %v1020
      %v1873 = vsel %vm710, %v826, %v1022
      %v1874 = vsel %vm710, %v828, %v1024
      %v1875 = vsel %vm710, %v829, %v1026
      %v1876 = vsel %vm710, %v831, %v1028
      %v1877 = vsel %vm710, %v832, %v1030
      %v1878 = vsel %vm710, %v834, %v1032
      %v1879 = vsel %vm710, %v835, %v1034
      %v1880 = vsel %vm710, %v837, %v1036
      %v1881 = vsel %vm710, %v838, %v1038
      %vm1882 = vcmask 130048
      %v1883 = vsel %vm1882, %v1850, %v1153
      %v1884 = vsel %vm1882, %v1851, %v1155
      %v1885 = vsel %vm1882, %v1852, %v1157
      %v1886 = vsel %vm1882, %v1853, %v1159
      %v1887 = vsel %vm1882, %v1854, %v1161
      %v1888 = vsel %vm1882, %v1855, %v1163
      %v1889 = vsel %vm1882, %v1856, %v1165
      %v1890 = vsel %vm1882, %v1857, %v1167
      %v1891 = vsel %vm1882, %v1858, %v1169
      %v1892 = vsel %vm1882, %v1859, %v1171
      %v1893 = vsel %vm1882, %v1860, %v1173
      %v1894 = vsel %vm1882, %v1861, %v1175
      %v1895 = vsel %vm1882, %v1862, %v1177
      %v1896 = vsel %vm1882, %v1863, %v1179
      %v1897 = vsel %vm1882, %v1864, %v1181
      %v1898 = vsel %vm1882, %v1865, %v1183
      %v1899 = vsel %vm1882, %v1866, %v1185
      %v1900 = vsel %vm1882, %v1867, %v1187
      %v1901 = vsel %vm1882, %v1868, %v1189
      %v1902 = vsel %vm1882, %v1869, %v1191
      %v1903 = vsel %vm1882, %v1870, %v1193
      %v1904 = vsel %vm1882, %v1871, %v1195
      %v1905 = vsel %vm1882, %v1872, %v1197
      %v1906 = vsel %vm1882, %v1873, %v1199
      %v1907 = vsel %vm1882, %v1874, %v1201
      %v1908 = vsel %vm1882, %v1875, %v1203
      %v1909 = vsel %vm1882, %v1876, %v1205
      %v1910 = vsel %vm1882, %v1877, %v1207
      %v1911 = vsel %vm1882, %v1878, %v1209
      %v1912 = vsel %vm1882, %v1879, %v1211
      %v1913 = vsel %vm1882, %v1880, %v1213
      %v1914 = vsel %vm1882, %v1881, %v1215
      %vm1915 = vcmask 195584
      %v1916 = vsel %vm1915, %v1883, %v1251
      %v1917 = vsel %vm1915, %v1884, %v1253
      %v1918 = vsel %vm1915, %v1885, %v1255
      %v1919 = vsel %vm1915, %v1886, %v1257
      %v1920 = vsel %vm1915, %v1887, %v1259
      %v1921 = vsel %vm1915, %v1888, %v1261
      %v1922 = vsel %vm1915, %v1889, %v1263
      %v1923 = vsel %vm1915, %v1890, %v1265
      %v1924 = vsel %vm1915, %v1891, %v1267
      %v1925 = vsel %vm1915, %v1892, %v1269
      %v1926 = vsel %vm1915, %v1893, %v1271
      %v1927 = vsel %vm1915, %v1894, %v1273
      %v1928 = vsel %vm1915, %v1895, %v1275
      %v1929 = vsel %vm1915, %v1896, %v1277
      %v1930 = vsel %vm1915, %v1897, %v1279
      %v1931 = vsel %vm1915, %v1898, %v1281
      %v1932 = vsel %vm1915, %v1899, %v1283
      %v1933 = vsel %vm1915, %v1900, %v1285
      %v1934 = vsel %vm1915, %v1901, %v1287
      %v1935 = vsel %vm1915, %v1902, %v1289
      %v1936 = vsel %vm1915, %v1903, %v1291
      %v1937 = vsel %vm1915, %v1904, %v1293
      %v1938 = vsel %vm1915, %v1905, %v1295
      %v1939 = vsel %vm1915, %v1906, %v1297
      %v1940 = vsel %vm1915, %v1907, %v1299
      %v1941 = vsel %vm1915, %v1908, %v1301
      %v1942 = vsel %vm1915, %v1909, %v1303
      %v1943 = vsel %vm1915, %v1910, %v1305
      %v1944 = vsel %vm1915, %v1911, %v1307
      %v1945 = vsel %vm1915, %v1912, %v1309
      %v1946 = vsel %vm1915, %v1913, %v1311
      %v1947 = vsel %vm1915, %v1914, %v1313
      %vm1948 = vcmask 261120
      %v1949 = vsel %vm1948, %v1916, %v1353
      %v1950 = vsel %vm1948, %v1917, %v1355
      %v1951 = vsel %vm1948, %v1918, %v1357
      %v1952 = vsel %vm1948, %v1919, %v1359
      %v1953 = vsel %vm1948, %v1920, %v1361
      %v1954 = vsel %vm1948, %v1921, %v1363
      %v1955 = vsel %vm1948, %v1922, %v1365
      %v1956 = vsel %vm1948, %v1923, %v1367
      %v1957 = vsel %vm1948, %v1924, %v1369
      %v1958 = vsel %vm1948, %v1925, %v1371
      %v1959 = vsel %vm1948, %v1926, %v1373
      %v1960 = vsel %vm1948, %v1927, %v1375
      %v1961 = vsel %vm1948, %v1928, %v1377
      %v1962 = vsel %vm1948, %v1929, %v1379
      %v1963 = vsel %vm1948, %v1930, %v1381
      %v1964 = vsel %vm1948, %v1931, %v1383
      %v1965 = vsel %vm1948, %v1932, %v1385
      %v1966 = vsel %vm1948, %v1933, %v1387
      %v1967 = vsel %vm1948, %v1934, %v1389
      %v1968 = vsel %vm1948, %v1935, %v1391
      %v1969 = vsel %vm1948, %v1936, %v1393
      %v1970 = vsel %vm1948, %v1937, %v1395
      %v1971 = vsel %vm1948, %v1938, %v1397
      %v1972 = vsel %vm1948, %v1939, %v1399
      %v1973 = vsel %vm1948, %v1940, %v1401
      %v1974 = vsel %vm1948, %v1941, %v1403
      %v1975 = vsel %vm1948, %v1942, %v1405
      %v1976 = vsel %vm1948, %v1943, %v1407
      %v1977 = vsel %vm1948, %v1944, %v1409
      %v1978 = vsel %vm1948, %v1945, %v1411
      %v1979 = vsel %vm1948, %v1946, %v1413
      %v1980 = vsel %vm1948, %v1947, %v1415
      %vm1981 = vcmask 326656
      %v1982 = vsel %vm1981, %v1949, %v1454
      %v1983 = vsel %vm1981, %v1950, %v1456
      %v1984 = vsel %vm1981, %v1951, %v1458
      %v1985 = vsel %vm1981, %v1952, %v1460
      %v1986 = vsel %vm1981, %v1953, %v1462
      %v1987 = vsel %vm1981, %v1954, %v1464
      %v1988 = vsel %vm1981, %v1955, %v1466
      %v1989 = vsel %vm1981, %v1956, %v1468
      %v1990 = vsel %vm1981, %v1957, %v1470
      %v1991 = vsel %vm1981, %v1958, %v1472
      %v1992 = vsel %vm1981, %v1959, %v1474
      %v1993 = vsel %vm1981, %v1960, %v1476
      %v1994 = vsel %vm1981, %v1961, %v1478
      %v1995 = vsel %vm1981, %v1962, %v1480
      %v1996 = vsel %vm1981, %v1963, %v1482
      %v1997 = vsel %vm1981, %v1964, %v1484
      %v1998 = vsel %vm1981, %v1965, %v1486
      %v1999 = vsel %vm1981, %v1966, %v1488
      %v2000 = vsel %vm1981, %v1967, %v1490
      %v2001 = vsel %vm1981, %v1968, %v1492
      %v2002 = vsel %vm1981, %v1969, %v1494
      %v2003 = vsel %vm1981, %v1970, %v1496
      %v2004 = vsel %vm1981, %v1971, %v1498
      %v2005 = vsel %vm1981, %v1972, %v1500
      %v2006 = vsel %vm1981, %v1973, %v1502
      %v2007 = vsel %vm1981, %v1974, %v1504
      %v2008 = vsel %vm1981, %v1975, %v1506
      %v2009 = vsel %vm1981, %v1976, %v1508
      %v2010 = vsel %vm1981, %v1977, %v1510
      %v2011 = vsel %vm1981, %v1978, %v1512
      %v2012 = vsel %vm1981, %v1979, %v1514
      %v2013 = vsel %vm1981, %v1980, %v1516
      %vm2014 = vcmask 392192
      %v2015 = vsel %vm2014, %v1982, %v1552
      %v2016 = vsel %vm2014, %v1983, %v1554
      %v2017 = vsel %vm2014, %v1984, %v1556
      %v2018 = vsel %vm2014, %v1985, %v1558
      %v2019 = vsel %vm2014, %v1986, %v1560
      %v2020 = vsel %vm2014, %v1987, %v1562
      %v2021 = vsel %vm2014, %v1988, %v1564
      %v2022 = vsel %vm2014, %v1989, %v1566
      %v2023 = vsel %vm2014, %v1990, %v1568
      %v2024 = vsel %vm2014, %v1991, %v1570
      %v2025 = vsel %vm2014, %v1992, %v1572
      %v2026 = vsel %vm2014, %v1993, %v1574
      %v2027 = vsel %vm2014, %v1994, %v1576
      %v2028 = vsel %vm2014, %v1995, %v1578
      %v2029 = vsel %vm2014, %v1996, %v1580
      %v2030 = vsel %vm2014, %v1997, %v1582
      %v2031 = vsel %vm2014, %v1998, %v1584
      %v2032 = vsel %vm2014, %v1999, %v1586
      %v2033 = vsel %vm2014, %v2000, %v1588
      %v2034 = vsel %vm2014, %v2001, %v1590
      %v2035 = vsel %vm2014, %v2002, %v1592
      %v2036 = vsel %vm2014, %v2003, %v1594
      %v2037 = vsel %vm2014, %v2004, %v1596
      %v2038 = vsel %vm2014, %v2005, %v1598
      %v2039 = vsel %vm2014, %v2006, %v1600
      %v2040 = vsel %vm2014, %v2007, %v1602
      %v2041 = vsel %vm2014, %v2008, %v1604
      %v2042 = vsel %vm2014, %v2009, %v1606
      %v2043 = vsel %vm2014, %v2010, %v1608
      %v2044 = vsel %vm2014, %v2011, %v1610
      %v2045 = vsel %vm2014, %v2012, %v1612
      %v2046 = vsel %vm2014, %v2013, %v1614
      %vm2047 = vcmask 457728
      %v2048 = vsel %vm2047, %v2015, %v1654
      %v2049 = vsel %vm2047, %v2016, %v1656
      %v2050 = vsel %vm2047, %v2017, %v1658
      %v2051 = vsel %vm2047, %v2018, %v1660
      %v2052 = vsel %vm2047, %v2019, %v1662
      %v2053 = vsel %vm2047, %v2020, %v1664
      %v2054 = vsel %vm2047, %v2021, %v1666
      %v2055 = vsel %vm2047, %v2022, %v1668
      %v2056 = vsel %vm2047, %v2023, %v1670
      %v2057 = vsel %vm2047, %v2024, %v1672
      %v2058 = vsel %vm2047, %v2025, %v1674
      %v2059 = vsel %vm2047, %v2026, %v1676
      %v2060 = vsel %vm2047, %v2027, %v1678
      %v2061 = vsel %vm2047, %v2028, %v1680
      %v2062 = vsel %vm2047, %v2029, %v1682
      %v2063 = vsel %vm2047, %v2030, %v1684
      %v2064 = vsel %vm2047, %v2031, %v1686
      %v2065 = vsel %vm2047, %v2032, %v1688
      %v2066 = vsel %vm2047, %v2033, %v1690
      %v2067 = vsel %vm2047, %v2034, %v1692
      %v2068 = vsel %vm2047, %v2035, %v1694
      %v2069 = vsel %vm2047, %v2036, %v1696
      %v2070 = vsel %vm2047, %v2037, %v1698
      %v2071 = vsel %vm2047, %v2038, %v1700
      %v2072 = vsel %vm2047, %v2039, %v1702
      %v2073 = vsel %vm2047, %v2040, %v1704
      %v2074 = vsel %vm2047, %v2041, %v1706
      %v2075 = vsel %vm2047, %v2042, %v1708
      %v2076 = vsel %vm2047, %v2043, %v1710
      %v2077 = vsel %vm2047, %v2044, %v1712
      %v2078 = vsel %vm2047, %v2045, %v1714
      %v2079 = vsel %vm2047, %v2046, %v1716
      %vm2080 = vcmask 523264
      %v2081 = vsel %vm2080, %v2048, %v1755
      %v2082 = vsel %vm2080, %v2049, %v1757
      %v2083 = vsel %vm2080, %v2050, %v1759
      %v2084 = vsel %vm2080, %v2051, %v1761
      %v2085 = vsel %vm2080, %v2052, %v1763
      %v2086 = vsel %vm2080, %v2053, %v1765
      %v2087 = vsel %vm2080, %v2054, %v1767
      %v2088 = vsel %vm2080, %v2055, %v1769
      %v2089 = vsel %vm2080, %v2056, %v1771
      %v2090 = vsel %vm2080, %v2057, %v1773
      %v2091 = vsel %vm2080, %v2058, %v1775
      %v2092 = vsel %vm2080, %v2059, %v1777
      %v2093 = vsel %vm2080, %v2060, %v1779
      %v2094 = vsel %vm2080, %v2061, %v1781
      %v2095 = vsel %vm2080, %v2062, %v1783
      %v2096 = vsel %vm2080, %v2063, %v1785
      %v2097 = vsel %vm2080, %v2064, %v1787
      %v2098 = vsel %vm2080, %v2065, %v1789
      %v2099 = vsel %vm2080, %v2066, %v1791
      %v2100 = vsel %vm2080, %v2067, %v1793
      %v2101 = vsel %vm2080, %v2068, %v1795
      %v2102 = vsel %vm2080, %v2069, %v1797
      %v2103 = vsel %vm2080, %v2070, %v1799
      %v2104 = vsel %vm2080, %v2071, %v1801
      %v2105 = vsel %vm2080, %v2072, %v1803
      %v2106 = vsel %vm2080, %v2073, %v1805
      %v2107 = vsel %vm2080, %v2074, %v1807
      %v2108 = vsel %vm2080, %v2075, %v1809
      %v2109 = vsel %vm2080, %v2076, %v1811
      %v2110 = vsel %vm2080, %v2077, %v1813
      %v2111 = vsel %vm2080, %v2078, %v1815
      %v2112 = vsel %vm2080, %v2079, %v1817
      %v2113 = vld [vmem:[%s3] sm:$0xff]
      %v2114 = vld [vmem:[%s3 + $0x8] sm:$0xff]
      %v2115 = vld [vmem:[%s3 + $0x10] sm:$0xff]
      %v2116 = vld [vmem:[%s3 + $0x18] sm:$0xff]
      %v2117 = vld [vmem:[%s3 + $0x20] sm:$0xff]
      %v2118 = vld [vmem:[%s3 + $0x28] sm:$0xff]
      %v2119 = vld [vmem:[%s3 + $0x30] sm:$0xff]
      %v2120 = vld [vmem:[%s3 + $0x38] sm:$0xff]
      %v2121 = vld [vmem:[%s3 + $0x40] sm:$0xff]
      %vm2122 = vcmask 588800
      %v2124 = vsel %vm2122, %v2081, 0
      %v2127 = vsel %vm2122, %v2082, 0
      %v2130 = vsel %vm2122, %v2083, 0
      %v2133 = vsel %vm2122, %v2084, 0
      %v2136 = vsel %vm2122, %v2085, 0
      %v2139 = vsel %vm2122, %v2086, 0
      %v2142 = vsel %vm2122, %v2087, 0
      %v2145 = vsel %vm2122, %v2088, 0
      %v2148 = vsel %vm2122, %v2089, 0
      %v2151 = vsel %vm2122, %v2090, 0
      %v2154 = vsel %vm2122, %v2091, 0
      %v2157 = vsel %vm2122, %v2092, 0
      %v2160 = vsel %vm2122, %v2093, 0
      %v2163 = vsel %vm2122, %v2094, 0
      %v2166 = vsel %vm2122, %v2095, 0
      %v2169 = vsel %vm2122, %v2096, 0
      %v2172 = vsel %vm2122, %v2097, 0
      %v2175 = vsel %vm2122, %v2098, 0
      %v2178 = vsel %vm2122, %v2099, 0
      %v2181 = vsel %vm2122, %v2100, 0
      %v2184 = vsel %vm2122, %v2101, 0
      %v2187 = vsel %vm2122, %v2102, 0
      %v2190 = vsel %vm2122, %v2103, 0
      %v2193 = vsel %vm2122, %v2104, 0
      %v2196 = vsel %vm2122, %v2105, 0
      %v2199 = vsel %vm2122, %v2106, 0
      %v2202 = vsel %vm2122, %v2107, 0
      %v2205 = vsel %vm2122, %v2108, 0
      %v2208 = vsel %vm2122, %v2109, 0
      %v2211 = vsel %vm2122, %v2110, 0
      %v2214 = vsel %vm2122, %v2111, 0
      %v2217 = vsel %vm2122, %v2112, 0
      %2219 = vmatprep.subr.mxu0 0.0
      %2220 = vmatpush1.msra.mxu0 %v2113
      %2221 = vmatprep.subr.mxu0 0.0
      %2222 = vmatpush1.msra.mxu0 %v2114
      %2223 = vmatprep.subr.mxu0 0.0
      %2224 = vmatpush1.msra.mxu0 %v2115
      %2225 = vmatprep.subr.mxu0 0.0
      %2226 = vmatpush1.msra.mxu0 %v2116
      %2227 = vmatprep.subr.mxu0 0.0
      %2228 = vmatpush1.msra.mxu0 %v2117
      %2229 = vmatprep.subr.mxu0 0.0
      %2230 = vmatpush1.msra.mxu0 %v2118
      %2231 = vmatprep.subr.mxu0 0.0
      %2232 = vmatpush1.msra.mxu0 %v2119
      %2233 = vmatprep.subr.mxu0 0.0
      %2234 = vmatpush1.msra.mxu0 %v2120
      %2235 = vmatprep.subr.mxu0 0.0
      %2236 = vmatpush1.msra.mxu0 %v2121
      %2237 = vmatprep.subr.mxu0 0.0
      %2238 = vmatpush1.msra.mxu0 0.0
      %2239 = vmatprep.subr.mxu0 0.0
      %2240 = vmatpush1.msra.mxu0 0.0
      %2241 = vmatprep.subr.mxu0 0.0
      %2242 = vmatpush1.msra.mxu0 0.0
      %2243 = vmatprep.subr.mxu0 0.0
      %2244 = vmatpush1.msra.mxu0 0.0
      %2245 = vmatprep.subr.mxu0 0.0
      %2246 = vmatpush1.msra.mxu0 0.0
      %2247 = vmatprep.subr.mxu0 0.0
      %2248 = vmatpush1.msra.mxu0 0.0
      %2249 = vmatprep.subr.mxu0 0.0
      %2250 = vmatpush1.msra.mxu0 0.0
      %2251 = vmatprep.subr.mxu0 0.0
      %2252 = vmatpush1.msra.mxu0 0.0
      %2253 = vmatprep.subr.mxu0 0.0
      %2254 = vmatpush1.msra.mxu0 0.0
      %2255 = vmatprep.subr.mxu0 0.0
      %2256 = vmatpush1.msra.mxu0 0.0
      %2257 = vmatprep.subr.mxu0 0.0
      %2258 = vmatpush1.msra.mxu0 0.0
      %2259 = vmatprep.subr.mxu0 0.0
      %2260 = vmatpush1.msra.mxu0 0.0
      %2261 = vmatprep.subr.mxu0 0.0
      %2262 = vmatpush1.msra.mxu0 0.0
      %2263 = vmatprep.subr.mxu0 0.0
      %2264 = vmatpush1.msra.mxu0 0.0
      %2265 = vmatprep.subr.mxu0 0.0
      %2266 = vmatpush1.msra.mxu0 0.0
      %2267 = vmatprep.subr.mxu0 0.0
      %2268 = vmatpush1.msra.mxu0 0.0
      %2269 = vmatprep.subr.mxu0 0.0
      %2270 = vmatpush1.msra.mxu0 0.0
      %2271 = vmatprep.subr.mxu0 0.0
      %2272 = vmatpush1.msra.mxu0 0.0
      %2273 = vmatprep.subr.mxu0 0.0
      %2274 = vmatpush1.msra.mxu0 0.0
      %2275 = vmatprep.subr.mxu0 0.0
      %2276 = vmatpush1.msra.mxu0 0.0
      %2277 = vmatprep.subr.mxu0 0.0
      %2278 = vmatpush1.msra.mxu0 0.0
      %2279 = vmatprep.subr.mxu0 0.0
      %2280 = vmatpush1.msra.mxu0 0.0
      %2281 = vmatprep.subr.mxu0 0.0
      %2282 = vmatpush1.msra.mxu0 0.0
      %2283 = vmatprep.mubr.f32.mxu0 0.0
      %2284 = vmatmul.mubr.f32.gmra.mrb[0].mxu0 %v2124
      %v2285 = vpop.f32.mrb[0].mxu0
      %v2286 = vadd.f32 0.0, %v2285
      %v2287 = vpop.f32.mrb[0].mxu0
      %2288 = vmatprep.mubr.f32.mxu0 0.0
      %2289 = vmatmul.mubr.f32.gmra.mrb[0].mxu0 %v2127
      %v2290 = vpop.f32.mrb[0].mxu0
      %v2291 = vadd.f32 0.0, %v2290
      %v2292 = vpop.f32.mrb[0].mxu0
      %2293 = vmatprep.mubr.f32.mxu0 0.0
      %2294 = vmatmul.mubr.f32.gmra.mrb[0].mxu0 %v2130
      %v2295 = vpop.f32.mrb[0].mxu0
      %v2296 = vadd.f32 0.0, %v2295
      %v2297 = vpop.f32.mrb[0].mxu0
      %2298 = vmatprep.mubr.f32.mxu0 0.0
      %2299 = vmatmul.mubr.f32.gmra.mrb[0].mxu0 %v2133
      %v2300 = vpop.f32.mrb[0].mxu0
      %v2301 = vadd.f32 0.0, %v2300
      %v2302 = vpop.f32.mrb[0].mxu0
      %2303 = vmatprep.mubr.f32.mxu0 0.0
      %2304 = vmatmul.mubr.f32.gmra.mrb[0].mxu0 %v2136
      %v2305 = vpop.f32.mrb[0].mxu0
      %v2306 = vadd.f32 0.0, %v2305
      %v2307 = vpop.f32.mrb[0].mxu0
      %2308 = vmatprep.mubr.f32.mxu0 0.0
      %2309 = vmatmul.mubr.f32.gmra.mrb[0].mxu0 %v2139
      %v2310 = vpop.f32.mrb[0].mxu0
      %v2311 = vadd.f32 0.0, %v2310
      %v2312 = vpop.f32.mrb[0].mxu0
      %2313 = vmatprep.mubr.f32.mxu0 0.0
      %2314 = vmatmul.mubr.f32.gmra.mrb[0].mxu0 %v2142
      %v2315 = vpop.f32.mrb[0].mxu0
      %v2316 = vadd.f32 0.0, %v2315
      %v2317 = vpop.f32.mrb[0].mxu0
      %2318 = vmatprep.mubr.f32.mxu0 0.0
      %2319 = vmatmul.mubr.f32.gmra.mrb[0].mxu0 %v2145
      %v2320 = vpop.f32.mrb[0].mxu0
      %v2321 = vadd.f32 0.0, %v2320
      %v2322 = vpop.f32.mrb[0].mxu0
      %2323 = vmatprep.mubr.f32.mxu0 0.0
      %2324 = vmatmul.mubr.f32.gmra.mrb[0].mxu0 %v2148
      %v2325 = vpop.f32.mrb[0].mxu0
      %v2326 = vadd.f32 0.0, %v2325
      %v2327 = vpop.f32.mrb[0].mxu0
      %2328 = vmatprep.mubr.f32.mxu0 0.0
      %2329 = vmatmul.mubr.f32.gmra.mrb[0].mxu0 %v2151
      %v2330 = vpop.f32.mrb[0].mxu0
      %v2331 = vadd.f32 0.0, %v2330
      %v2332 = vpop.f32.mrb[0].mxu0
      %2333 = vmatprep.mubr.f32.mxu0 0.0
      %2334 = vmatmul.mubr.f32.gmra.mrb[0].mxu0 %v2154
      %v2335 = vpop.f32.mrb[0].mxu0
      %v2336 = vadd.f32 0.0, %v2335
      %v2337 = vpop.f32.mrb[0].mxu0
      %2338 = vmatprep.mubr.f32.mxu0 0.0
      %2339 = vmatmul.mubr.f32.gmra.mrb[0].mxu0 %v2157
      %v2340 = vpop.f32.mrb[0].mxu0
      %v2341 = vadd.f32 0.0, %v2340
      %v2342 = vpop.f32.mrb[0].mxu0
      %2343 = vmatprep.mubr.f32.mxu0 0.0
      %2344 = vmatmul.mubr.f32.gmra.mrb[0].mxu0 %v2160
      %v2345 = vpop.f32.mrb[0].mxu0
      %v2346 = vadd.f32 0.0, %v2345
      %v2347 = vpop.f32.mrb[0].mxu0
      %2348 = vmatprep.mubr.f32.mxu0 0.0
      %2349 = vmatmul.mubr.f32.gmra.mrb[0].mxu0 %v2163
      %v2350 = vpop.f32.mrb[0].mxu0
      %v2351 = vadd.f32 0.0, %v2350
      %v2352 = vpop.f32.mrb[0].mxu0
      %2353 = vmatprep.mubr.f32.mxu0 0.0
      %2354 = vmatmul.mubr.f32.gmra.mrb[0].mxu0 %v2166
      %v2355 = vpop.f32.mrb[0].mxu0
      %v2356 = vadd.f32 0.0, %v2355
      %v2357 = vpop.f32.mrb[0].mxu0
      %2358 = vmatprep.mubr.f32.mxu0 0.0
      %2359 = vmatmul.mubr.f32.gmra.mrb[0].mxu0 %v2169
      %v2360 = vpop.f32.mrb[0].mxu0
      %v2361 = vadd.f32 0.0, %v2360
      %v2362 = vpop.f32.mrb[0].mxu0
      %2363 = vmatprep.mubr.f32.mxu0 0.0
      %2364 = vmatmul.mubr.f32.gmra.mrb[0].mxu0 %v2172
      %v2365 = vpop.f32.mrb[0].mxu0
      %v2366 = vadd.f32 0.0, %v2365
      %v2367 = vpop.f32.mrb[0].mxu0
      %2368 = vmatprep.mubr.f32.mxu0 0.0
      %2369 = vmatmul.mubr.f32.gmra.mrb[0].mxu0 %v2175
      %v2370 = vpop.f32.mrb[0].mxu0
      %v2371 = vadd.f32 0.0, %v2370
      %v2372 = vpop.f32.mrb[0].mxu0
      %2373 = vmatprep.mubr.f32.mxu0 0.0
      %2374 = vmatmul.mubr.f32.gmra.mrb[0].mxu0 %v2178
      %v2375 = vpop.f32.mrb[0].mxu0
      %v2376 = vadd.f32 0.0, %v2375
      %v2377 = vpop.f32.mrb[0].mxu0
      %2378 = vmatprep.mubr.f32.mxu0 0.0
      %2379 = vmatmul.mubr.f32.gmra.mrb[0].mxu0 %v2181
      %v2380 = vpop.f32.mrb[0].mxu0
      %v2381 = vadd.f32 0.0, %v2380
      %v2382 = vpop.f32.mrb[0].mxu0
      %2383 = vmatprep.mubr.f32.mxu0 0.0
      %2384 = vmatmul.mubr.f32.gmra.mrb[0].mxu0 %v2184
      %v2385 = vpop.f32.mrb[0].mxu0
      %v2386 = vadd.f32 0.0, %v2385
      %v2387 = vpop.f32.mrb[0].mxu0
      %2388 = vmatprep.mubr.f32.mxu0 0.0
      %2389 = vmatmul.mubr.f32.gmra.mrb[0].mxu0 %v2187
      %v2390 = vpop.f32.mrb[0].mxu0
      %v2391 = vadd.f32 0.0, %v2390
      %v2392 = vpop.f32.mrb[0].mxu0
      %2393 = vmatprep.mubr.f32.mxu0 0.0
      %2394 = vmatmul.mubr.f32.gmra.mrb[0].mxu0 %v2190
      %v2395 = vpop.f32.mrb[0].mxu0
      %v2396 = vadd.f32 0.0, %v2395
      %v2397 = vpop.f32.mrb[0].mxu0
      %2398 = vmatprep.mubr.f32.mxu0 0.0
      %2399 = vmatmul.mubr.f32.gmra.mrb[0].mxu0 %v2193
      %v2400 = vpop.f32.mrb[0].mxu0
      %v2401 = vadd.f32 0.0, %v2400
      %v2402 = vpop.f32.mrb[0].mxu0
      %2403 = vmatprep.mubr.f32.mxu0 0.0
      %2404 = vmatmul.mubr.f32.gmra.mrb[0].mxu0 %v2196
      %v2405 = vpop.f32.mrb[0].mxu0
      %v2406 = vadd.f32 0.0, %v2405
      %v2407 = vpop.f32.mrb[0].mxu0
      %2408 = vmatprep.mubr.f32.mxu0 0.0
      %2409 = vmatmul.mubr.f32.gmra.mrb[0].mxu0 %v2199
      %v2410 = vpop.f32.mrb[0].mxu0
      %v2411 = vadd.f32 0.0, %v2410
      %v2412 = vpop.f32.mrb[0].mxu0
      %2413 = vmatprep.mubr.f32.mxu0 0.0
      %2414 = vmatmul.mubr.f32.gmra.mrb[0].mxu0 %v2202
      %v2415 = vpop.f32.mrb[0].mxu0
      %v2416 = vadd.f32 0.0, %v2415
      %v2417 = vpop.f32.mrb[0].mxu0
      %2418 = vmatprep.mubr.f32.mxu0 0.0
      %2419 = vmatmul.mubr.f32.gmra.mrb[0].mxu0 %v2205
      %v2420 = vpop.f32.mrb[0].mxu0
      %v2421 = vadd.f32 0.0, %v2420
      %v2422 = vpop.f32.mrb[0].mxu0
      %2423 = vmatprep.mubr.f32.mxu0 0.0
      %2424 = vmatmul.mubr.f32.gmra.mrb[0].mxu0 %v2208
      %v2425 = vpop.f32.mrb[0].mxu0
      %v2426 = vadd.f32 0.0, %v2425
      %v2427 = vpop.f32.mrb[0].mxu0
      %2428 = vmatprep.mubr.f32.mxu0 0.0
      %2429 = vmatmul.mubr.f32.gmra.mrb[0].mxu0 %v2211
      %v2430 = vpop.f32.mrb[0].mxu0
      %v2431 = vadd.f32 0.0, %v2430
      %v2432 = vpop.f32.mrb[0].mxu0
      %2433 = vmatprep.mubr.f32.mxu0 0.0
      %2434 = vmatmul.mubr.f32.gmra.mrb[0].mxu0 %v2214
      %v2435 = vpop.f32.mrb[0].mxu0
      %v2436 = vadd.f32 0.0, %v2435
      %v2437 = vpop.f32.mrb[0].mxu0
      %2438 = vmatprep.mubr.f32.mxu0 0.0
      %2439 = vmatmul.mubr.f32.gmra.mrb[0].mxu0 %v2217
      %v2440 = vpop.f32.mrb[0].mxu0
      %v2441 = vadd.f32 0.0, %v2440
      %v2442 = vpop.f32.mrb[0].mxu0
      %2443 = vdwg.mxu0
      %2444 = vst.msk [vmem:[%s457] sm:$0xff] %vm710, %v2286
      %2445 = vst.msk [vmem:[%s457 + $0x8] sm:$0xff] %vm710, %v2291
      %2446 = vst.msk [vmem:[%s457 + $0x10] sm:$0xff] %vm710, %v2296
      %2447 = vst.msk [vmem:[%s457 + $0x18] sm:$0xff] %vm710, %v2301
      %2448 = vst.msk [vmem:[%s457 + $0x20] sm:$0xff] %vm710, %v2306
      %2449 = vst.msk [vmem:[%s457 + $0x28] sm:$0xff] %vm710, %v2311
      %2450 = vst.msk [vmem:[%s457 + $0x30] sm:$0xff] %vm710, %v2316
      %2451 = vst.msk [vmem:[%s457 + $0x38] sm:$0xff] %vm710, %v2321
      %2452 = vst.msk [vmem:[%s457 + $0x40] sm:$0xff] %vm710, %v2326
      %2453 = vst.msk [vmem:[%s457 + $0x48] sm:$0xff] %vm710, %v2331
      %2454 = vst.msk [vmem:[%s457 + $0x50] sm:$0xff] %vm710, %v2336
      %2455 = vst.msk [vmem:[%s457 + $0x58] sm:$0xff] %vm710, %v2341
      %2456 = vst.msk [vmem:[%s457 + $0x60] sm:$0xff] %vm710, %v2346
      %2457 = vst.msk [vmem:[%s457 + $0x68] sm:$0xff] %vm710, %v2351
      %2458 = vst.msk [vmem:[%s457 + $0x70] sm:$0xff] %vm710, %v2356
      %2459 = vst.msk [vmem:[%s457 + $0x78] sm:$0xff] %vm710, %v2361
      %2460 = vst.msk [vmem:[%s457 + $0x80] sm:$0xff] %vm710, %v2366
      %2461 = vst.msk [vmem:[%s457 + $0x88] sm:$0xff] %vm710, %v2371
      %2462 = vst.msk [vmem:[%s457 + $0x90] sm:$0xff] %vm710, %v2376
      %2463 = vst.msk [vmem:[%s457 + $0x98] sm:$0xff] %vm710, %v2381
      %2464 = vst.msk [vmem:[%s457 + $0xa0] sm:$0xff] %vm710, %v2386
      %2465 = vst.msk [vmem:[%s457 + $0xa8] sm:$0xff] %vm710, %v2391
      %2466 = vst.msk [vmem:[%s457 + $0xb0] sm:$0xff] %vm710, %v2396
      %2467 = vst.msk [vmem:[%s457 + $0xb8] sm:$0xff] %vm710, %v2401
      %2468 = vst.msk [vmem:[%s457 + $0xc0] sm:$0xff] %vm710, %v2406
      %2469 = vst.msk [vmem:[%s457 + $0xc8] sm:$0xff] %vm710, %v2411
      %2470 = vst.msk [vmem:[%s457 + $0xd0] sm:$0xff] %vm710, %v2416
      %2471 = vst.msk [vmem:[%s457 + $0xd8] sm:$0xff] %vm710, %v2421
      %2472 = vst.msk [vmem:[%s457 + $0xe0] sm:$0xff] %vm710, %v2426
      %2473 = vst.msk [vmem:[%s457 + $0xe8] sm:$0xff] %vm710, %v2431
      %2474 = vst.msk [vmem:[%s457 + $0xf0] sm:$0xff] %vm710, %v2436
      %2475 = vst.msk [vmem:[%s457 + $0xf8] sm:$0xff] %vm710, %v2441
      %v2476 = vsel %vm710, %v2286, 0.0
      %v2477 = vsel %vm710, %v2291, 0.0
      %v2478 = vadd.f32 %v2476, %v2477
      %v2479 = vsel %vm710, %v2296, 0.0
      %v2480 = vadd.f32 %v2478, %v2479
      %v2481 = vsel %vm710, %v2301, 0.0
      %v2482 = vadd.f32 %v2480, %v2481
      %v2483 = vsel %vm710, %v2306, 0.0
      %v2484 = vadd.f32 %v2482, %v2483
      %v2485 = vsel %vm710, %v2311, 0.0
      %v2486 = vadd.f32 %v2484, %v2485
      %v2487 = vsel %vm710, %v2316, 0.0
      %v2488 = vadd.f32 %v2486, %v2487
      %v2489 = vsel %vm710, %v2321, 0.0
      %v2490 = vadd.f32 %v2488, %v2489
      %v2491 = vsel %vm710, %v2326, 0.0
      %v2492 = vadd.f32 %v2490, %v2491
      %v2493 = vsel %vm710, %v2331, 0.0
      %v2494 = vadd.f32 %v2492, %v2493
      %v2495 = vsel %vm710, %v2336, 0.0
      %v2496 = vadd.f32 %v2494, %v2495
      %v2497 = vsel %vm710, %v2341, 0.0
      %v2498 = vadd.f32 %v2496, %v2497
      %v2499 = vsel %vm710, %v2346, 0.0
      %v2500 = vadd.f32 %v2498, %v2499
      %v2501 = vsel %vm710, %v2351, 0.0
      %v2502 = vadd.f32 %v2500, %v2501
      %v2503 = vsel %vm710, %v2356, 0.0
      %v2504 = vadd.f32 %v2502, %v2503
      %v2505 = vsel %vm710, %v2361, 0.0
      %v2506 = vadd.f32 %v2504, %v2505
      %v2507 = vsel %vm710, %v2366, 0.0
      %v2508 = vadd.f32 %v2506, %v2507
      %v2509 = vsel %vm710, %v2371, 0.0
      %v2510 = vadd.f32 %v2508, %v2509
      %v2511 = vsel %vm710, %v2376, 0.0
      %v2512 = vadd.f32 %v2510, %v2511
      %v2513 = vsel %vm710, %v2381, 0.0
      %v2514 = vadd.f32 %v2512, %v2513
      %v2515 = vsel %vm710, %v2386, 0.0
      %v2516 = vadd.f32 %v2514, %v2515
      %v2517 = vsel %vm710, %v2391, 0.0
      %v2518 = vadd.f32 %v2516, %v2517
      %v2519 = vsel %vm710, %v2396, 0.0
      %v2520 = vadd.f32 %v2518, %v2519
      %v2521 = vsel %vm710, %v2401, 0.0
      %v2522 = vadd.f32 %v2520, %v2521
      %v2523 = vsel %vm710, %v2406, 0.0
      %v2524 = vadd.f32 %v2522, %v2523
      %v2525 = vsel %vm710, %v2411, 0.0
      %v2526 = vadd.f32 %v2524, %v2525
      %v2527 = vsel %vm710, %v2416, 0.0
      %v2528 = vadd.f32 %v2526, %v2527
      %v2529 = vsel %vm710, %v2421, 0.0
      %v2530 = vadd.f32 %v2528, %v2529
      %v2531 = vsel %vm710, %v2426, 0.0
      %v2532 = vadd.f32 %v2530, %v2531
      %v2533 = vsel %vm710, %v2431, 0.0
      %v2534 = vadd.f32 %v2532, %v2533
      %v2535 = vsel %vm710, %v2436, 0.0
      %v2536 = vadd.f32 %v2534, %v2535
      %v2537 = vsel %vm710, %v2441, 0.0
      %v2538 = vadd.f32 %v2536, %v2537
      %v2539 = vrot.slane %v2538, 4
      %v2540 = vadd.f32 %v2538, %v2539
      %v2541 = vrot.slane %v2540, 2
      %v2542 = vadd.f32 %v2540, %v2541
      %v2543 = vrot.slane %v2542, 1
      %v2544 = vadd.f32 %v2542, %v2543
      %v2545 = vmul.f32 %v2286, %v2286
      %v2546 = vmul.f32 %v2291, %v2291
      %v2547 = vmul.f32 %v2296, %v2296
      %v2548 = vmul.f32 %v2301, %v2301
      %v2549 = vmul.f32 %v2306, %v2306
      %v2550 = vmul.f32 %v2311, %v2311
      %v2551 = vmul.f32 %v2316, %v2316
      %v2552 = vmul.f32 %v2321, %v2321
      %v2553 = vmul.f32 %v2326, %v2326
      %v2554 = vmul.f32 %v2331, %v2331
      %v2555 = vmul.f32 %v2336, %v2336
      %v2556 = vmul.f32 %v2341, %v2341
      %v2557 = vmul.f32 %v2346, %v2346
      %v2558 = vmul.f32 %v2351, %v2351
      %v2559 = vmul.f32 %v2356, %v2356
      %v2560 = vmul.f32 %v2361, %v2361
      %v2561 = vmul.f32 %v2366, %v2366
      %v2562 = vmul.f32 %v2371, %v2371
      %v2563 = vmul.f32 %v2376, %v2376
      %v2564 = vmul.f32 %v2381, %v2381
      %v2565 = vmul.f32 %v2386, %v2386
      %v2566 = vmul.f32 %v2391, %v2391
      %v2567 = vmul.f32 %v2396, %v2396
      %v2568 = vmul.f32 %v2401, %v2401
      %v2569 = vmul.f32 %v2406, %v2406
      %v2570 = vmul.f32 %v2411, %v2411
      %v2571 = vmul.f32 %v2416, %v2416
      %v2572 = vmul.f32 %v2421, %v2421
      %v2573 = vmul.f32 %v2426, %v2426
      %v2574 = vmul.f32 %v2431, %v2431
      %v2575 = vmul.f32 %v2436, %v2436
      %v2576 = vmul.f32 %v2441, %v2441
      %v2577 = vsel %vm710, %v2545, 0.0
      %v2578 = vsel %vm710, %v2546, 0.0
      %v2579 = vadd.f32 %v2577, %v2578
      %v2580 = vsel %vm710, %v2547, 0.0
      %v2581 = vadd.f32 %v2579, %v2580
      %v2582 = vsel %vm710, %v2548, 0.0
      %v2583 = vadd.f32 %v2581, %v2582
      %v2584 = vsel %vm710, %v2549, 0.0
      %v2585 = vadd.f32 %v2583, %v2584
      %v2586 = vsel %vm710, %v2550, 0.0
      %v2587 = vadd.f32 %v2585, %v2586
      %v2588 = vsel %vm710, %v2551, 0.0
      %v2589 = vadd.f32 %v2587, %v2588
      %v2590 = vsel %vm710, %v2552, 0.0
      %v2591 = vadd.f32 %v2589, %v2590
      %v2592 = vsel %vm710, %v2553, 0.0
      %v2593 = vadd.f32 %v2591, %v2592
      %v2594 = vsel %vm710, %v2554, 0.0
      %v2595 = vadd.f32 %v2593, %v2594
      %v2596 = vsel %vm710, %v2555, 0.0
      %v2597 = vadd.f32 %v2595, %v2596
      %v2598 = vsel %vm710, %v2556, 0.0
      %v2599 = vadd.f32 %v2597, %v2598
      %v2600 = vsel %vm710, %v2557, 0.0
      %v2601 = vadd.f32 %v2599, %v2600
      %v2602 = vsel %vm710, %v2558, 0.0
      %v2603 = vadd.f32 %v2601, %v2602
      %v2604 = vsel %vm710, %v2559, 0.0
      %v2605 = vadd.f32 %v2603, %v2604
      %v2606 = vsel %vm710, %v2560, 0.0
      %v2607 = vadd.f32 %v2605, %v2606
      %v2608 = vsel %vm710, %v2561, 0.0
      %v2609 = vadd.f32 %v2607, %v2608
      %v2610 = vsel %vm710, %v2562, 0.0
      %v2611 = vadd.f32 %v2609, %v2610
      %v2612 = vsel %vm710, %v2563, 0.0
      %v2613 = vadd.f32 %v2611, %v2612
      %v2614 = vsel %vm710, %v2564, 0.0
      %v2615 = vadd.f32 %v2613, %v2614
      %v2616 = vsel %vm710, %v2565, 0.0
      %v2617 = vadd.f32 %v2615, %v2616
      %v2618 = vsel %vm710, %v2566, 0.0
      %v2619 = vadd.f32 %v2617, %v2618
      %v2620 = vsel %vm710, %v2567, 0.0
      %v2621 = vadd.f32 %v2619, %v2620
      %v2622 = vsel %vm710, %v2568, 0.0
      %v2623 = vadd.f32 %v2621, %v2622
      %v2624 = vsel %vm710, %v2569, 0.0
      %v2625 = vadd.f32 %v2623, %v2624
      %v2626 = vsel %vm710, %v2570, 0.0
      %v2627 = vadd.f32 %v2625, %v2626
      %v2628 = vsel %vm710, %v2571, 0.0
      %v2629 = vadd.f32 %v2627, %v2628
      %v2630 = vsel %vm710, %v2572, 0.0
      %v2631 = vadd.f32 %v2629, %v2630
      %v2632 = vsel %vm710, %v2573, 0.0
      %v2633 = vadd.f32 %v2631, %v2632
      %v2634 = vsel %vm710, %v2574, 0.0
      %v2635 = vadd.f32 %v2633, %v2634
      %v2636 = vsel %vm710, %v2575, 0.0
      %v2637 = vadd.f32 %v2635, %v2636
      %v2638 = vsel %vm710, %v2576, 0.0
      %v2639 = vadd.f32 %v2637, %v2638
      %v2640 = vrot.slane %v2639, 4
      %v2641 = vadd.f32 %v2639, %v2640
      %v2642 = vrot.slane %v2641, 2
      %v2643 = vadd.f32 %v2641, %v2642
      %v2644 = vrot.slane %v2643, 1
      %v2645 = vadd.f32 %v2643, %v2644
      %vm2646 = vcmask 1040384
      %v2647 = vsel %vm2646, %v2544, %v2645
      %vm2648 = vcmask 58368
      %2649 = vst.msk [vmem:[%s465] sm:$0x3] %vm2648, %v2647
      %s2650 = smul.u32 16, %s24
      %p2651 = scmp.lt.s32.totalorder %s23, 1
      %s2652 = scalar_select %p2651, %s23, 1
      %p2653 = scmp.lt.s32.totalorder %s2650, 15
      %s2654 = scalar_select %p2653, %s2650, 15
      %s2655 = smul.addr %s2654, 2
      %s2656 = smul.addr %s2652, 32
      %s2657 = sadd.s32 %s2655, %s2656
      %s2658 = smul.addr %s2657, 8
      %s2659 = scalar_lea.vmem %s6, %s2658
      %p2660 = scmp.lt.s32.totalorder %s23, 1
      %s2661 = scalar_select %p2660, %s23, 1
      %p2662 = scmp.lt.s32.totalorder %s24, 0
      %s2663 = scalar_select %p2662, %s24, 0
      %s2664 = sadd.s32 %s2663, %s2661
      %s2665 = smul.addr %s2664, 2
      %s2666 = scalar_lea.vmem %s7, %s2665
      // Predicated region
      $region61: #{conv_layer_forward.4} parent=43 // pred_check
        %p2667 = pneg %p214
      $region62: #{conv_layer_forward.4} parent=43 // pred_check_branch
        %2669 = sbr.rel (%p2667) target = $region64
      $region63: #{conv_layer_forward.4} parent=43 // pred_region
        %s2670 = smul.u32 16, %s24
      $region64: #{conv_layer_forward.4} parent=43 // pred_fallthru
        _
      // Predicated region
      $region65: #{conv_layer_forward.4} parent=43 // pred_check
        %p2671 = pneg %p242
      $region66: #{conv_layer_forward.4} parent=43 // pred_check_branch
        %2673 = sbr.rel (%p2671) target = $region68
      $region67: #{conv_layer_forward.4} parent=43 // pred_region
        _
      $region68: #{conv_layer_forward.4} parent=43 // pred_fallthru
        _
    $region44: #{conv_layer_forward.4} parent=5 // pred_fallthru
      _
    %p2674 = scmp.le.s32.totalorder 2, %s14
    // Predicated region
    $region69: #{conv_layer_forward.4} parent=5 // pred_check
      %p2675 = pneg %p2674
    $region70: #{conv_layer_forward.4} parent=5 // pred_check_branch
      %2677 = sbr.rel (%p2675) target = $region72
    $region71: #{conv_layer_forward.4} parent=5 // pred_region
      %s2678 = ssub.s32 %s14, 2
      // Predicated region
      $region73: #{conv_layer_forward.4} parent=71 // pred_check
        %p2679 = pneg %p220
      $region74: #{conv_layer_forward.4} parent=71 // pred_check_branch
        %2681 = sbr.rel (%p2679) target = $region76
      $region75: #{conv_layer_forward.4} parent=71 // pred_region
        %s2682 = smul.u32 16, %s26
        %p2683 = scmp.lt.s32.totalorder %s25, 1
        %s2684 = scalar_select %p2683, %s25, 1
        %p2685 = scmp.lt.s32.totalorder %s2682, 15
        %s2686 = scalar_select %p2685, %s2682, 15
        %s2687 = smul.addr %s2686, 2
        %s2688 = smul.addr %s2684, 32
        %s2689 = sadd.s32 %s2687, %s2688
        %s2690 = smul.addr %s2689, 8
        %s2691 = scalar_lea.vmem %s6, %s2690
      $region76: #{conv_layer_forward.4} parent=71 // pred_fallthru
        _
      // Predicated region
      $region77: #{conv_layer_forward.4} parent=71 // pred_check
        %p2692 = pneg %p248
      $region78: #{conv_layer_forward.4} parent=71 // pred_check_branch
        %2694 = sbr.rel (%p2692) target = $region80
      $region79: #{conv_layer_forward.4} parent=71 // pred_region
        %p2695 = scmp.lt.s32.totalorder %s25, 1
        %s2696 = scalar_select %p2695, %s25, 1
        %p2697 = scmp.lt.s32.totalorder %s26, 0
        %s2698 = scalar_select %p2697, %s26, 0
        %s2699 = sadd.s32 %s2698, %s2696
        %s2700 = smul.addr %s2699, 2
        %s2701 = scalar_lea.vmem %s7, %s2700
      $region80: #{conv_layer_forward.4} parent=71 // pred_fallthru
        _
    $region72: #{conv_layer_forward.4} parent=5 // pred_fallthru
      _
  $region6: #{conv_layer_forward.4} parent=0 // loop_footer
    %s18 = sadd.s32 1, %s14
  $region7: #{conv_layer_forward.4} parent=0 // loop_footer_branch
    %13 = sbr.rel target = $region3
  $region8: #{conv_layer_forward.4} parent=0 // loop_exit
    _

// kernel: conv_layer_forward.3
$region0: #{conv_layer_forward.3}
  #allocation0 [shape = 'u32[]', space=smem, size = 0x4, offset = 0x4, fixed_abs, tag = 'smem constant byte address 0x4 - core index']
  #allocation1 [shape = 'u32[144,128]{1,0:T(1,128)}', space=vmem, size = 0x12000, scoped, tag = 'internal scratch']
  #allocation2 [shape = 'f32[18,18,4]{2,1,0:T(8,128)}', space=vmem, size = 0x36000, scoped, tag = 'scratch operand']
  %s0 = inlined_call_operand.vmem [shape: f32[2,16,16,4], index: 0, kind: input, shape index: {}, may-alias: {0,1,2}]
  %s1 = inlined_call_operand.vmem [shape: f32[2,16,16,4], index: 1, kind: input, shape index: {}, may-alias: {0,1,2}]
  %s2 = inlined_call_operand.vmem [shape: f32[2,16,16,4], index: 2, kind: input, shape index: {}, may-alias: {0,1,2}]
  %s3 = inlined_call_operand.vmem [shape: f32[36,8], index: 3, kind: input, shape index: {}]
  %s4 = inlined_call_operand.vmem [shape: f32[1,4], index: 4, kind: input, shape index: {}]
  %s5 = inlined_call_operand.vmem [shape: f32[1,4], index: 5, kind: input, shape index: {}]
  %s6 = inlined_call_operand.vmem [shape: f32[2,16,16,8], index: 6, kind: output, shape index: {0}]
  %s7 = inlined_call_operand.vmem [shape: f32[2,1,2,8], index: 7, kind: output, shape index: {1}]
  %8 = xla_tuple %s6, %s7
  %s9 = sld [smem:[#allocation0]]
  $region81: #{conv_layer_forward.3} parent=0
    _
  %s11 = ssub.s32 1, %s9
  %s12 = scalar_select 0, %s11, %s9
  loop: start=0, step=1, limit=4
  $region2: #{conv_layer_forward.3} parent=0 // loop_pre_header
    _
  $region3: #{conv_layer_forward.3} parent=0 // loop_header
    %s14 = sphi 0, %s18
    %p15 = scmp.ge.s32.totalorder %s14, 4
    %s21 = sphi 0, %s33
    %s22 = sphi 0, %s29
    %s23 = sphi 0, %s21
    %s24 = sphi 0, %s22
    %s25 = sphi 0, %s23
    %s26 = sphi 0, %s24
    %s38 = sphi 0, %s40
    %s41 = sphi 0, %s38
    %s42 = sphi 0, %s41
    %s58 = sphi 0, %s42
    %s74 = sphi 0, %s76
    %s77 = sphi 0, %s74
    %s78 = sphi 0, %s77
    %s94 = sphi 0, %s78
    %s110 = sphi 0, %s112
    %s113 = sphi 0, %s110
    %s114 = sphi 0, %s113
    %s130 = sphi 0, %s114
    %s134 = sphi 0, %s134
    %s136 = sphi 0, %s134
    %s137 = sphi 0, %s136
    %s151 = sphi 0, %s137
    %s155 = sphi 0, %s155
    %s157 = sphi 0, %s155
    %s158 = sphi 0, %s157
    %s172 = sphi 0, %s158
    %s176 = sphi 0, %s176
    %s178 = sphi 0, %s176
    %s179 = sphi 0, %s178
    %s193 = sphi 0, %s179
    %s201 = sphi 0, %s203
    %s204 = sphi 0, %s201
    %s205 = sphi 0, %s204
    %s221 = sphi 0, %s205
    %s229 = sphi 0, %s231
    %s232 = sphi 0, %s229
    %s233 = sphi 0, %s232
    %s249 = sphi 0, %s233
  $region4: #{conv_layer_forward.3} parent=0 // loop_header_branch
    %17 = sbr.rel (%p15) target = $region8
  $region5: #{conv_layer_forward.3} parent=0 // loop_body
    %s19 = ssub.s32 %s14, 1
    %s20 = ssub.s32 %s14, 2
    %s27 = sadd.s32 1, %s22
    %p28 = scmp.ge.s32.totalorder %s27, 1
    %s29 = scalar_select %p28, 0, %s27
    %s30 = sadd.s32 1, %s21
    %s31 = scalar_select %p28, %s30, %s21
    %p32 = scmp.ge.s32.totalorder %s31, 2
    %s33 = scalar_select %p32, 0, %s31
    %s34 = ssub.s32 %s21, %s33
    %s35 = ssub.s32 %s22, %s29
    %s36 = sor.u32 %s34, %s35
    %p37 = scmp.eq.s32.totalorder %s36, 0
    %s39 = sadd.s32 %s38, 1
    %s40 = scalar_select %p37, %s38, %s39
    %p43 = pneg %p37
    %p44 = scmp.eq.s32.totalorder %s14, 1
    %p45 = por %p43, %p44
    %p46 = scmp.ne.s32.totalorder %s38, %s41
    %p47 = scmp.eq.s32.totalorder %s14, 0
    %p48 = por %p46, %p47
    %p49 = scmp.ne.s32.totalorder %s38, %s41
    %p50 = scmp.eq.s32.totalorder %s19, 1
    %p51 = por %p49, %p50
    %p52 = scmp.ne.s32.totalorder %s41, %s42
    %p53 = scmp.eq.s32.totalorder %s19, 0
    %p54 = por %p52, %p53
    %p55 = scmp.ne.s32.totalorder %s41, %s42
    %p56 = scmp.eq.s32.totalorder %s20, 1
    %p57 = por %p55, %p56
    %p59 = scmp.ne.s32.totalorder %s42, %s58
    %p60 = scmp.eq.s32.totalorder %s20, 0
    %p61 = por %p59, %p60
    %s62 = smul.u32 %s22, 16
    %s63 = ssub.s32 %s62, 1
    %p64 = scmp.gt.s32.totalorder %s63, 0
    %s65 = scalar_select %p64, %s63, 0
    %s66 = smul.u32 %s29, 16
    %s67 = ssub.s32 %s66, 1
    %p68 = scmp.gt.s32.totalorder %s67, 0
    %s69 = scalar_select %p68, %s67, 0
    %s70 = ssub.s32 %s21, %s33
    %s71 = ssub.s32 %s65, %s69
    %s72 = sor.u32 %s70, %s71
    %p73 = scmp.eq.s32.totalorder %s72, 0
    %s75 = sadd.s32 %s74, 1
    %s76 = scalar_select %p73, %s74, %s75
    %p79 = pneg %p73
    %p80 = scmp.eq.s32.totalorder %s14, 1
    %p81 = por %p79, %p80
    %p82 = scmp.ne.s32.totalorder %s74, %s77
    %p83 = scmp.eq.s32.totalorder %s14, 0
    %p84 = por %p82, %p83
    %p85 = scmp.ne.s32.totalorder %s74, %s77
    %p86 = scmp.eq.s32.totalorder %s19, 1
    %p87 = por %p85, %p86
    %p88 = scmp.ne.s32.totalorder %s77, %s78
    %p89 = scmp.eq.s32.totalorder %s19, 0
    %p90 = por %p88, %p89
    %p91 = scmp.ne.s32.totalorder %s77, %s78
    %p92 = scmp.eq.s32.totalorder %s20, 1
    %p93 = por %p91, %p92
    %p95 = scmp.ne.s32.totalorder %s78, %s94
    %p96 = scmp.eq.s32.totalorder %s20, 0
    %p97 = por %p95, %p96
    %s98 = sadd.s32 %s22, 1
    %s99 = smul.u32 %s98, 16
    %p100 = scmp.lt.s32.totalorder %s99, 15
    %s101 = scalar_select %p100, %s99, 15
    %s102 = sadd.s32 %s29, 1
    %s103 = smul.u32 %s102, 16
    %p104 = scmp.lt.s32.totalorder %s103, 15
    %s105 = scalar_select %p104, %s103, 15
    %s106 = ssub.s32 %s21, %s33
    %s107 = ssub.s32 %s101, %s105
    %s108 = sor.u32 %s106, %s107
    %p109 = scmp.eq.s32.totalorder %s108, 0
    %s111 = sadd.s32 %s110, 1
    %s112 = scalar_select %p109, %s110, %s111
    %p115 = pneg %p109
    %p116 = scmp.eq.s32.totalorder %s14, 1
    %p117 = por %p115, %p116
    %p118 = scmp.ne.s32.totalorder %s110, %s113
    %p119 = scmp.eq.s32.totalorder %s14, 0
    %p120 = por %p118, %p119
    %p121 = scmp.ne.s32.totalorder %s110, %s113
    %p122 = scmp.eq.s32.totalorder %s19, 1
    %p123 = por %p121, %p122
    %p124 = scmp.ne.s32.totalorder %s113, %s114
    %p125 = scmp.eq.s32.totalorder %s19, 0
    %p126 = por %p124, %p125
    %p127 = scmp.ne.s32.totalorder %s113, %s114
    %p128 = scmp.eq.s32.totalorder %s20, 1
    %p129 = por %p127, %p128
    %p131 = scmp.ne.s32.totalorder %s114, %s130
    %p132 = scmp.eq.s32.totalorder %s20, 0
    %p133 = por %p131, %p132
    %s135 = sadd.s32 %s134, 1
    %p138 = scmp.eq.s32.totalorder %s14, 1
    %p139 = scmp.ne.s32.totalorder %s134, %s136
    %p140 = scmp.eq.s32.totalorder %s14, 0
    %p141 = por %p139, %p140
    %p142 = scmp.ne.s32.totalorder %s134, %s136
    %p143 = scmp.eq.s32.totalorder %s19, 1
    %p144 = por %p142, %p143
    %p145 = scmp.ne.s32.totalorder %s136, %s137
    %p146 = scmp.eq.s32.totalorder %s19, 0
    %p147 = por %p145, %p146
    %p148 = scmp.ne.s32.totalorder %s136, %s137
    %p149 = scmp.eq.s32.totalorder %s20, 1
    %p150 = por %p148, %p149
    %p152 = scmp.ne.s32.totalorder %s137, %s151
    %p153 = scmp.eq.s32.totalorder %s20, 0
    %p154 = por %p152, %p153
    %s156 = sadd.s32 %s155, 1
    %p159 = scmp.eq.s32.totalorder %s14, 1
    %p160 = scmp.ne.s32.totalorder %s155, %s157
    %p161 = scmp.eq.s32.totalorder %s14, 0
    %p162 = por %p160, %p161
    %p163 = scmp.ne.s32.totalorder %s155, %s157
    %p164 = scmp.eq.s32.totalorder %s19, 1
    %p165 = por %p163, %p164
    %p166 = scmp.ne.s32.totalorder %s157, %s158
    %p167 = scmp.eq.s32.totalorder %s19, 0
    %p168 = por %p166, %p167
    %p169 = scmp.ne.s32.totalorder %s157, %s158
    %p170 = scmp.eq.s32.totalorder %s20, 1
    %p171 = por %p169, %p170
    %p173 = scmp.ne.s32.totalorder %s158, %s172
    %p174 = scmp.eq.s32.totalorder %s20, 0
    %p175 = por %p173, %p174
    %s177 = sadd.s32 %s176, 1
    %p180 = scmp.eq.s32.totalorder %s14, 1
    %p181 = scmp.ne.s32.totalorder %s176, %s178
    %p182 = scmp.eq.s32.totalorder %s14, 0
    %p183 = por %p181, %p182
    %p184 = scmp.ne.s32.totalorder %s176, %s178
    %p185 = scmp.eq.s32.totalorder %s19, 1
    %p186 = por %p184, %p185
    %p187 = scmp.ne.s32.totalorder %s178, %s179
    %p188 = scmp.eq.s32.totalorder %s19, 0
    %p189 = por %p187, %p188
    %p190 = scmp.ne.s32.totalorder %s178, %s179
    %p191 = scmp.eq.s32.totalorder %s20, 1
    %p192 = por %p190, %p191
    %p194 = scmp.ne.s32.totalorder %s179, %s193
    %p195 = scmp.eq.s32.totalorder %s20, 0
    %p196 = por %p194, %p195
    %s197 = ssub.s32 %s21, %s33
    %s198 = ssub.s32 %s22, %s29
    %s199 = sor.u32 %s197, %s198
    %p200 = scmp.eq.s32.totalorder %s199, 0
    %s202 = sadd.s32 %s201, 1
    %s203 = scalar_select %p200, %s201, %s202
    %p206 = pneg %p200
    %p207 = scmp.eq.s32.totalorder %s14, 1
    %p208 = por %p206, %p207
    %p209 = scmp.ne.s32.totalorder %s201, %s204
    %p210 = scmp.eq.s32.totalorder %s14, 0
    %p211 = por %p209, %p210
    %p212 = scmp.ne.s32.totalorder %s201, %s204
    %p213 = scmp.eq.s32.totalorder %s19, 1
    %p214 = por %p212, %p213
    %p215 = scmp.ne.s32.totalorder %s204, %s205
    %p216 = scmp.eq.s32.totalorder %s19, 0
    %p217 = por %p215, %p216
    %p218 = scmp.ne.s32.totalorder %s204, %s205
    %p219 = scmp.eq.s32.totalorder %s20, 1
    %p220 = por %p218, %p219
    %p222 = scmp.ne.s32.totalorder %s205, %s221
    %p223 = scmp.eq.s32.totalorder %s20, 0
    %p224 = por %p222, %p223
    %s225 = ssub.s32 %s21, %s33
    %s226 = ssub.s32 %s22, %s29
    %s227 = sor.u32 %s225, %s226
    %p228 = scmp.eq.s32.totalorder %s227, 0
    %s230 = sadd.s32 %s229, 1
    %s231 = scalar_select %p228, %s229, %s230
    %p234 = pneg %p228
    %p235 = scmp.eq.s32.totalorder %s14, 1
    %p236 = por %p234, %p235
    %p237 = scmp.ne.s32.totalorder %s229, %s232
    %p238 = scmp.eq.s32.totalorder %s14, 0
    %p239 = por %p237, %p238
    %p240 = scmp.ne.s32.totalorder %s229, %s232
    %p241 = scmp.eq.s32.totalorder %s19, 1
    %p242 = por %p240, %p241
    %p243 = scmp.ne.s32.totalorder %s232, %s233
    %p244 = scmp.eq.s32.totalorder %s19, 0
    %p245 = por %p243, %p244
    %p246 = scmp.ne.s32.totalorder %s232, %s233
    %p247 = scmp.eq.s32.totalorder %s20, 1
    %p248 = por %p246, %p247
    %p250 = scmp.ne.s32.totalorder %s233, %s249
    %p251 = scmp.eq.s32.totalorder %s20, 0
    %p252 = por %p250, %p251
    %p253 = scmp.le.s32.totalorder 1, %s14
    %p254 = scmp.lt.s32.totalorder %s14, 3
    %p255 = pnand %p253, %p254
    %p256 = pneg %p255
    // Predicated region
    $region9: #{conv_layer_forward.3} parent=5 // pred_check
      _
    $region10: #{conv_layer_forward.3} parent=5 // pred_check_branch
      %258 = sbr.rel (%p255) target = $region12
    $region11: #{conv_layer_forward.3} parent=5 // pred_region
      %s259 = ssub.s32 %s14, 1
      // Predicated region
      $region13: #{conv_layer_forward.3} parent=11 // pred_check
        %p260 = pneg %p147
      $region14: #{conv_layer_forward.3} parent=11 // pred_check_branch
        %262 = sbr.rel (%p260) target = $region16
      $region15: #{conv_layer_forward.3} parent=11 // pred_region
        _
      $region16: #{conv_layer_forward.3} parent=11 // pred_fallthru
        _
      // Predicated region
      $region17: #{conv_layer_forward.3} parent=11 // pred_check
        %p263 = pneg %p168
      $region18: #{conv_layer_forward.3} parent=11 // pred_check_branch
        %265 = sbr.rel (%p263) target = $region20
      $region19: #{conv_layer_forward.3} parent=11 // pred_region
        _
      $region20: #{conv_layer_forward.3} parent=11 // pred_fallthru
        _
      // Predicated region
      $region21: #{conv_layer_forward.3} parent=11 // pred_check
        %p266 = pneg %p189
      $region22: #{conv_layer_forward.3} parent=11 // pred_check_branch
        %268 = sbr.rel (%p266) target = $region24
      $region23: #{conv_layer_forward.3} parent=11 // pred_region
        _
      $region24: #{conv_layer_forward.3} parent=11 // pred_fallthru
        _
    $region12: #{conv_layer_forward.3} parent=5 // pred_fallthru
      _
    %p269 = scmp.lt.s32.totalorder %s14, 2
    // Predicated region
    $region25: #{conv_layer_forward.3} parent=5 // pred_check
      %p270 = pneg %p269
    $region26: #{conv_layer_forward.3} parent=5 // pred_check_branch
      %272 = sbr.rel (%p270) target = $region28
    $region27: #{conv_layer_forward.3} parent=5 // pred_region
      // Predicated region
      $region29: #{conv_layer_forward.3} parent=27 // pred_check
        %p273 = pneg %p48
      $region30: #{conv_layer_forward.3} parent=27 // pred_check_branch
        %275 = sbr.rel (%p273) target = $region32
      $region31: #{conv_layer_forward.3} parent=27 // pred_region
        %s276 = smul.u32 16, %s22
        %p277 = scmp.lt.s32.totalorder %s21, 1
        %s278 = scalar_select %p277, %s21, 1
        %p279 = scmp.lt.s32.totalorder %s276, 15
        %s280 = scalar_select %p279, %s276, 15
        %s281 = smul.addr %s280, 2
        %s282 = smul.addr %s278, 32
        %s283 = sadd.s32 %s281, %s282
        %s284 = smul.addr %s283, 8
        %s285 = scalar_lea.vmem %s0, %s284
        %s286 = smul.u32 16, %s22
      $region32: #{conv_layer_forward.3} parent=27 // pred_fallthru
        _
      // Predicated region
      $region33: #{conv_layer_forward.3} parent=27 // pred_check
        %p287 = pneg %p84
      $region34: #{conv_layer_forward.3} parent=27 // pred_check_branch
        %289 = sbr.rel (%p287) target = $region36
      $region35: #{conv_layer_forward.3} parent=27 // pred_region
        %s290 = smul.u32 %s22, 16
        %s291 = ssub.s32 %s290, 1
        %p292 = scmp.gt.s32.totalorder %s291, 0
        %s293 = scalar_select %p292, %s291, 0
        %p294 = scmp.lt.s32.totalorder %s21, 1
        %s295 = scalar_select %p294, %s21, 1
        %p296 = scmp.lt.s32.totalorder %s293, 15
        %s297 = scalar_select %p296, %s293, 15
        %s298 = smul.addr %s297, 2
        %s299 = smul.addr %s295, 32
        %s300 = sadd.s32 %s298, %s299
        %s301 = smul.addr %s300, 8
        %s302 = scalar_lea.vmem %s1, %s301
        %s303 = smul.u32 %s22, 16
        %s304 = ssub.s32 %s303, 1
        %p305 = scmp.gt.s32.totalorder %s304, 0
        %s306 = scalar_select %p305, %s304, 0
      $region36: #{conv_layer_forward.3} parent=27 // pred_fallthru
        _
      // Predicated region
      $region37: #{conv_layer_forward.3} parent=27 // pred_check
        %p307 = pneg %p120
      $region38: #{conv_layer_forward.3} parent=27 // pred_check_branch
        %309 = sbr.rel (%p307) target = $region40
      $region39: #{conv_layer_forward.3} parent=27 // pred_region
        %s310 = sadd.s32 %s22, 1
        %s311 = smul.u32 %s310, 16
        %p312 = scmp.lt.s32.totalorder %s311, 15
        %s313 = scalar_select %p312, %s311, 15
        %p314 = scmp.lt.s32.totalorder %s21, 1
        %s315 = scalar_select %p314, %s21, 1
        %p316 = scmp.lt.s32.totalorder %s313, 15
        %s317 = scalar_select %p316, %s313, 15
        %s318 = smul.addr %s317, 2
        %s319 = smul.addr %s315, 32
        %s320 = sadd.s32 %s318, %s319
        %s321 = smul.addr %s320, 8
        %s322 = scalar_lea.vmem %s2, %s321
        %s323 = sadd.s32 %s22, 1
        %s324 = smul.u32 %s323, 16
        %p325 = scmp.lt.s32.totalorder %s324, 15
        %s326 = scalar_select %p325, %s324, 15
      $region40: #{conv_layer_forward.3} parent=27 // pred_fallthru
        _
    $region28: #{conv_layer_forward.3} parent=5 // pred_fallthru
      _
    %p327 = scmp.le.s32.totalorder 1, %s14
    %p328 = scmp.lt.s32.totalorder %s14, 3
    %p329 = pnand %p327, %p328
    %p330 = pneg %p329
    // Predicated region
    $region41: #{conv_layer_forward.3} parent=5 // pred_check
      _
    $region42: #{conv_layer_forward.3} parent=5 // pred_check_branch
      %332 = sbr.rel (%p329) target = $region44
    $region43: #{conv_layer_forward.3} parent=5 // pred_region
      %s333 = ssub.s32 %s14, 1
      %s334 = smul.u32 16, %s24
      %p335 = scmp.lt.s32.totalorder %s23, 1
      %s336 = scalar_select %p335, %s23, 1
      %p337 = scmp.lt.s32.totalorder %s334, 15
      %s338 = scalar_select %p337, %s334, 15
      %s339 = smul.addr %s338, 2
      %s340 = smul.addr %s336, 32
      %s341 = sadd.s32 %s339, %s340
      %s342 = smul.addr %s341, 8
      %s343 = scalar_lea.vmem %s0, %s342
      %p344 = pneg %p54
      %p345 = pneg %p51
      %s346 = smul.u32 %s24, 16
      %s347 = ssub.s32 %s346, 1
      %p348 = scmp.gt.s32.totalorder %s347, 0
      %s349 = scalar_select %p348, %s347, 0
      %p350 = scmp.lt.s32.totalorder %s23, 1
      %s351 = scalar_select %p350, %s23, 1
      %p352 = scmp.lt.s32.totalorder %s349, 15
      %s353 = scalar_select %p352, %s349, 15
      %s354 = smul.addr %s353, 2
      %s355 = smul.addr %s351, 32
      %s356 = sadd.s32 %s354, %s355
      %s357 = smul.addr %s356, 8
      %s358 = scalar_lea.vmem %s1, %s357
      %p359 = pneg %p90
      %p360 = pneg %p87
      %s361 = sadd.s32 %s24, 1
      %s362 = smul.u32 %s361, 16
      %p363 = scmp.lt.s32.totalorder %s362, 15
      %s364 = scalar_select %p363, %s362, 15
      %p365 = scmp.lt.s32.totalorder %s23, 1
      %s366 = scalar_select %p365, %s23, 1
      %p367 = scmp.lt.s32.totalorder %s364, 15
      %s368 = scalar_select %p367, %s364, 15
      %s369 = smul.addr %s368, 2
      %s370 = smul.addr %s366, 32
      %s371 = sadd.s32 %s369, %s370
      %s372 = smul.addr %s371, 8
      %s373 = scalar_lea.vmem %s2, %s372
      %p374 = pneg %p126
      %p375 = pneg %p123
      %p376 = pneg %p147
      %p377 = pneg %p144
      %p378 = pneg %p168
      %p379 = pneg %p165
      %p380 = pneg %p189
      %p381 = pneg %p186
      %p382 = pneg %p217
      %p383 = pneg %p214
      %s384 = smul.u32 16, %s24
      %p385 = scmp.lt.s32.totalorder %s23, 1
      %s386 = scalar_select %p385, %s23, 1
      %p387 = scmp.lt.s32.totalorder %s384, 15
      %s388 = scalar_select %p387, %s384, 15
      %s389 = smul.addr %s388, 2
      %s390 = smul.addr %s386, 32
      %s391 = sadd.s32 %s389, %s390
      %s392 = smul.addr %s391, 8
      %s393 = scalar_lea.vmem %s6, %s392
      %p394 = pneg %p245
      %p395 = pneg %p242
      %p396 = scmp.lt.s32.totalorder %s23, 1
      %s397 = scalar_select %p396, %s23, 1
      %p398 = scmp.lt.s32.totalorder %s24, 0
      %s399 = scalar_select %p398, %s24, 0
      %s400 = sadd.s32 %s399, %s397
      %s401 = smul.addr %s400, 2
      %s402 = scalar_lea.vmem %s7, %s401
      %s403 = smul.u32 16, %s24
      %p404 = scmp.lt.s32.totalorder %s23, 1
      %s405 = scalar_select %p404, %s23, 1
      %p406 = scmp.lt.s32.totalorder %s403, 15
      %s407 = scalar_select %p406, %s403, 15
      %s408 = smul.addr %s407, 2
      %s409 = smul.addr %s405, 32
      %s410 = sadd.s32 %s408, %s409
      %s411 = smul.addr %s410, 8
      %s412 = scalar_lea.vmem %s0, %s411
      %s413 = smul.u32 16, %s24
      %s414 = smul.u32 %s24, 16
      %s415 = ssub.s32 %s414, 1
      %p416 = scmp.gt.s32.totalorder %s415, 0
      %s417 = scalar_select %p416, %s415, 0
      %p418 = scmp.lt.s32.totalorder %s23, 1
      %s419 = scalar_select %p418, %s23, 1
      %p420 = scmp.lt.s32.totalorder %s417, 15
      %s421 = scalar_select %p420, %s417, 15
      %s422 = smul.addr %s421, 2
      %s423 = smul.addr %s419, 32
      %s424 = sadd.s32 %s422, %s423
      %s425 = smul.addr %s424, 8
      %s426 = scalar_lea.vmem %s1, %s425
      %s427 = smul.u32 %s24, 16
      %s428 = ssub.s32 %s427, 1
      %p429 = scmp.gt.s32.totalorder %s428, 0
      %s430 = scalar_select %p429, %s428, 0
      %s431 = sadd.s32 %s24, 1
      %s432 = smul.u32 %s431, 16
      %p433 = scmp.lt.s32.totalorder %s432, 15
      %s434 = scalar_select %p433, %s432, 15
      %p435 = scmp.lt.s32.totalorder %s23, 1
      %s436 = scalar_select %p435, %s23, 1
      %p437 = scmp.lt.s32.totalorder %s434, 15
      %s438 = scalar_select %p437, %s434, 15
      %s439 = smul.addr %s438, 2
      %s440 = smul.addr %s436, 32
      %s441 = sadd.s32 %s439, %s440
      %s442 = smul.addr %s441, 8
      %s443 = scalar_lea.vmem %s2, %s442
      %s444 = sadd.s32 %s24, 1
      %s445 = smul.u32 %s444, 16
      %p446 = scmp.lt.s32.totalorder %s445, 15
      %s447 = scalar_select %p446, %s445, 15
      %s448 = smul.u32 16, %s24
      %p449 = scmp.lt.s32.totalorder %s23, 1
      %s450 = scalar_select %p449, %s23, 1
      %p451 = scmp.lt.s32.totalorder %s448, 15
      %s452 = scalar_select %p451, %s448, 15
      %s453 = smul.addr %s452, 2
      %s454 = smul.addr %s450, 32
      %s455 = sadd.s32 %s453, %s454
      %s456 = smul.addr %s455, 8
      %s457 = scalar_lea.vmem %s6, %s456
      %s458 = smul.u32 16, %s24
      %p459 = scmp.lt.s32.totalorder %s23, 1
      %s460 = scalar_select %p459, %s23, 1
      %p461 = scmp.lt.s32.totalorder %s24, 0
      %s462 = scalar_select %p461, %s24, 0
      %s463 = sadd.s32 %s462, %s460
      %s464 = smul.addr %s463, 2
      %s465 = scalar_lea.vmem %s7, %s464
      %vm466 = vcmask 24576
      %467 = vst.msk [vmem:[#allocation2] sm:$0x1] %vm466, 0.0
      %468 = vst.msk [vmem:[#allocation2 + $0x18] sm:$0x1] %vm466, 0.0
      %469 = vst.msk [vmem:[#allocation2 + $0x30] sm:$0x1] %vm466, 0.0
      %470 = vst.msk [vmem:[#allocation2 + $0x48] sm:$0x1] %vm466, 0.0
      %471 = vst.msk [vmem:[#allocation2 + $0x60] sm:$0x1] %vm466, 0.0
      %472 = vst.msk [vmem:[#allocation2 + $0x78] sm:$0x1] %vm466, 0.0
      %473 = vst.msk [vmem:[#allocation2 + $0x90] sm:$0x1] %vm466, 0.0
      %474 = vst.msk [vmem:[#allocation2 + $0xa8] sm:$0x1] %vm466, 0.0
      %475 = vst.msk [vmem:[#allocation2 + $0xc0] sm:$0x1] %vm466, 0.0
      %476 = vst.msk [vmem:[#allocation2 + $0xd8] sm:$0x1] %vm466, 0.0
      %477 = vst.msk [vmem:[#allocation2 + $0xf0] sm:$0x1] %vm466, 0.0
      %478 = vst.msk [vmem:[#allocation2 + $0x108] sm:$0x1] %vm466, 0.0
      %479 = vst.msk [vmem:[#allocation2 + $0x120] sm:$0x1] %vm466, 0.0
      %480 = vst.msk [vmem:[#allocation2 + $0x138] sm:$0x1] %vm466, 0.0
      %481 = vst.msk [vmem:[#allocation2 + $0x150] sm:$0x1] %vm466, 0.0
      %482 = vst.msk [vmem:[#allocation2 + $0x168] sm:$0x1] %vm466, 0.0
      %483 = vst.msk [vmem:[#allocation2 + $0x180] sm:$0x1] %vm466, 0.0
      %484 = vst.msk [vmem:[#allocation2 + $0x198] sm:$0x1] %vm466, 0.0
      %485 = vst.msk [vmem:[#allocation2 + $0x11] sm:$0x1] %vm466, 0.0
      %486 = vst.msk [vmem:[#allocation2 + $0x29] sm:$0x1] %vm466, 0.0
      %487 = vst.msk [vmem:[#allocation2 + $0x41] sm:$0x1] %vm466, 0.0
      %488 = vst.msk [vmem:[#allocation2 + $0x59] sm:$0x1] %vm466, 0.0
      %489 = vst.msk [vmem:[#allocation2 + $0x71] sm:$0x1] %vm466, 0.0
      %490 = vst.msk [vmem:[#allocation2 + $0x89] sm:$0x1] %vm466, 0.0
      %491 = vst.msk [vmem:[#allocation2 + $0xa1] sm:$0x1] %vm466, 0.0
      %492 = vst.msk [vmem:[#allocation2 + $0xb9] sm:$0x1] %vm466, 0.0
      %493 = vst.msk [vmem:[#allocation2 + $0xd1] sm:$0x1] %vm466, 0.0
      %494 = vst.msk [vmem:[#allocation2 + $0xe9] sm:$0x1] %vm466, 0.0
      %495 = vst.msk [vmem:[#allocation2 + $0x101] sm:$0x1] %vm466, 0.0
      %496 = vst.msk [vmem:[#allocation2 + $0x119] sm:$0x1] %vm466, 0.0
      %497 = vst.msk [vmem:[#allocation2 + $0x131] sm:$0x1] %vm466, 0.0
      %498 = vst.msk [vmem:[#allocation2 + $0x149] sm:$0x1] %vm466, 0.0
      %499 = vst.msk [vmem:[#allocation2 + $0x161] sm:$0x1] %vm466, 0.0
      %500 = vst.msk [vmem:[#allocation2 + $0x179] sm:$0x1] %vm466, 0.0
      %501 = vst.msk [vmem:[#allocation2 + $0x191] sm:$0x1] %vm466, 0.0
      %502 = vst.msk [vmem:[#allocation2 + $0x1a9] sm:$0x1] %vm466, 0.0
      %v503 = vld [vmem:[%s412] sm:$0xff]
      %v504 = vld [vmem:[%s412 + $0x8] sm:$0xff]
      %v505 = vld [vmem:[%s412 + $0x10] sm:$0xff]
      %v506 = vld [vmem:[%s412 + $0x18] sm:$0xff]
      %v507 = vld [vmem:[%s412 + $0x20] sm:$0xff]
      %v508 = vld [vmem:[%s412 + $0x28] sm:$0xff]
      %v509 = vld [vmem:[%s412 + $0x30] sm:$0xff]
      %v510 = vld [vmem:[%s412 + $0x38] sm:$0xff]
      %v511 = vld [vmem:[%s412 + $0x40] sm:$0xff]
      %v512 = vld [vmem:[%s412 + $0x48] sm:$0xff]
      %v513 = vld [vmem:[%s412 + $0x50] sm:$0xff]
      %v514 = vld [vmem:[%s412 + $0x58] sm:$0xff]
      %v515 = vld [vmem:[%s412 + $0x60] sm:$0xff]
      %v516 = vld [vmem:[%s412 + $0x68] sm:$0xff]
      %v517 = vld [vmem:[%s412 + $0x70] sm:$0xff]
      %v518 = vld [vmem:[%s412 + $0x78] sm:$0xff]
      %v519 = vld [vmem:[%s412 + $0x80] sm:$0xff]
      %v520 = vld [vmem:[%s412 + $0x88] sm:$0xff]
      %v521 = vld [vmem:[%s412 + $0x90] sm:$0xff]
      %v522 = vld [vmem:[%s412 + $0x98] sm:$0xff]
      %v523 = vld [vmem:[%s412 + $0xa0] sm:$0xff]
      %v524 = vld [vmem:[%s412 + $0xa8] sm:$0xff]
      %v525 = vld [vmem:[%s412 + $0xb0] sm:$0xff]
      %v526 = vld [vmem:[%s412 + $0xb8] sm:$0xff]
      %v527 = vld [vmem:[%s412 + $0xc0] sm:$0xff]
      %v528 = vld [vmem:[%s412 + $0xc8] sm:$0xff]
      %v529 = vld [vmem:[%s412 + $0xd0] sm:$0xff]
      %v530 = vld [vmem:[%s412 + $0xd8] sm:$0xff]
      %v531 = vld [vmem:[%s412 + $0xe0] sm:$0xff]
      %v532 = vld [vmem:[%s412 + $0xe8] sm:$0xff]
      %v533 = vld [vmem:[%s412 + $0xf0] sm:$0xff]
      %v534 = vld [vmem:[%s412 + $0xf8] sm:$0xff]
      %s535 = scalar_lea.vmem [#allocation2], 24
      %vm536 = vcmask 31744
      %537 = vst.msk [vmem:[%s535 + $0x1] sm:$0xff] %vm536, %v503
      %538 = vst.msk [vmem:[%s535 + $0x9] sm:$0xff] %vm536, %v504
      %539 = vst.msk [vmem:[%s535 + $0x19] sm:$0xff] %vm536, %v505
      %540 = vst.msk [vmem:[%s535 + $0x21] sm:$0xff] %vm536, %v506
      %541 = vst.msk [vmem:[%s535 + $0x31] sm:$0xff] %vm536, %v507
      %542 = vst.msk [vmem:[%s535 + $0x39] sm:$0xff] %vm536, %v508
      %543 = vst.msk [vmem:[%s535 + $0x49] sm:$0xff] %vm536, %v509
      %544 = vst.msk [vmem:[%s535 + $0x51] sm:$0xff] %vm536, %v510
      %545 = vst.msk [vmem:[%s535 + $0x61] sm:$0xff] %vm536, %v511
      %546 = vst.msk [vmem:[%s535 + $0x69] sm:$0xff] %vm536, %v512
      %547 = vst.msk [vmem:[%s535 + $0x79] sm:$0xff] %vm536, %v513
      %548 = vst.msk [vmem:[%s535 + $0x81] sm:$0xff] %vm536, %v514
      %549 = vst.msk [vmem:[%s535 + $0x91] sm:$0xff] %vm536, %v515
      %550 = vst.msk [vmem:[%s535 + $0x99] sm:$0xff] %vm536, %v516
      %551 = vst.msk [vmem:[%s535 + $0xa9] sm:$0xff] %vm536, %v517
      %552 = vst.msk [vmem:[%s535 + $0xb1] sm:$0xff] %vm536, %v518
      %553 = vst.msk [vmem:[%s535 + $0xc1] sm:$0xff] %vm536, %v519
      %554 = vst.msk [vmem:[%s535 + $0xc9] sm:$0xff] %vm536, %v520
      %555 = vst.msk [vmem:[%s535 + $0xd9] sm:$0xff] %vm536, %v521
      %556 = vst.msk [vmem:[%s535 + $0xe1] sm:$0xff] %vm536, %v522
      %557 = vst.msk [vmem:[%s535 + $0xf1] sm:$0xff] %vm536, %v523
      %558 = vst.msk [vmem:[%s535 + $0xf9] sm:$0xff] %vm536, %v524
      %559 = vst.msk [vmem:[%s535 + $0x109] sm:$0xff] %vm536, %v525
      %560 = vst.msk [vmem:[%s535 + $0x111] sm:$0xff] %vm536, %v526
      %561 = vst.msk [vmem:[%s535 + $0x121] sm:$0xff] %vm536, %v527
      %562 = vst.msk [vmem:[%s535 + $0x129] sm:$0xff] %vm536, %v528
      %563 = vst.msk [vmem:[%s535 + $0x139] sm:$0xff] %vm536, %v529
      %564 = vst.msk [vmem:[%s535 + $0x141] sm:$0xff] %vm536, %v530
      %565 = vst.msk [vmem:[%s535 + $0x151] sm:$0xff] %vm536, %v531
      %566 = vst.msk [vmem:[%s535 + $0x159] sm:$0xff] %vm536, %v532
      %567 = vst.msk [vmem:[%s535 + $0x169] sm:$0xff] %vm536, %v533
      %568 = vst.msk [vmem:[%s535 + $0x171] sm:$0xff] %vm536, %v534
      %p569 = scmp.eq.s32.totalorder %s24, 0
      // Predicated region
      $region45: #{conv_layer_forward.3} parent=43 // pred_check
        %p570 = pneg %p569
      $region46: #{conv_layer_forward.3} parent=43 // pred_check_branch
        %572 = sbr.rel (%p570) target = $region48
      $region47: #{conv_layer_forward.3} parent=43 // pred_region
        %573 = vst.msk [vmem:[#allocation2 + $0x1] sm:$0xff] %vm536, 0.0
        %574 = vst.msk [vmem:[#allocation2 + $0x9] sm:$0xff] %vm536, 0.0
      $region48: #{conv_layer_forward.3} parent=43 // pred_fallthru
        _
      %p575 = scmp.gt.s32.totalorder %s24, 0
      // Predicated region
      $region49: #{conv_layer_forward.3} parent=43 // pred_check
        %p576 = pneg %p575
      $region50: #{conv_layer_forward.3} parent=43 // pred_check_branch
        %578 = sbr.rel (%p576) target = $region52
      $region51: #{conv_layer_forward.3} parent=43 // pred_region
        %v579 = vld [vmem:[%s426] sm:$0xff]
        %v580 = vld [vmem:[%s426 + $0x8] sm:$0xff]
        %581 = vst.msk [vmem:[#allocation2 + $0x1] sm:$0xff] %vm536, %v579
        %582 = vst.msk [vmem:[#allocation2 + $0x9] sm:$0xff] %vm536, %v580
      $region52: #{conv_layer_forward.3} parent=43 // pred_fallthru
        _
      // Predicated region
      $region53: #{conv_layer_forward.3} parent=43 // pred_check
        %p583 = pneg %p569
      $region54: #{conv_layer_forward.3} parent=43 // pred_check_branch
        %585 = sbr.rel (%p583) target = $region56
      $region55: #{conv_layer_forward.3} parent=43 // pred_region
        %s586 = scalar_lea.vmem [#allocation2], 408
        %587 = vst.msk [vmem:[%s586 + $0x1] sm:$0xff] %vm536, 0.0
        %588 = vst.msk [vmem:[%s586 + $0x9] sm:$0xff] %vm536, 0.0
      $region56: #{conv_layer_forward.3} parent=43 // pred_fallthru
        _
      %p589 = scmp.lt.s32.totalorder %s24, 0
      // Predicated region
      $region57: #{conv_layer_forward.3} parent=43 // pred_check
        %p590 = pneg %p589
      $region58: #{conv_layer_forward.3} parent=43 // pred_check_branch
        %592 = sbr.rel (%p590) target = $region60
      $region59: #{conv_layer_forward.3} parent=43 // pred_region
        %v593 = vld [vmem:[%s443] sm:$0xff]
        %v594 = vld [vmem:[%s443 + $0x8] sm:$0xff]
        %s595 = scalar_lea.vmem [#allocation2], 408
        %596 = vst.msk [vmem:[%s595 + $0x1] sm:$0xff] %vm536, %v593
        %597 = vst.msk [vmem:[%s595 + $0x9] sm:$0xff] %vm536, %v594
      $region60: #{conv_layer_forward.3} parent=43 // pred_fallthru
        _
      %v598 = vld [vmem:[#allocation2] sm:$0xff]
      %v599 = vld [vmem:[#allocation2 + $0x8] sm:$0xff]
      %v600 = vld [vmem:[#allocation2 + $0x10] sm:$0x3]
      %v601 = vld [vmem:[#allocation2 + $0x18] sm:$0xff]
      %v602 = vld [vmem:[#allocation2 + $0x20] sm:$0xff]
      %v603 = vld [vmem:[#allocation2 + $0x28] sm:$0x3]
      %v604 = vld [vmem:[#allocation2 + $0x30] sm:$0xff]
      %v605 = vld [vmem:[#allocation2 + $0x38] sm:$0xff]
      %v606 = vld [vmem:[#allocation2 + $0x40] sm:$0x3]
      %v607 = vld [vmem:[#allocation2 + $0x48] sm:$0xff]
      %v608 = vld [vmem:[#allocation2 + $0x50] sm:$0xff]
      %v609 = vld [vmem:[#allocation2 + $0x58] sm:$0x3]
      %v610 = vld [vmem:[#allocation2 + $0x60] sm:$0xff]
      %v611 = vld [vmem:[#allocation2 + $0x68] sm:$0xff]
      %v612 = vld [vmem:[#allocation2 + $0x70] sm:$0x3]
      %v613 = vld [vmem:[#allocation2 + $0x78] sm:$0xff]
      %v614 = vld [vmem:[#allocation2 + $0x80] sm:$0xff]
      %v615 = vld [vmem:[#allocation2 + $0x88] sm:$0x3]
      %v616 = vld [vmem:[#allocation2 + $0x90] sm:$0xff]
      %v617 = vld [vmem:[#allocation2 + $0x98] sm:$0xff]
      %v618 = vld [vmem:[#allocation2 + $0xa0] sm:$0x3]
      %v619 = vld [vmem:[#allocation2 + $0xa8] sm:$0xff]
      %v620 = vld [vmem:[#allocation2 + $0xb0] sm:$0xff]
      %v621 = vld [vmem:[#allocation2 + $0xb8] sm:$0x3]
      %v622 = vld [vmem:[#allocation2 + $0xc0] sm:$0xff]
      %v623 = vld [vmem:[#allocation2 + $0xc8] sm:$0xff]
      %v624 = vld [vmem:[#allocation2 + $0xd0] sm:$0x3]
      %v625 = vld [vmem:[#allocation2 + $0xd8] sm:$0xff]
      %v626 = vld [vmem:[#allocation2 + $0xe0] sm:$0xff]
      %v627 = vld [vmem:[#allocation2 + $0xe8] sm:$0x3]
      %v628 = vld [vmem:[#allocation2 + $0xf0] sm:$0xff]
      %v629 = vld [vmem:[#allocation2 + $0xf8] sm:$0xff]
      %v630 = vld [vmem:[#allocation2 + $0x100] sm:$0x3]
      %v631 = vld [vmem:[#allocation2 + $0x108] sm:$0xff]
      %v632 = vld [vmem:[#allocation2 + $0x110] sm:$0xff]
      %v633 = vld [vmem:[#allocation2 + $0x118] sm:$0x3]
      %v634 = vld [vmem:[#allocation2 + $0x120] sm:$0xff]
      %v635 = vld [vmem:[#allocation2 + $0x128] sm:$0xff]
      %v636 = vld [vmem:[#allocation2 + $0x130] sm:$0x3]
      %v637 = vld [vmem:[#allocation2 + $0x138] sm:$0xff]
      %v638 = vld [vmem:[#allocation2 + $0x140] sm:$0xff]
      %v639 = vld [vmem:[#allocation2 + $0x148] sm:$0x3]
      %v640 = vld [vmem:[#allocation2 + $0x150] sm:$0xff]
      %v641 = vld [vmem:[#allocation2 + $0x158] sm:$0xff]
      %v642 = vld [vmem:[#allocation2 + $0x160] sm:$0x3]
      %v643 = vld [vmem:[#allocation2 + $0x168] sm:$0xff]
      %v644 = vld [vmem:[#allocation2 + $0x170] sm:$0xff]
      %v645 = vld [vmem:[#allocation2 + $0x178] sm:$0x3]
      %v646 = vld [vmem:[#allocation2 + $0x180] sm:$0xff]
      %v647 = vld [vmem:[#allocation2 + $0x188] sm:$0xff]
      %v648 = vld [vmem:[#allocation2 + $0x190] sm:$0x3]
      %v649 = vld [vmem:[#allocation2 + $0x198] sm:$0xff]
      %v650 = vld [vmem:[#allocation2 + $0x1a0] sm:$0xff]
      %v651 = vld [vmem:[#allocation2 + $0x1a8] sm:$0x3]
      %vm700 = vcmask 1046528
      %v701 = vrot.slane %v598, 1
      %v702 = vrot.slane %v599, 1
      %v703 = vsel %vm700, %v701, %v702
      %v704 = vrot.slane %v600, 1
      %v705 = vsel %vm700, %v702, %v704
      %v706 = vrot.slane %v601, 1
      %v707 = vrot.slane %v602, 1
      %v708 = vsel %vm700, %v706, %v707
      %v709 = vrot.slane %v603, 1
      %v710 = vsel %vm700, %v707, %v709
      %v711 = vrot.slane %v604, 1
      %v712 = vrot.slane %v605, 1
      %v713 = vsel %vm700, %v711, %v712
      %v714 = vrot.slane %v606, 1
      %v715 = vsel %vm700, %v712, %v714
      %v716 = vrot.slane %v607, 1
      %v717 = vrot.slane %v608, 1
      %v718 = vsel %vm700, %v716, %v717
      %v719 = vrot.slane %v609, 1
      %v720 = vsel %vm700, %v717, %v719
      %v721 = vrot.slane %v610, 1
      %v722 = vrot.slane %v611, 1
      %v723 = vsel %vm700, %v721, %v722
      %v724 = vrot.slane %v612, 1
      %v725 = vsel %vm700, %v722, %v724
      %v726 = vrot.slane %v613, 1
      %v727 = vrot.slane %v614, 1
      %v728 = vsel %vm700, %v726, %v727
      %v729 = vrot.slane %v615, 1
      %v730 = vsel %vm700, %v727, %v729
      %v731 = vrot.slane %v616, 1
      %v732 = vrot.slane %v617, 1
      %v733 = vsel %vm700, %v731, %v732
      %v734 = vrot.slane %v618, 1
      %v735 = vsel %vm700, %v732, %v734
      %v736 = vrot.slane %v619, 1
      %v737 = vrot.slane %v620, 1
      %v738 = vsel %vm700, %v736, %v737
      %v739 = vrot.slane %v621, 1
      %v740 = vsel %vm700, %v737, %v739
      %v741 = vrot.slane %v622, 1
      %v742 = vrot.slane %v623, 1
      %v743 = vsel %vm700, %v741, %v742
      %v744 = vrot.slane %v624, 1
      %v745 = vsel %vm700, %v742, %v744
      %v746 = vrot.slane %v625, 1
      %v747 = vrot.slane %v626, 1
      %v748 = vsel %vm700, %v746, %v747
      %v749 = vrot.slane %v627, 1
      %v750 = vsel %vm700, %v747, %v749
      %v751 = vrot.slane %v628, 1
      %v752 = vrot.slane %v629, 1
      %v753 = vsel %vm700, %v751, %v752
      %v754 = vrot.slane %v630, 1
      %v755 = vsel %vm700, %v752, %v754
      %v756 = vrot.slane %v631, 1
      %v757 = vrot.slane %v632, 1
      %v758 = vsel %vm700, %v756, %v757
      %v759 = vrot.slane %v633, 1
      %v760 = vsel %vm700, %v757, %v759
      %v761 = vrot.slane %v634, 1
      %v762 = vrot.slane %v635, 1
      %v763 = vsel %vm700, %v761, %v762
      %v764 = vrot.slane %v636, 1
      %v765 = vsel %vm700, %v762, %v764
      %v766 = vrot.slane %v637, 1
      %v767 = vrot.slane %v638, 1
      %v768 = vsel %vm700, %v766, %v767
      %v769 = vrot.slane %v639, 1
      %v770 = vsel %vm700, %v767, %v769
      %v771 = vrot.slane %v640, 1
      %v772 = vrot.slane %v641, 1
      %v773 = vsel %vm700, %v771, %v772
      %v774 = vrot.slane %v642, 1
      %v775 = vsel %vm700, %v772, %v774
      %v776 = vrot.slane %v643, 1
      %v777 = vrot.slane %v644, 1
      %v778 = vsel %vm700, %v776, %v777
      %v779 = vrot.slane %v645, 1
      %v780 = vsel %vm700, %v777, %v779
      %781 = vrot.lane.b32.xlu0 %v703, 4
      %v782 = vpop.permute.xlu0 %781
      %783 = vrot.lane.b32.xlu0 %v705, 4
      %v784 = vpop.permute.xlu0 %783
      %785 = vrot.lane.b32.xlu0 %v708, 4
      %v786 = vpop.permute.xlu0 %785
      %787 = vrot.lane.b32.xlu0 %v710, 4
      %v788 = vpop.permute.xlu0 %787
      %789 = vrot.lane.b32.xlu0 %v713, 4
      %v790 = vpop.permute.xlu0 %789
      %791 = vrot.lane.b32.xlu0 %v715, 4
      %v792 = vpop.permute.xlu0 %791
      %793 = vrot.lane.b32.xlu0 %v718, 4
      %v794 = vpop.permute.xlu0 %793
      %795 = vrot.lane.b32.xlu0 %v720, 4
      %v796 = vpop.permute.xlu0 %795
      %797 = vrot.lane.b32.xlu0 %v723, 4
      %v798 = vpop.permute.xlu0 %797
      %799 = vrot.lane.b32.xlu0 %v725, 4
      %v800 = vpop.permute.xlu0 %799
      %801 = vrot.lane.b32.xlu0 %v728, 4
      %v802 = vpop.permute.xlu0 %801
      %803 = vrot.lane.b32.xlu0 %v730, 4
      %v804 = vpop.permute.xlu0 %803
      %805 = vrot.lane.b32.xlu0 %v733, 4
      %v806 = vpop.permute.xlu0 %805
      %807 = vrot.lane.b32.xlu0 %v735, 4
      %v808 = vpop.permute.xlu0 %807
      %809 = vrot.lane.b32.xlu0 %v738, 4
      %v810 = vpop.permute.xlu0 %809
      %811 = vrot.lane.b32.xlu0 %v740, 4
      %v812 = vpop.permute.xlu0 %811
      %813 = vrot.lane.b32.xlu0 %v743, 4
      %v814 = vpop.permute.xlu0 %813
      %815 = vrot.lane.b32.xlu0 %v745, 4
      %v816 = vpop.permute.xlu0 %815
      %817 = vrot.lane.b32.xlu0 %v748, 4
      %v818 = vpop.permute.xlu0 %817
      %819 = vrot.lane.b32.xlu0 %v750, 4
      %v820 = vpop.permute.xlu0 %819
      %821 = vrot.lane.b32.xlu0 %v753, 4
      %v822 = vpop.permute.xlu0 %821
      %823 = vrot.lane.b32.xlu0 %v755, 4
      %v824 = vpop.permute.xlu0 %823
      %825 = vrot.lane.b32.xlu0 %v758, 4
      %v826 = vpop.permute.xlu0 %825
      %827 = vrot.lane.b32.xlu0 %v760, 4
      %v828 = vpop.permute.xlu0 %827
      %829 = vrot.lane.b32.xlu0 %v763, 4
      %v830 = vpop.permute.xlu0 %829
      %831 = vrot.lane.b32.xlu0 %v765, 4
      %v832 = vpop.permute.xlu0 %831
      %833 = vrot.lane.b32.xlu0 %v768, 4
      %v834 = vpop.permute.xlu0 %833
      %835 = vrot.lane.b32.xlu0 %v770, 4
      %v836 = vpop.permute.xlu0 %835
      %837 = vrot.lane.b32.xlu0 %v773, 4
      %v838 = vpop.permute.xlu0 %837
      %839 = vrot.lane.b32.xlu0 %v775, 4
      %v840 = vpop.permute.xlu0 %839
      %841 = vrot.lane.b32.xlu0 %v778, 4
      %v842 = vpop.permute.xlu0 %841
      %843 = vrot.lane.b32.xlu0 %v780, 4
      %v844 = vpop.permute.xlu0 %843
      %vm877 = vcmask 1045504
      %v878 = vrot.slane %v598, 2
      %v879 = vrot.slane %v599, 2
      %v880 = vsel %vm877, %v878, %v879
      %v881 = vrot.slane %v600, 2
      %v882 = vsel %vm877, %v879, %v881
      %v883 = vrot.slane %v601, 2
      %v884 = vrot.slane %v602, 2
      %v885 = vsel %vm877, %v883, %v884
      %v886 = vrot.slane %v603, 2
      %v887 = vsel %vm877, %v884, %v886
      %v888 = vrot.slane %v604, 2
      %v889 = vrot.slane %v605, 2
      %v890 = vsel %vm877, %v888, %v889
      %v891 = vrot.slane %v606, 2
      %v892 = vsel %vm877, %v889, %v891
      %v893 = vrot.slane %v607, 2
      %v894 = vrot.slane %v608, 2
      %v895 = vsel %vm877, %v893, %v894
      %v896 = vrot.slane %v609, 2
      %v897 = vsel %vm877, %v894, %v896
      %v898 = vrot.slane %v610, 2
      %v899 = vrot.slane %v611, 2
      %v900 = vsel %vm877, %v898, %v899
      %v901 = vrot.slane %v612, 2
      %v902 = vsel %vm877, %v899, %v901
      %v903 = vrot.slane %v613, 2
      %v904 = vrot.slane %v614, 2
      %v905 = vsel %vm877, %v903, %v904
      %v906 = vrot.slane %v615, 2
      %v907 = vsel %vm877, %v904, %v906
      %v908 = vrot.slane %v616, 2
      %v909 = vrot.slane %v617, 2
      %v910 = vsel %vm877, %v908, %v909
      %v911 = vrot.slane %v618, 2
      %v912 = vsel %vm877, %v909, %v911
      %v913 = vrot.slane %v619, 2
      %v914 = vrot.slane %v620, 2
      %v915 = vsel %vm877, %v913, %v914
      %v916 = vrot.slane %v621, 2
      %v917 = vsel %vm877, %v914, %v916
      %v918 = vrot.slane %v622, 2
      %v919 = vrot.slane %v623, 2
      %v920 = vsel %vm877, %v918, %v919
      %v921 = vrot.slane %v624, 2
      %v922 = vsel %vm877, %v919, %v921
      %v923 = vrot.slane %v625, 2
      %v924 = vrot.slane %v626, 2
      %v925 = vsel %vm877, %v923, %v924
      %v926 = vrot.slane %v627, 2
      %v927 = vsel %vm877, %v924, %v926
      %v928 = vrot.slane %v628, 2
      %v929 = vrot.slane %v629, 2
      %v930 = vsel %vm877, %v928, %v929
      %v931 = vrot.slane %v630, 2
      %v932 = vsel %vm877, %v929, %v931
      %v933 = vrot.slane %v631, 2
      %v934 = vrot.slane %v632, 2
      %v935 = vsel %vm877, %v933, %v934
      %v936 = vrot.slane %v633, 2
      %v937 = vsel %vm877, %v934, %v936
      %v938 = vrot.slane %v634, 2
      %v939 = vrot.slane %v635, 2
      %v940 = vsel %vm877, %v938, %v939
      %v941 = vrot.slane %v636, 2
      %v942 = vsel %vm877, %v939, %v941
      %v943 = vrot.slane %v637, 2
      %v944 = vrot.slane %v638, 2
      %v945 = vsel %vm877, %v943, %v944
      %v946 = vrot.slane %v639, 2
      %v947 = vsel %vm877, %v944, %v946
      %v948 = vrot.slane %v640, 2
      %v949 = vrot.slane %v641, 2
      %v950 = vsel %vm877, %v948, %v949
      %v951 = vrot.slane %v642, 2
      %v952 = vsel %vm877, %v949, %v951
      %v953 = vrot.slane %v643, 2
      %v954 = vrot.slane %v644, 2
      %v955 = vsel %vm877, %v953, %v954
      %v956 = vrot.slane %v645, 2
      %v957 = vsel %vm877, %v954, %v956
      %958 = vrot.lane.b32.xlu0 %v880, 8
      %v959 = vpop.permute.xlu0 %958
      %960 = vrot.lane.b32.xlu0 %v882, 8
      %v961 = vpop.permute.xlu0 %960
      %962 = vrot.lane.b32.xlu0 %v885, 8
      %v963 = vpop.permute.xlu0 %962
      %964 = vrot.lane.b32.xlu0 %v887, 8
      %v965 = vpop.permute.xlu0 %964
      %966 = vrot.lane.b32.xlu0 %v890, 8
      %v967 = vpop.permute.xlu0 %966
      %968 = vrot.lane.b32.xlu0 %v892, 8
      %v969 = vpop.permute.xlu0 %968
      %970 = vrot.lane.b32.xlu0 %v895, 8
      %v971 = vpop.permute.xlu0 %970
      %972 = vrot.lane.b32.xlu0 %v897, 8
      %v973 = vpop.permute.xlu0 %972
      %974 = vrot.lane.b32.xlu0 %v900, 8
      %v975 = vpop.permute.xlu0 %974
      %976 = vrot.lane.b32.xlu0 %v902, 8
      %v977 = vpop.permute.xlu0 %976
      %978 = vrot.lane.b32.xlu0 %v905, 8
      %v979 = vpop.permute.xlu0 %978
      %980 = vrot.lane.b32.xlu0 %v907, 8
      %v981 = vpop.permute.xlu0 %980
      %982 = vrot.lane.b32.xlu0 %v910, 8
      %v983 = vpop.permute.xlu0 %982
      %984 = vrot.lane.b32.xlu0 %v912, 8
      %v985 = vpop.permute.xlu0 %984
      %986 = vrot.lane.b32.xlu0 %v915, 8
      %v987 = vpop.permute.xlu0 %986
      %988 = vrot.lane.b32.xlu0 %v917, 8
      %v989 = vpop.permute.xlu0 %988
      %990 = vrot.lane.b32.xlu0 %v920, 8
      %v991 = vpop.permute.xlu0 %990
      %992 = vrot.lane.b32.xlu0 %v922, 8
      %v993 = vpop.permute.xlu0 %992
      %994 = vrot.lane.b32.xlu0 %v925, 8
      %v995 = vpop.permute.xlu0 %994
      %996 = vrot.lane.b32.xlu0 %v927, 8
      %v997 = vpop.permute.xlu0 %996
      %998 = vrot.lane.b32.xlu0 %v930, 8
      %v999 = vpop.permute.xlu0 %998
      %1000 = vrot.lane.b32.xlu0 %v932, 8
      %v1001 = vpop.permute.xlu0 %1000
      %1002 = vrot.lane.b32.xlu0 %v935, 8
      %v1003 = vpop.permute.xlu0 %1002
      %1004 = vrot.lane.b32.xlu0 %v937, 8
      %v1005 = vpop.permute.xlu0 %1004
      %1006 = vrot.lane.b32.xlu0 %v940, 8
      %v1007 = vpop.permute.xlu0 %1006
      %1008 = vrot.lane.b32.xlu0 %v942, 8
      %v1009 = vpop.permute.xlu0 %1008
      %1010 = vrot.lane.b32.xlu0 %v945, 8
      %v1011 = vpop.permute.xlu0 %1010
      %1012 = vrot.lane.b32.xlu0 %v947, 8
      %v1013 = vpop.permute.xlu0 %1012
      %1014 = vrot.lane.b32.xlu0 %v950, 8
      %v1015 = vpop.permute.xlu0 %1014
      %1016 = vrot.lane.b32.xlu0 %v952, 8
      %v1017 = vpop.permute.xlu0 %1016
      %1018 = vrot.lane.b32.xlu0 %v955, 8
      %v1019 = vpop.permute.xlu0 %1018
      %1020 = vrot.lane.b32.xlu0 %v957, 8
      %v1021 = vpop.permute.xlu0 %1020
      %1056 = vrot.lane.b32.xlu0 %v601, 12
      %v1057 = vpop.permute.xlu0 %1056
      %1058 = vrot.lane.b32.xlu0 %v602, 12
      %v1059 = vpop.permute.xlu0 %1058
      %1060 = vrot.lane.b32.xlu0 %v604, 12
      %v1061 = vpop.permute.xlu0 %1060
      %1062 = vrot.lane.b32.xlu0 %v605, 12
      %v1063 = vpop.permute.xlu0 %1062
      %1064 = vrot.lane.b32.xlu0 %v607, 12
      %v1065 = vpop.permute.xlu0 %1064
      %1066 = vrot.lane.b32.xlu0 %v608, 12
      %v1067 = vpop.permute.xlu0 %1066
      %1068 = vrot.lane.b32.xlu0 %v610, 12
      %v1069 = vpop.permute.xlu0 %1068
      %1070 = vrot.lane.b32.xlu0 %v611, 12
      %v1071 = vpop.permute.xlu0 %1070
      %1072 = vrot.lane.b32.xlu0 %v613, 12
      %v1073 = vpop.permute.xlu0 %1072
      %1074 = vrot.lane.b32.xlu0 %v614, 12
      %v1075 = vpop.permute.xlu0 %1074
      %1076 = vrot.lane.b32.xlu0 %v616, 12
      %v1077 = vpop.permute.xlu0 %1076
      %1078 = vrot.lane.b32.xlu0 %v617, 12
      %v1079 = vpop.permute.xlu0 %1078
      %1080 = vrot.lane.b32.xlu0 %v619, 12
      %v1081 = vpop.permute.xlu0 %1080
      %1082 = vrot.lane.b32.xlu0 %v620, 12
      %v1083 = vpop.permute.xlu0 %1082
      %1084 = vrot.lane.b32.xlu0 %v622, 12
      %v1085 = vpop.permute.xlu0 %1084
      %1086 = vrot.lane.b32.xlu0 %v623, 12
      %v1087 = vpop.permute.xlu0 %1086
      %1088 = vrot.lane.b32.xlu0 %v625, 12
      %v1089 = vpop.permute.xlu0 %1088
      %1090 = vrot.lane.b32.xlu0 %v626, 12
      %v1091 = vpop.permute.xlu0 %1090
      %1092 = vrot.lane.b32.xlu0 %v628, 12
      %v1093 = vpop.permute.xlu0 %1092
      %1094 = vrot.lane.b32.xlu0 %v629, 12
      %v1095 = vpop.permute.xlu0 %1094
      %1096 = vrot.lane.b32.xlu0 %v631, 12
      %v1097 = vpop.permute.xlu0 %1096
      %1098 = vrot.lane.b32.xlu0 %v632, 12
      %v1099 = vpop.permute.xlu0 %1098
      %1100 = vrot.lane.b32.xlu0 %v634, 12
      %v1101 = vpop.permute.xlu0 %1100
      %1102 = vrot.lane.b32.xlu0 %v635, 12
      %v1103 = vpop.permute.xlu0 %1102
      %1104 = vrot.lane.b32.xlu0 %v637, 12
      %v1105 = vpop.permute.xlu0 %1104
      %1106 = vrot.lane.b32.xlu0 %v638, 12
      %v1107 = vpop.permute.xlu0 %1106
      %1108 = vrot.lane.b32.xlu0 %v640, 12
      %v1109 = vpop.permute.xlu0 %1108
      %1110 = vrot.lane.b32.xlu0 %v641, 12
      %v1111 = vpop.permute.xlu0 %1110
      %1112 = vrot.lane.b32.xlu0 %v643, 12
      %v1113 = vpop.permute.xlu0 %1112
      %1114 = vrot.lane.b32.xlu0 %v644, 12
      %v1115 = vpop.permute.xlu0 %1114
      %1116 = vrot.lane.b32.xlu0 %v646, 12
      %v1117 = vpop.permute.xlu0 %1116
      %1118 = vrot.lane.b32.xlu0 %v647, 12
      %v1119 = vpop.permute.xlu0 %1118
      %v1153 = vrot.slane %v646, 1
      %v1154 = vrot.slane %v647, 1
      %v1155 = vsel %vm700, %v1153, %v1154
      %v1156 = vrot.slane %v648, 1
      %v1157 = vsel %vm700, %v1154, %v1156
      %1158 = vrot.lane.b32.xlu0 %v708, 16
      %v1159 = vpop.permute.xlu0 %1158
      %1160 = vrot.lane.b32.xlu0 %v710, 16
      %v1161 = vpop.permute.xlu0 %1160
      %1162 = vrot.lane.b32.xlu0 %v713, 16
      %v1163 = vpop.permute.xlu0 %1162
      %1164 = vrot.lane.b32.xlu0 %v715, 16
      %v1165 = vpop.permute.xlu0 %1164
      %1166 = vrot.lane.b32.xlu0 %v718, 16
      %v1167 = vpop.permute.xlu0 %1166
      %1168 = vrot.lane.b32.xlu0 %v720, 16
      %v1169 = vpop.permute.xlu0 %1168
      %1170 = vrot.lane.b32.xlu0 %v723, 16
      %v1171 = vpop.permute.xlu0 %1170
      %1172 = vrot.lane.b32.xlu0 %v725, 16
      %v1173 = vpop.permute.xlu0 %1172
      %1174 = vrot.lane.b32.xlu0 %v728, 16
      %v1175 = vpop.permute.xlu0 %1174
      %1176 = vrot.lane.b32.xlu0 %v730, 16
      %v1177 = vpop.permute.xlu0 %1176
      %1178 = vrot.lane.b32.xlu0 %v733, 16
      %v1179 = vpop.permute.xlu0 %1178
      %1180 = vrot.lane.b32.xlu0 %v735, 16
      %v1181 = vpop.permute.xlu0 %1180
      %1182 = vrot.lane.b32.xlu0 %v738, 16
      %v1183 = vpop.permute.xlu0 %1182
      %1184 = vrot.lane.b32.xlu0 %v740, 16
      %v1185 = vpop.permute.xlu0 %1184
      %1186 = vrot.lane.b32.xlu0 %v743, 16
      %v1187 = vpop.permute.xlu0 %1186
      %1188 = vrot.lane.b32.xlu0 %v745, 16
      %v1189 = vpop.permute.xlu0 %1188
      %1190 = vrot.lane.b32.xlu0 %v748, 16
      %v1191 = vpop.permute.xlu0 %1190
      %1192 = vrot.lane.b32.xlu0 %v750, 16
      %v1193 = vpop.permute.xlu0 %1192
      %1194 = vrot.lane.b32.xlu0 %v753, 16
      %v1195 = vpop.permute.xlu0 %1194
      %1196 = vrot.lane.b32.xlu0 %v755, 16
      %v1197 = vpop.permute.xlu0 %1196
      %1198 = vrot.lane.b32.xlu0 %v758, 16
      %v1199 = vpop.permute.xlu0 %1198
      %1200 = vrot.lane.b32.xlu0 %v760, 16
      %v1201 = vpop.permute.xlu0 %1200
      %1202 = vrot.lane.b32.xlu0 %v763, 16
      %v1203 = vpop.permute.xlu0 %1202
      %1204 = vrot.lane.b32.xlu0 %v765, 16
      %v1205 = vpop.permute.xlu0 %1204
      %1206 = vrot.lane.b32.xlu0 %v768, 16
      %v1207 = vpop.permute.xlu0 %1206
      %1208 = vrot.lane.b32.xlu0 %v770, 16
      %v1209 = vpop.permute.xlu0 %1208
      %1210 = vrot.lane.b32.xlu0 %v773, 16
      %v1211 = vpop.permute.xlu0 %1210
      %1212 = vrot.lane.b32.xlu0 %v775, 16
      %v1213 = vpop.permute.xlu0 %1212
      %1214 = vrot.lane.b32.xlu0 %v778, 16
      %v1215 = vpop.permute.xlu0 %1214
      %1216 = vrot.lane.b32.xlu0 %v780, 16
      %v1217 = vpop.permute.xlu0 %1216
      %1218 = vrot.lane.b32.xlu0 %v1155, 16
      %v1219 = vpop.permute.xlu0 %1218
      %1220 = vrot.lane.b32.xlu0 %v1157, 16
      %v1221 = vpop.permute.xlu0 %1220
      %v1254 = vrot.slane %v646, 2
      %v1255 = vrot.slane %v647, 2
      %v1256 = vsel %vm877, %v1254, %v1255
      %v1257 = vrot.slane %v648, 2
      %v1258 = vsel %vm877, %v1255, %v1257
      %1259 = vrot.lane.b32.xlu0 %v885, 20
      %v1260 = vpop.permute.xlu0 %1259
      %1261 = vrot.lane.b32.xlu0 %v887, 20
      %v1262 = vpop.permute.xlu0 %1261
      %1263 = vrot.lane.b32.xlu0 %v890, 20
      %v1264 = vpop.permute.xlu0 %1263
      %1265 = vrot.lane.b32.xlu0 %v892, 20
      %v1266 = vpop.permute.xlu0 %1265
      %1267 = vrot.lane.b32.xlu0 %v895, 20
      %v1268 = vpop.permute.xlu0 %1267
      %1269 = vrot.lane.b32.xlu0 %v897, 20
      %v1270 = vpop.permute.xlu0 %1269
      %1271 = vrot.lane.b32.xlu0 %v900, 20
      %v1272 = vpop.permute.xlu0 %1271
      %1273 = vrot.lane.b32.xlu0 %v902, 20
      %v1274 = vpop.permute.xlu0 %1273
      %1275 = vrot.lane.b32.xlu0 %v905, 20
      %v1276 = vpop.permute.xlu0 %1275
      %1277 = vrot.lane.b32.xlu0 %v907, 20
      %v1278 = vpop.permute.xlu0 %1277
      %1279 = vrot.lane.b32.xlu0 %v910, 20
      %v1280 = vpop.permute.xlu0 %1279
      %1281 = vrot.lane.b32.xlu0 %v912, 20
      %v1282 = vpop.permute.xlu0 %1281
      %1283 = vrot.lane.b32.xlu0 %v915, 20
      %v1284 = vpop.permute.xlu0 %1283
      %1285 = vrot.lane.b32.xlu0 %v917, 20
      %v1286 = vpop.permute.xlu0 %1285
      %1287 = vrot.lane.b32.xlu0 %v920, 20
      %v1288 = vpop.permute.xlu0 %1287
      %1289 = vrot.lane.b32.xlu0 %v922, 20
      %v1290 = vpop.permute.xlu0 %1289
      %1291 = vrot.lane.b32.xlu0 %v925, 20
      %v1292 = vpop.permute.xlu0 %1291
      %1293 = vrot.lane.b32.xlu0 %v927, 20
      %v1294 = vpop.permute.xlu0 %1293
      %1295 = vrot.lane.b32.xlu0 %v930, 20
      %v1296 = vpop.permute.xlu0 %1295
      %1297 = vrot.lane.b32.xlu0 %v932, 20
      %v1298 = vpop.permute.xlu0 %1297
      %1299 = vrot.lane.b32.xlu0 %v935, 20
      %v1300 = vpop.permute.xlu0 %1299
      %1301 = vrot.lane.b32.xlu0 %v937, 20
      %v1302 = vpop.permute.xlu0 %1301
      %1303 = vrot.lane.b32.xlu0 %v940, 20
      %v1304 = vpop.permute.xlu0 %1303
      %1305 = vrot.lane.b32.xlu0 %v942, 20
      %v1306 = vpop.permute.xlu0 %1305
      %1307 = vrot.lane.b32.xlu0 %v945, 20
      %v1308 = vpop.permute.xlu0 %1307
      %1309 = vrot.lane.b32.xlu0 %v947, 20
      %v1310 = vpop.permute.xlu0 %1309
      %1311 = vrot.lane.b32.xlu0 %v950, 20
      %v1312 = vpop.permute.xlu0 %1311
      %1313 = vrot.lane.b32.xlu0 %v952, 20
      %v1314 = vpop.permute.xlu0 %1313
      %1315 = vrot.lane.b32.xlu0 %v955, 20
      %v1316 = vpop.permute.xlu0 %1315
      %1317 = vrot.lane.b32.xlu0 %v957, 20
      %v1318 = vpop.permute.xlu0 %1317
      %1319 = vrot.lane.b32.xlu0 %v1256, 20
      %v1320 = vpop.permute.xlu0 %1319
      %1321 = vrot.lane.b32.xlu0 %v1258, 20
      %v1322 = vpop.permute.xlu0 %1321
      %1357 = vrot.lane.b32.xlu0 %v604, 24
      %v1358 = vpop.permute.xlu0 %1357
      %1359 = vrot.lane.b32.xlu0 %v605, 24
      %v1360 = vpop.permute.xlu0 %1359
      %1361 = vrot.lane.b32.xlu0 %v607, 24
      %v1362 = vpop.permute.xlu0 %1361
      %1363 = vrot.lane.b32.xlu0 %v608, 24
      %v1364 = vpop.permute.xlu0 %1363
      %1365 = vrot.lane.b32.xlu0 %v610, 24
      %v1366 = vpop.permute.xlu0 %1365
      %1367 = vrot.lane.b32.xlu0 %v611, 24
      %v1368 = vpop.permute.xlu0 %1367
      %1369 = vrot.lane.b32.xlu0 %v613, 24
      %v1370 = vpop.permute.xlu0 %1369
      %1371 = vrot.lane.b32.xlu0 %v614, 24
      %v1372 = vpop.permute.xlu0 %1371
      %1373 = vrot.lane.b32.xlu0 %v616, 24
      %v1374 = vpop.permute.xlu0 %1373
      %1375 = vrot.lane.b32.xlu0 %v617, 24
      %v1376 = vpop.permute.xlu0 %1375
      %1377 = vrot.lane.b32.xlu0 %v619, 24
      %v1378 = vpop.permute.xlu0 %1377
      %1379 = vrot.lane.b32.xlu0 %v620, 24
      %v1380 = vpop.permute.xlu0 %1379
      %1381 = vrot.lane.b32.xlu0 %v622, 24
      %v1382 = vpop.permute.xlu0 %1381
      %1383 = vrot.lane.b32.xlu0 %v623, 24
      %v1384 = vpop.permute.xlu0 %1383
      %1385 = vrot.lane.b32.xlu0 %v625, 24
      %v1386 = vpop.permute.xlu0 %1385
      %1387 = vrot.lane.b32.xlu0 %v626, 24
      %v1388 = vpop.permute.xlu0 %1387
      %1389 = vrot.lane.b32.xlu0 %v628, 24
      %v1390 = vpop.permute.xlu0 %1389
      %1391 = vrot.lane.b32.xlu0 %v629, 24
      %v1392 = vpop.permute.xlu0 %1391
      %1393 = vrot.lane.b32.xlu0 %v631, 24
      %v1394 = vpop.permute.xlu0 %1393
      %1395 = vrot.lane.b32.xlu0 %v632, 24
      %v1396 = vpop.permute.xlu0 %1395
      %1397 = vrot.lane.b32.xlu0 %v634, 24
      %v1398 = vpop.permute.xlu0 %1397
      %1399 = vrot.lane.b32.xlu0 %v635, 24
      %v1400 = vpop.permute.xlu0 %1399
      %1401 = vrot.lane.b32.xlu0 %v637, 24
      %v1402 = vpop.permute.xlu0 %1401
      %1403 = vrot.lane.b32.xlu0 %v638, 24
      %v1404 = vpop.permute.xlu0 %1403
      %1405 = vrot.lane.b32.xlu0 %v640, 24
      %v1406 = vpop.permute.xlu0 %1405
      %1407 = vrot.lane.b32.xlu0 %v641, 24
      %v1408 = vpop.permute.xlu0 %1407
      %1409 = vrot.lane.b32.xlu0 %v643, 24
      %v1410 = vpop.permute.xlu0 %1409
      %1411 = vrot.lane.b32.xlu0 %v644, 24
      %v1412 = vpop.permute.xlu0 %1411
      %1413 = vrot.lane.b32.xlu0 %v646, 24
      %v1414 = vpop.permute.xlu0 %1413
      %1415 = vrot.lane.b32.xlu0 %v647, 24
      %v1416 = vpop.permute.xlu0 %1415
      %1417 = vrot.lane.b32.xlu0 %v649, 24
      %v1418 = vpop.permute.xlu0 %1417
      %1419 = vrot.lane.b32.xlu0 %v650, 24
      %v1420 = vpop.permute.xlu0 %1419
      %v1454 = vrot.slane %v649, 1
      %v1455 = vrot.slane %v650, 1
      %v1456 = vsel %vm700, %v1454, %v1455
      %v1457 = vrot.slane %v651, 1
      %v1458 = vsel %vm700, %v1455, %v1457
      %1459 = vrot.lane.b32.xlu0 %v713, 28
      %v1460 = vpop.permute.xlu0 %1459
      %1461 = vrot.lane.b32.xlu0 %v715, 28
      %v1462 = vpop.permute.xlu0 %1461
      %1463 = vrot.lane.b32.xlu0 %v718, 28
      %v1464 = vpop.permute.xlu0 %1463
      %1465 = vrot.lane.b32.xlu0 %v720, 28
      %v1466 = vpop.permute.xlu0 %1465
      %1467 = vrot.lane.b32.xlu0 %v723, 28
      %v1468 = vpop.permute.xlu0 %1467
      %1469 = vrot.lane.b32.xlu0 %v725, 28
      %v1470 = vpop.permute.xlu0 %1469
      %1471 = vrot.lane.b32.xlu0 %v728, 28
      %v1472 = vpop.permute.xlu0 %1471
      %1473 = vrot.lane.b32.xlu0 %v730, 28
      %v1474 = vpop.permute.xlu0 %1473
      %1475 = vrot.lane.b32.xlu0 %v733, 28
      %v1476 = vpop.permute.xlu0 %1475
      %1477 = vrot.lane.b32.xlu0 %v735, 28
      %v1478 = vpop.permute.xlu0 %1477
      %1479 = vrot.lane.b32.xlu0 %v738, 28
      %v1480 = vpop.permute.xlu0 %1479
      %1481 = vrot.lane.b32.xlu0 %v740, 28
      %v1482 = vpop.permute.xlu0 %1481
      %1483 = vrot.lane.b32.xlu0 %v743, 28
      %v1484 = vpop.permute.xlu0 %1483
      %1485 = vrot.lane.b32.xlu0 %v745, 28
      %v1486 = vpop.permute.xlu0 %1485
      %1487 = vrot.lane.b32.xlu0 %v748, 28
      %v1488 = vpop.permute.xlu0 %1487
      %1489 = vrot.lane.b32.xlu0 %v750, 28
      %v1490 = vpop.permute.xlu0 %1489
      %1491 = vrot.lane.b32.xlu0 %v753, 28
      %v1492 = vpop.permute.xlu0 %1491
      %1493 = vrot.lane.b32.xlu0 %v755, 28
      %v1494 = vpop.permute.xlu0 %1493
      %1495 = vrot.lane.b32.xlu0 %v758, 28
      %v1496 = vpop.permute.xlu0 %1495
      %1497 = vrot.lane.b32.xlu0 %v760, 28
      %v1498 = vpop.permute.xlu0 %1497
      %1499 = vrot.lane.b32.xlu0 %v763, 28
      %v1500 = vpop.permute.xlu0 %1499
      %1501 = vrot.lane.b32.xlu0 %v765, 28
      %v1502 = vpop.permute.xlu0 %1501
      %1503 = vrot.lane.b32.xlu0 %v768, 28
      %v1504 = vpop.permute.xlu0 %1503
      %1505 = vrot.lane.b32.xlu0 %v770, 28
      %v1506 = vpop.permute.xlu0 %1505
      %1507 = vrot.lane.b32.xlu0 %v773, 28
      %v1508 = vpop.permute.xlu0 %1507
      %1509 = vrot.lane.b32.xlu0 %v775, 28
      %v1510 = vpop.permute.xlu0 %1509
      %1511 = vrot.lane.b32.xlu0 %v778, 28
      %v1512 = vpop.permute.xlu0 %1511
      %1513 = vrot.lane.b32.xlu0 %v780, 28
      %v1514 = vpop.permute.xlu0 %1513
      %1515 = vrot.lane.b32.xlu0 %v1155, 28
      %v1516 = vpop.permute.xlu0 %1515
      %1517 = vrot.lane.b32.xlu0 %v1157, 28
      %v1518 = vpop.permute.xlu0 %1517
      %1519 = vrot.lane.b32.xlu0 %v1456, 28
      %v1520 = vpop.permute.xlu0 %1519
      %1521 = vrot.lane.b32.xlu0 %v1458, 28
      %v1522 = vpop.permute.xlu0 %1521
      %v1555 = vrot.slane %v649, 2
      %v1556 = vrot.slane %v650, 2
      %v1557 = vsel %vm877, %v1555, %v1556
      %v1558 = vrot.slane %v651, 2
      %v1559 = vsel %vm877, %v1556, %v1558
      %1560 = vrot.lane.b32.xlu0 %v890, 32
      %v1561 = vpop.permute.xlu0 %1560
      %1562 = vrot.lane.b32.xlu0 %v892, 32
      %v1563 = vpop.permute.xlu0 %1562
      %1564 = vrot.lane.b32.xlu0 %v895, 32
      %v1565 = vpop.permute.xlu0 %1564
      %1566 = vrot.lane.b32.xlu0 %v897, 32
      %v1567 = vpop.permute.xlu0 %1566
      %1568 = vrot.lane.b32.xlu0 %v900, 32
      %v1569 = vpop.permute.xlu0 %1568
      %1570 = vrot.lane.b32.xlu0 %v902, 32
      %v1571 = vpop.permute.xlu0 %1570
      %1572 = vrot.lane.b32.xlu0 %v905, 32
      %v1573 = vpop.permute.xlu0 %1572
      %1574 = vrot.lane.b32.xlu0 %v907, 32
      %v1575 = vpop.permute.xlu0 %1574
      %1576 = vrot.lane.b32.xlu0 %v910, 32
      %v1577 = vpop.permute.xlu0 %1576
      %1578 = vrot.lane.b32.xlu0 %v912, 32
      %v1579 = vpop.permute.xlu0 %1578
      %1580 = vrot.lane.b32.xlu0 %v915, 32
      %v1581 = vpop.permute.xlu0 %1580
      %1582 = vrot.lane.b32.xlu0 %v917, 32
      %v1583 = vpop.permute.xlu0 %1582
      %1584 = vrot.lane.b32.xlu0 %v920, 32
      %v1585 = vpop.permute.xlu0 %1584
      %1586 = vrot.lane.b32.xlu0 %v922, 32
      %v1587 = vpop.permute.xlu0 %1586
      %1588 = vrot.lane.b32.xlu0 %v925, 32
      %v1589 = vpop.permute.xlu0 %1588
      %1590 = vrot.lane.b32.xlu0 %v927, 32
      %v1591 = vpop.permute.xlu0 %1590
      %1592 = vrot.lane.b32.xlu0 %v930, 32
      %v1593 = vpop.permute.xlu0 %1592
      %1594 = vrot.lane.b32.xlu0 %v932, 32
      %v1595 = vpop.permute.xlu0 %1594
      %1596 = vrot.lane.b32.xlu0 %v935, 32
      %v1597 = vpop.permute.xlu0 %1596
      %1598 = vrot.lane.b32.xlu0 %v937, 32
      %v1599 = vpop.permute.xlu0 %1598
      %1600 = vrot.lane.b32.xlu0 %v940, 32
      %v1601 = vpop.permute.xlu0 %1600
      %1602 = vrot.lane.b32.xlu0 %v942, 32
      %v1603 = vpop.permute.xlu0 %1602
      %1604 = vrot.lane.b32.xlu0 %v945, 32
      %v1605 = vpop.permute.xlu0 %1604
      %1606 = vrot.lane.b32.xlu0 %v947, 32
      %v1607 = vpop.permute.xlu0 %1606
      %1608 = vrot.lane.b32.xlu0 %v950, 32
      %v1609 = vpop.permute.xlu0 %1608
      %1610 = vrot.lane.b32.xlu0 %v952, 32
      %v1611 = vpop.permute.xlu0 %1610
      %1612 = vrot.lane.b32.xlu0 %v955, 32
      %v1613 = vpop.permute.xlu0 %1612
      %1614 = vrot.lane.b32.xlu0 %v957, 32
      %v1615 = vpop.permute.xlu0 %1614
      %1616 = vrot.lane.b32.xlu0 %v1256, 32
      %v1617 = vpop.permute.xlu0 %1616
      %1618 = vrot.lane.b32.xlu0 %v1258, 32
      %v1619 = vpop.permute.xlu0 %1618
      %1620 = vrot.lane.b32.xlu0 %v1557, 32
      %v1621 = vpop.permute.xlu0 %1620
      %1622 = vrot.lane.b32.xlu0 %v1559, 32
      %v1623 = vpop.permute.xlu0 %1622
      %v1656 = vsel %vm536, %v598, %v782
      %v1657 = vsel %vm536, %v599, %v784
      %v1658 = vsel %vm536, %v601, %v786
      %v1659 = vsel %vm536, %v602, %v788
      %v1660 = vsel %vm536, %v604, %v790
      %v1661 = vsel %vm536, %v605, %v792
      %v1662 = vsel %vm536, %v607, %v794
      %v1663 = vsel %vm536, %v608, %v796
      %v1664 = vsel %vm536, %v610, %v798
      %v1665 = vsel %vm536, %v611, %v800
      %v1666 = vsel %vm536, %v613, %v802
      %v1667 = vsel %vm536, %v614, %v804
      %v1668 = vsel %vm536, %v616, %v806
      %v1669 = vsel %vm536, %v617, %v808
      %v1670 = vsel %vm536, %v619, %v810
      %v1671 = vsel %vm536, %v620, %v812
      %v1672 = vsel %vm536, %v622, %v814
      %v1673 = vsel %vm536, %v623, %v816
      %v1674 = vsel %vm536, %v625, %v818
      %v1675 = vsel %vm536, %v626, %v820
      %v1676 = vsel %vm536, %v628, %v822
      %v1677 = vsel %vm536, %v629, %v824
      %v1678 = vsel %vm536, %v631, %v826
      %v1679 = vsel %vm536, %v632, %v828
      %v1680 = vsel %vm536, %v634, %v830
      %v1681 = vsel %vm536, %v635, %v832
      %v1682 = vsel %vm536, %v637, %v834
      %v1683 = vsel %vm536, %v638, %v836
      %v1684 = vsel %vm536, %v640, %v838
      %v1685 = vsel %vm536, %v641, %v840
      %v1686 = vsel %vm536, %v643, %v842
      %v1687 = vsel %vm536, %v644, %v844
      %vm1688 = vcmask 64512
      %v1689 = vsel %vm1688, %v1656, %v959
      %v1690 = vsel %vm1688, %v1657, %v961
      %v1691 = vsel %vm1688, %v1658, %v963
      %v1692 = vsel %vm1688, %v1659, %v965
      %v1693 = vsel %vm1688, %v1660, %v967
      %v1694 = vsel %vm1688, %v1661, %v969
      %v1695 = vsel %vm1688, %v1662, %v971
      %v1696 = vsel %vm1688, %v1663, %v973
      %v1697 = vsel %vm1688, %v1664, %v975
      %v1698 = vsel %vm1688, %v1665, %v977
      %v1699 = vsel %vm1688, %v1666, %v979
      %v1700 = vsel %vm1688, %v1667, %v981
      %v1701 = vsel %vm1688, %v1668, %v983
      %v1702 = vsel %vm1688, %v1669, %v985
      %v1703 = vsel %vm1688, %v1670, %v987
      %v1704 = vsel %vm1688, %v1671, %v989
      %v1705 = vsel %vm1688, %v1672, %v991
      %v1706 = vsel %vm1688, %v1673, %v993
      %v1707 = vsel %vm1688, %v1674, %v995
      %v1708 = vsel %vm1688, %v1675, %v997
      %v1709 = vsel %vm1688, %v1676, %v999
      %v1710 = vsel %vm1688, %v1677, %v1001
      %v1711 = vsel %vm1688, %v1678, %v1003
      %v1712 = vsel %vm1688, %v1679, %v1005
      %v1713 = vsel %vm1688, %v1680, %v1007
      %v1714 = vsel %vm1688, %v1681, %v1009
      %v1715 = vsel %vm1688, %v1682, %v1011
      %v1716 = vsel %vm1688, %v1683, %v1013
      %v1717 = vsel %vm1688, %v1684, %v1015
      %v1718 = vsel %vm1688, %v1685, %v1017
      %v1719 = vsel %vm1688, %v1686, %v1019
      %v1720 = vsel %vm1688, %v1687, %v1021
      %vm1721 = vcmask 97280
      %v1722 = vsel %vm1721, %v1689, %v1057
      %v1723 = vsel %vm1721, %v1690, %v1059
      %v1724 = vsel %vm1721, %v1691, %v1061
      %v1725 = vsel %vm1721, %v1692, %v1063
      %v1726 = vsel %vm1721, %v1693, %v1065
      %v1727 = vsel %vm1721, %v1694, %v1067
      %v1728 = vsel %vm1721, %v1695, %v1069
      %v1729 = vsel %vm1721, %v1696, %v1071
      %v1730 = vsel %vm1721, %v1697, %v1073
      %v1731 = vsel %vm1721, %v1698, %v1075
      %v1732 = vsel %vm1721, %v1699, %v1077
      %v1733 = vsel %vm1721, %v1700, %v1079
      %v1734 = vsel %vm1721, %v1701, %v1081
      %v1735 = vsel %vm1721, %v1702, %v1083
      %v1736 = vsel %vm1721, %v1703, %v1085
      %v1737 = vsel %vm1721, %v1704, %v1087
      %v1738 = vsel %vm1721, %v1705, %v1089
      %v1739 = vsel %vm1721, %v1706, %v1091
      %v1740 = vsel %vm1721, %v1707, %v1093
      %v1741 = vsel %vm1721, %v1708, %v1095
      %v1742 = vsel %vm1721, %v1709, %v1097
      %v1743 = vsel %vm1721, %v1710, %v1099
      %v1744 = vsel %vm1721, %v1711, %v1101
      %v1745 = vsel %vm1721, %v1712, %v1103
      %v1746 = vsel %vm1721, %v1713, %v1105
      %v1747 = vsel %vm1721, %v1714, %v1107
      %v1748 = vsel %vm1721, %v1715, %v1109
      %v1749 = vsel %vm1721, %v1716, %v1111
      %v1750 = vsel %vm1721, %v1717, %v1113
      %v1751 = vsel %vm1721, %v1718, %v1115
      %v1752 = vsel %vm1721, %v1719, %v1117
      %v1753 = vsel %vm1721, %v1720, %v1119
      %vm1754 = vcmask 130048
      %v1755 = vsel %vm1754, %v1722, %v1159
      %v1756 = vsel %vm1754, %v1723, %v1161
      %v1757 = vsel %vm1754, %v1724, %v1163
      %v1758 = vsel %vm1754, %v1725, %v1165
      %v1759 = vsel %vm1754, %v1726, %v1167
      %v1760 = vsel %vm1754, %v1727, %v1169
      %v1761 = vsel %vm1754, %v1728, %v1171
      %v1762 = vsel %vm1754, %v1729, %v1173
      %v1763 = vsel %vm1754, %v1730, %v1175
      %v1764 = vsel %vm1754, %v1731, %v1177
      %v1765 = vsel %vm1754, %v1732, %v1179
      %v1766 = vsel %vm1754, %v1733, %v1181
      %v1767 = vsel %vm1754, %v1734, %v1183
      %v1768 = vsel %vm1754, %v1735, %v1185
      %v1769 = vsel %vm1754, %v1736, %v1187
      %v1770 = vsel %vm1754, %v1737, %v1189
      %v1771 = vsel %vm1754, %v1738, %v1191
      %v1772 = vsel %vm1754, %v1739, %v1193
      %v1773 = vsel %vm1754, %v1740, %v1195
      %v1774 = vsel %vm1754, %v1741, %v1197
      %v1775 = vsel %vm1754, %v1742, %v1199
      %v1776 = vsel %vm1754, %v1743, %v1201
      %v1777 = vsel %vm1754, %v1744, %v1203
      %v1778 = vsel %vm1754, %v1745, %v1205
      %v1779 = vsel %vm1754, %v1746, %v1207
      %v1780 = vsel %vm1754, %v1747, %v1209
      %v1781 = vsel %vm1754, %v1748, %v1211
      %v1782 = vsel %vm1754, %v1749, %v1213
      %v1783 = vsel %vm1754, %v1750, %v1215
      %v1784 = vsel %vm1754, %v1751, %v1217
      %v1785 = vsel %vm1754, %v1752, %v1219
      %v1786 = vsel %vm1754, %v1753, %v1221
      %vm1787 = vcmask 162816
      %v1788 = vsel %vm1787, %v1755, %v1260
      %v1789 = vsel %vm1787, %v1756, %v1262
      %v1790 = vsel %vm1787, %v1757, %v1264
      %v1791 = vsel %vm1787, %v1758, %v1266
      %v1792 = vsel %vm1787, %v1759, %v1268
      %v1793 = vsel %vm1787, %v1760, %v1270
      %v1794 = vsel %vm1787, %v1761, %v1272
      %v1795 = vsel %vm1787, %v1762, %v1274
      %v1796 = vsel %vm1787, %v1763, %v1276
      %v1797 = vsel %vm1787, %v1764, %v1278
      %v1798 = vsel %vm1787, %v1765, %v1280
      %v1799 = vsel %vm1787, %v1766, %v1282
      %v1800 = vsel %vm1787, %v1767, %v1284
      %v1801 = vsel %vm1787, %v1768, %v1286
      %v1802 = vsel %vm1787, %v1769, %v1288
      %v1803 = vsel %vm1787, %v1770, %v1290
      %v1804 = vsel %vm1787, %v1771, %v1292
      %v1805 = vsel %vm1787, %v1772, %v1294
      %v1806 = vsel %vm1787, %v1773, %v1296
      %v1807 = vsel %vm1787, %v1774, %v1298
      %v1808 = vsel %vm1787, %v1775, %v1300
      %v1809 = vsel %vm1787, %v1776, %v1302
      %v1810 = vsel %vm1787, %v1777, %v1304
      %v1811 = vsel %vm1787, %v1778, %v1306
      %v1812 = vsel %vm1787, %v1779, %v1308
      %v1813 = vsel %vm1787, %v1780, %v1310
      %v1814 = vsel %vm1787, %v1781, %v1312
      %v1815 = vsel %vm1787, %v1782, %v1314
      %v1816 = vsel %vm1787, %v1783, %v1316
      %v1817 = vsel %vm1787, %v1784, %v1318
      %v1818 = vsel %vm1787, %v1785, %v1320
      %v1819 = vsel %vm1787, %v1786, %v1322
      %vm1820 = vcmask 195584
      %v1821 = vsel %vm1820, %v1788, %v1358
      %v1822 = vsel %vm1820, %v1789, %v1360
      %v1823 = vsel %vm1820, %v1790, %v1362
      %v1824 = vsel %vm1820, %v1791, %v1364
      %v1825 = vsel %vm1820, %v1792, %v1366
      %v1826 = vsel %vm1820, %v1793, %v1368
      %v1827 = vsel %vm1820, %v1794, %v1370
      %v1828 = vsel %vm1820, %v1795, %v1372
      %v1829 = vsel %vm1820, %v1796, %v1374
      %v1830 = vsel %vm1820, %v1797, %v1376
      %v1831 = vsel %vm1820, %v1798, %v1378
      %v1832 = vsel %vm1820, %v1799, %v1380
      %v1833 = vsel %vm1820, %v1800, %v1382
      %v1834 = vsel %vm1820, %v1801, %v1384
      %v1835 = vsel %vm1820, %v1802, %v1386
      %v1836 = vsel %vm1820, %v1803, %v1388
      %v1837 = vsel %vm1820, %v1804, %v1390
      %v1838 = vsel %vm1820, %v1805, %v1392
      %v1839 = vsel %vm1820, %v1806, %v1394
      %v1840 = vsel %vm1820, %v1807, %v1396
      %v1841 = vsel %vm1820, %v1808, %v1398
      %v1842 = vsel %vm1820, %v1809, %v1400
      %v1843 = vsel %vm1820, %v1810, %v1402
      %v1844 = vsel %vm1820, %v1811, %v1404
      %v1845 = vsel %vm1820, %v1812, %v1406
      %v1846 = vsel %vm1820, %v1813, %v1408
      %v1847 = vsel %vm1820, %v1814, %v1410
      %v1848 = vsel %vm1820, %v1815, %v1412
      %v1849 = vsel %vm1820, %v1816, %v1414
      %v1850 = vsel %vm1820, %v1817, %v1416
      %v1851 = vsel %vm1820, %v1818, %v1418
      %v1852 = vsel %vm1820, %v1819, %v1420
      %vm1853 = vcmask 228352
      %v1854 = vsel %vm1853, %v1821, %v1460
      %v1855 = vsel %vm1853, %v1822, %v1462
      %v1856 = vsel %vm1853, %v1823, %v1464
      %v1857 = vsel %vm1853, %v1824, %v1466
      %v1858 = vsel %vm1853, %v1825, %v1468
      %v1859 = vsel %vm1853, %v1826, %v1470
      %v1860 = vsel %vm1853, %v1827, %v1472
      %v1861 = vsel %vm1853, %v1828, %v1474
      %v1862 = vsel %vm1853, %v1829, %v1476
      %v1863 = vsel %vm1853, %v1830, %v1478
      %v1864 = vsel %vm1853, %v1831, %v1480
      %v1865 = vsel %vm1853, %v1832, %v1482
      %v1866 = vsel %vm1853, %v1833, %v1484
      %v1867 = vsel %vm1853, %v1834, %v1486
      %v1868 = vsel %vm1853, %v1835, %v1488
      %v1869 = vsel %vm1853, %v1836, %v1490
      %v1870 = vsel %vm1853, %v1837, %v1492
      %v1871 = vsel %vm1853, %v1838, %v1494
      %v1872 = vsel %vm1853, %v1839, %v1496
      %v1873 = vsel %vm1853, %v1840, %v1498
      %v1874 = vsel %vm1853, %v1841, %v1500
      %v1875 = vsel %vm1853, %v1842, %v1502
      %v1876 = vsel %vm1853, %v1843, %v1504
      %v1877 = vsel %vm1853, %v1844, %v1506
      %v1878 = vsel %vm1853, %v1845, %v1508
      %v1879 = vsel %vm1853, %v1846, %v1510
      %v1880 = vsel %vm1853, %v1847, %v1512
      %v1881 = vsel %vm1853, %v1848, %v1514
      %v1882 = vsel %vm1853, %v1849, %v1516
      %v1883 = vsel %vm1853, %v1850, %v1518
      %v1884 = vsel %vm1853, %v1851, %v1520
      %v1885 = vsel %vm1853, %v1852, %v1522
      %vm1886 = vcmask 261120
      %v1887 = vsel %vm1886, %v1854, %v1561
      %v1888 = vsel %vm1886, %v1855, %v1563
      %v1889 = vsel %vm1886, %v1856, %v1565
      %v1890 = vsel %vm1886, %v1857, %v1567
      %v1891 = vsel %vm1886, %v1858, %v1569
      %v1892 = vsel %vm1886, %v1859, %v1571
      %v1893 = vsel %vm1886, %v1860, %v1573
      %v1894 = vsel %vm1886, %v1861, %v1575
      %v1895 = vsel %vm1886, %v1862, %v1577
      %v1896 = vsel %vm1886, %v1863, %v1579
      %v1897 = vsel %vm1886, %v1864, %v1581
      %v1898 = vsel %vm1886, %v1865, %v1583
      %v1899 = vsel %vm1886, %v1866, %v1585
      %v1900 = vsel %vm1886, %v1867, %v1587
      %v1901 = vsel %vm1886, %v1868, %v1589
      %v1902 = vsel %vm1886, %v1869, %v1591
      %v1903 = vsel %vm1886, %v1870, %v1593
      %v1904 = vsel %vm1886, %v1871, %v1595
      %v1905 = vsel %vm1886, %v1872, %v1597
      %v1906 = vsel %vm1886, %v1873, %v1599
      %v1907 = vsel %vm1886, %v1874, %v1601
      %v1908 = vsel %vm1886, %v1875, %v1603
      %v1909 = vsel %vm1886, %v1876, %v1605
      %v1910 = vsel %vm1886, %v1877, %v1607
      %v1911 = vsel %vm1886, %v1878, %v1609
      %v1912 = vsel %vm1886, %v1879, %v1611
      %v1913 = vsel %vm1886, %v1880, %v1613
      %v1914 = vsel %vm1886, %v1881, %v1615
      %v1915 = vsel %vm1886, %v1882, %v1617
      %v1916 = vsel %vm1886, %v1883, %v1619
      %v1917 = vsel %vm1886, %v1884, %v1621
      %v1918 = vsel %vm1886, %v1885, %v1623
      %v1919 = vld [vmem:[%s3] sm:$0xff]
      %v1920 = vld [vmem:[%s3 + $0x8] sm:$0xff]
      %v1921 = vld [vmem:[%s3 + $0x10] sm:$0xff]
      %v1922 = vld [vmem:[%s3 + $0x18] sm:$0xff]
      %v1923 = vld [vmem:[%s3 + $0x20] sm:$0xf]
      %vm1924 = vcmask 293888
      %v1926 = vsel %vm1924, %v1887, 0
      %v1929 = vsel %vm1924, %v1888, 0
      %v1932 = vsel %vm1924, %v1889, 0
      %v1935 = vsel %vm1924, %v1890, 0
      %v1938 = vsel %vm1924, %v1891, 0
      %v1941 = vsel %vm1924, %v1892, 0
      %v1944 = vsel %vm1924, %v1893, 0
      %v1947 = vsel %vm1924, %v1894, 0
      %v1950 = vsel %vm1924, %v1895, 0
      %v1953 = vsel %vm1924, %v1896, 0
      %v1956 = vsel %vm1924, %v1897, 0
      %v1959 = vsel %vm1924, %v1898, 0
      %v1962 = vsel %vm1924, %v1899, 0
      %v1965 = vsel %vm1924, %v1900, 0
      %v1968 = vsel %vm1924, %v1901, 0
      %v1971 = vsel %vm1924, %v1902, 0
      %v1974 = vsel %vm1924, %v1903, 0
      %v1977 = vsel %vm1924, %v1904, 0
      %v1980 = vsel %vm1924, %v1905, 0
      %v1983 = vsel %vm1924, %v1906, 0
      %v1986 = vsel %vm1924, %v1907, 0
      %v1989 = vsel %vm1924, %v1908, 0
      %v1992 = vsel %vm1924, %v1909, 0
      %v1995 = vsel %vm1924, %v1910, 0
      %v1998 = vsel %vm1924, %v1911, 0
      %v2001 = vsel %vm1924, %v1912, 0
      %v2004 = vsel %vm1924, %v1913, 0
      %v2007 = vsel %vm1924, %v1914, 0
      %v2010 = vsel %vm1924, %v1915, 0
      %v2013 = vsel %vm1924, %v1916, 0
      %v2016 = vsel %vm1924, %v1917, 0
      %v2019 = vsel %vm1924, %v1918, 0
      %vm2021 = vcmask 1043456
      %v2023 = vsel %vm2021, %v1923, 0
      %2025 = vmatprep.subr.mxu0 0.0
      %2026 = vmatpush1.msra.mxu0 %v1919
      %2027 = vmatprep.subr.mxu0 0.0
      %2028 = vmatpush1.msra.mxu0 %v1920
      %2029 = vmatprep.subr.mxu0 0.0
      %2030 = vmatpush1.msra.mxu0 %v1921
      %2031 = vmatprep.subr.mxu0 0.0
      %2032 = vmatpush1.msra.mxu0 %v1922
      %2033 = vmatprep.subr.mxu0 0.0
      %2034 = vmatpush1.msra.mxu0 %v2023
      %2035 = vmatprep.subr.mxu0 0.0
      %2036 = vmatpush1.msra.mxu0 0.0
      %2037 = vmatprep.subr.mxu0 0.0
      %2038 = vmatpush1.msra.mxu0 0.0
      %2039 = vmatprep.subr.mxu0 0.0
      %2040 = vmatpush1.msra.mxu0 0.0
      %2041 = vmatprep.subr.mxu0 0.0
      %2042 = vmatpush1.msra.mxu0 0.0
      %2043 = vmatprep.subr.mxu0 0.0
      %2044 = vmatpush1.msra.mxu0 0.0
      %2045 = vmatprep.subr.mxu0 0.0
      %2046 = vmatpush1.msra.mxu0 0.0
      %2047 = vmatprep.subr.mxu0 0.0
      %2048 = vmatpush1.msra.mxu0 0.0
      %2049 = vmatprep.subr.mxu0 0.0
      %2050 = vmatpush1.msra.mxu0 0.0
      %2051 = vmatprep.subr.mxu0 0.0
      %2052 = vmatpush1.msra.mxu0 0.0
      %2053 = vmatprep.subr.mxu0 0.0
      %2054 = vmatpush1.msra.mxu0 0.0
      %2055 = vmatprep.subr.mxu0 0.0
      %2056 = vmatpush1.msra.mxu0 0.0
      %2057 = vmatprep.subr.mxu0 0.0
      %2058 = vmatpush1.msra.mxu0 0.0
      %2059 = vmatprep.subr.mxu0 0.0
      %2060 = vmatpush1.msra.mxu0 0.0
      %2061 = vmatprep.subr.mxu0 0.0
      %2062 = vmatpush1.msra.mxu0 0.0
      %2063 = vmatprep.subr.mxu0 0.0
      %2064 = vmatpush1.msra.mxu0 0.0
      %2065 = vmatprep.subr.mxu0 0.0
      %2066 = vmatpush1.msra.mxu0 0.0
      %2067 = vmatprep.subr.mxu0 0.0
      %2068 = vmatpush1.msra.mxu0 0.0
      %2069 = vmatprep.subr.mxu0 0.0
      %2070 = vmatpush1.msra.mxu0 0.0
      %2071 = vmatprep.subr.mxu0 0.0
      %2072 = vmatpush1.msra.mxu0 0.0
      %2073 = vmatprep.subr.mxu0 0.0
      %2074 = vmatpush1.msra.mxu0 0.0
      %2075 = vmatprep.subr.mxu0 0.0
      %2076 = vmatpush1.msra.mxu0 0.0
      %2077 = vmatprep.subr.mxu0 0.0
      %2078 = vmatpush1.msra.mxu0 0.0
      %2079 = vmatprep.subr.mxu0 0.0
      %2080 = vmatpush1.msra.mxu0 0.0
      %2081 = vmatprep.subr.mxu0 0.0
      %2082 = vmatpush1.msra.mxu0 0.0
      %2083 = vmatprep.subr.mxu0 0.0
      %2084 = vmatpush1.msra.mxu0 0.0
      %2085 = vmatprep.subr.mxu0 0.0
      %2086 = vmatpush1.msra.mxu0 0.0
      %2087 = vmatprep.subr.mxu0 0.0
      %2088 = vmatpush1.msra.mxu0 0.0
      %2089 = vmatprep.mubr.f32.mxu0 0.0
      %2090 = vmatmul.mubr.f32.gmra.mrb[0].mxu0 %v1926
      %v2091 = vpop.f32.mrb[0].mxu0
      %v2092 = vadd.f32 0.0, %v2091
      %v2093 = vpop.f32.mrb[0].mxu0
      %2094 = vmatprep.mubr.f32.mxu0 0.0
      %2095 = vmatmul.mubr.f32.gmra.mrb[0].mxu0 %v1929
      %v2096 = vpop.f32.mrb[0].mxu0
      %v2097 = vadd.f32 0.0, %v2096
      %v2098 = vpop.f32.mrb[0].mxu0
      %2099 = vmatprep.mubr.f32.mxu0 0.0
      %2100 = vmatmul.mubr.f32.gmra.mrb[0].mxu0 %v1932
      %v2101 = vpop.f32.mrb[0].mxu0
      %v2102 = vadd.f32 0.0, %v2101
      %v2103 = vpop.f32.mrb[0].mxu0
      %2104 = vmatprep.mubr.f32.mxu0 0.0
      %2105 = vmatmul.mubr.f32.gmra.mrb[0].mxu0 %v1935
      %v2106 = vpop.f32.mrb[0].mxu0
      %v2107 = vadd.f32 0.0, %v2106
      %v2108 = vpop.f32.mrb[0].mxu0
      %2109 = vmatprep.mubr.f32.mxu0 0.0
      %2110 = vmatmul.mubr.f32.gmra.mrb[0].mxu0 %v1938
      %v2111 = vpop.f32.mrb[0].mxu0
      %v2112 = vadd.f32 0.0, %v2111
      %v2113 = vpop.f32.mrb[0].mxu0
      %2114 = vmatprep.mubr.f32.mxu0 0.0
      %2115 = vmatmul.mubr.f32.gmra.mrb[0].mxu0 %v1941
      %v2116 = vpop.f32.mrb[0].mxu0
      %v2117 = vadd.f32 0.0, %v2116
      %v2118 = vpop.f32.mrb[0].mxu0
      %2119 = vmatprep.mubr.f32.mxu0 0.0
      %2120 = vmatmul.mubr.f32.gmra.mrb[0].mxu0 %v1944
      %v2121 = vpop.f32.mrb[0].mxu0
      %v2122 = vadd.f32 0.0, %v2121
      %v2123 = vpop.f32.mrb[0].mxu0
      %2124 = vmatprep.mubr.f32.mxu0 0.0
      %2125 = vmatmul.mubr.f32.gmra.mrb[0].mxu0 %v1947
      %v2126 = vpop.f32.mrb[0].mxu0
      %v2127 = vadd.f32 0.0, %v2126
      %v2128 = vpop.f32.mrb[0].mxu0
      %2129 = vmatprep.mubr.f32.mxu0 0.0
      %2130 = vmatmul.mubr.f32.gmra.mrb[0].mxu0 %v1950
      %v2131 = vpop.f32.mrb[0].mxu0
      %v2132 = vadd.f32 0.0, %v2131
      %v2133 = vpop.f32.mrb[0].mxu0
      %2134 = vmatprep.mubr.f32.mxu0 0.0
      %2135 = vmatmul.mubr.f32.gmra.mrb[0].mxu0 %v1953
      %v2136 = vpop.f32.mrb[0].mxu0
      %v2137 = vadd.f32 0.0, %v2136
      %v2138 = vpop.f32.mrb[0].mxu0
      %2139 = vmatprep.mubr.f32.mxu0 0.0
      %2140 = vmatmul.mubr.f32.gmra.mrb[0].mxu0 %v1956
      %v2141 = vpop.f32.mrb[0].mxu0
      %v2142 = vadd.f32 0.0, %v2141
      %v2143 = vpop.f32.mrb[0].mxu0
      %2144 = vmatprep.mubr.f32.mxu0 0.0
      %2145 = vmatmul.mubr.f32.gmra.mrb[0].mxu0 %v1959
      %v2146 = vpop.f32.mrb[0].mxu0
      %v2147 = vadd.f32 0.0, %v2146
      %v2148 = vpop.f32.mrb[0].mxu0
      %2149 = vmatprep.mubr.f32.mxu0 0.0
      %2150 = vmatmul.mubr.f32.gmra.mrb[0].mxu0 %v1962
      %v2151 = vpop.f32.mrb[0].mxu0
      %v2152 = vadd.f32 0.0, %v2151
      %v2153 = vpop.f32.mrb[0].mxu0
      %2154 = vmatprep.mubr.f32.mxu0 0.0
      %2155 = vmatmul.mubr.f32.gmra.mrb[0].mxu0 %v1965
      %v2156 = vpop.f32.mrb[0].mxu0
      %v2157 = vadd.f32 0.0, %v2156
      %v2158 = vpop.f32.mrb[0].mxu0
      %2159 = vmatprep.mubr.f32.mxu0 0.0
      %2160 = vmatmul.mubr.f32.gmra.mrb[0].mxu0 %v1968
      %v2161 = vpop.f32.mrb[0].mxu0
      %v2162 = vadd.f32 0.0, %v2161
      %v2163 = vpop.f32.mrb[0].mxu0
      %2164 = vmatprep.mubr.f32.mxu0 0.0
      %2165 = vmatmul.mubr.f32.gmra.mrb[0].mxu0 %v1971
      %v2166 = vpop.f32.mrb[0].mxu0
      %v2167 = vadd.f32 0.0, %v2166
      %v2168 = vpop.f32.mrb[0].mxu0
      %2169 = vmatprep.mubr.f32.mxu0 0.0
      %2170 = vmatmul.mubr.f32.gmra.mrb[0].mxu0 %v1974
      %v2171 = vpop.f32.mrb[0].mxu0
      %v2172 = vadd.f32 0.0, %v2171
      %v2173 = vpop.f32.mrb[0].mxu0
      %2174 = vmatprep.mubr.f32.mxu0 0.0
      %2175 = vmatmul.mubr.f32.gmra.mrb[0].mxu0 %v1977
      %v2176 = vpop.f32.mrb[0].mxu0
      %v2177 = vadd.f32 0.0, %v2176
      %v2178 = vpop.f32.mrb[0].mxu0
      %2179 = vmatprep.mubr.f32.mxu0 0.0
      %2180 = vmatmul.mubr.f32.gmra.mrb[0].mxu0 %v1980
      %v2181 = vpop.f32.mrb[0].mxu0
      %v2182 = vadd.f32 0.0, %v2181
      %v2183 = vpop.f32.mrb[0].mxu0
      %2184 = vmatprep.mubr.f32.mxu0 0.0
      %2185 = vmatmul.mubr.f32.gmra.mrb[0].mxu0 %v1983
      %v2186 = vpop.f32.mrb[0].mxu0
      %v2187 = vadd.f32 0.0, %v2186
      %v2188 = vpop.f32.mrb[0].mxu0
      %2189 = vmatprep.mubr.f32.mxu0 0.0
      %2190 = vmatmul.mubr.f32.gmra.mrb[0].mxu0 %v1986
      %v2191 = vpop.f32.mrb[0].mxu0
      %v2192 = vadd.f32 0.0, %v2191
      %v2193 = vpop.f32.mrb[0].mxu0
      %2194 = vmatprep.mubr.f32.mxu0 0.0
      %2195 = vmatmul.mubr.f32.gmra.mrb[0].mxu0 %v1989
      %v2196 = vpop.f32.mrb[0].mxu0
      %v2197 = vadd.f32 0.0, %v2196
      %v2198 = vpop.f32.mrb[0].mxu0
      %2199 = vmatprep.mubr.f32.mxu0 0.0
      %2200 = vmatmul.mubr.f32.gmra.mrb[0].mxu0 %v1992
      %v2201 = vpop.f32.mrb[0].mxu0
      %v2202 = vadd.f32 0.0, %v2201
      %v2203 = vpop.f32.mrb[0].mxu0
      %2204 = vmatprep.mubr.f32.mxu0 0.0
      %2205 = vmatmul.mubr.f32.gmra.mrb[0].mxu0 %v1995
      %v2206 = vpop.f32.mrb[0].mxu0
      %v2207 = vadd.f32 0.0, %v2206
      %v2208 = vpop.f32.mrb[0].mxu0
      %2209 = vmatprep.mubr.f32.mxu0 0.0
      %2210 = vmatmul.mubr.f32.gmra.mrb[0].mxu0 %v1998
      %v2211 = vpop.f32.mrb[0].mxu0
      %v2212 = vadd.f32 0.0, %v2211
      %v2213 = vpop.f32.mrb[0].mxu0
      %2214 = vmatprep.mubr.f32.mxu0 0.0
      %2215 = vmatmul.mubr.f32.gmra.mrb[0].mxu0 %v2001
      %v2216 = vpop.f32.mrb[0].mxu0
      %v2217 = vadd.f32 0.0, %v2216
      %v2218 = vpop.f32.mrb[0].mxu0
      %2219 = vmatprep.mubr.f32.mxu0 0.0
      %2220 = vmatmul.mubr.f32.gmra.mrb[0].mxu0 %v2004
      %v2221 = vpop.f32.mrb[0].mxu0
      %v2222 = vadd.f32 0.0, %v2221
      %v2223 = vpop.f32.mrb[0].mxu0
      %2224 = vmatprep.mubr.f32.mxu0 0.0
      %2225 = vmatmul.mubr.f32.gmra.mrb[0].mxu0 %v2007
      %v2226 = vpop.f32.mrb[0].mxu0
      %v2227 = vadd.f32 0.0, %v2226
      %v2228 = vpop.f32.mrb[0].mxu0
      %2229 = vmatprep.mubr.f32.mxu0 0.0
      %2230 = vmatmul.mubr.f32.gmra.mrb[0].mxu0 %v2010
      %v2231 = vpop.f32.mrb[0].mxu0
      %v2232 = vadd.f32 0.0, %v2231
      %v2233 = vpop.f32.mrb[0].mxu0
      %2234 = vmatprep.mubr.f32.mxu0 0.0
      %2235 = vmatmul.mubr.f32.gmra.mrb[0].mxu0 %v2013
      %v2236 = vpop.f32.mrb[0].mxu0
      %v2237 = vadd.f32 0.0, %v2236
      %v2238 = vpop.f32.mrb[0].mxu0
      %2239 = vmatprep.mubr.f32.mxu0 0.0
      %2240 = vmatmul.mubr.f32.gmra.mrb[0].mxu0 %v2016
      %v2241 = vpop.f32.mrb[0].mxu0
      %v2242 = vadd.f32 0.0, %v2241
      %v2243 = vpop.f32.mrb[0].mxu0
      %2244 = vmatprep.mubr.f32.mxu0 0.0
      %2245 = vmatmul.mubr.f32.gmra.mrb[0].mxu0 %v2019
      %v2246 = vpop.f32.mrb[0].mxu0
      %v2247 = vadd.f32 0.0, %v2246
      %v2248 = vpop.f32.mrb[0].mxu0
      %2249 = vdwg.mxu0
      %2250 = vst.msk [vmem:[%s457] sm:$0xff] %vm1688, %v2092
      %2251 = vst.msk [vmem:[%s457 + $0x8] sm:$0xff] %vm1688, %v2097
      %2252 = vst.msk [vmem:[%s457 + $0x10] sm:$0xff] %vm1688, %v2102
      %2253 = vst.msk [vmem:[%s457 + $0x18] sm:$0xff] %vm1688, %v2107
      %2254 = vst.msk [vmem:[%s457 + $0x20] sm:$0xff] %vm1688, %v2112
      %2255 = vst.msk [vmem:[%s457 + $0x28] sm:$0xff] %vm1688, %v2117
      %2256 = vst.msk [vmem:[%s457 + $0x30] sm:$0xff] %vm1688, %v2122
      %2257 = vst.msk [vmem:[%s457 + $0x38] sm:$0xff] %vm1688, %v2127
      %2258 = vst.msk [vmem:[%s457 + $0x40] sm:$0xff] %vm1688, %v2132
      %2259 = vst.msk [vmem:[%s457 + $0x48] sm:$0xff] %vm1688, %v2137
      %2260 = vst.msk [vmem:[%s457 + $0x50] sm:$0xff] %vm1688, %v2142
      %2261 = vst.msk [vmem:[%s457 + $0x58] sm:$0xff] %vm1688, %v2147
      %2262 = vst.msk [vmem:[%s457 + $0x60] sm:$0xff] %vm1688, %v2152
      %2263 = vst.msk [vmem:[%s457 + $0x68] sm:$0xff] %vm1688, %v2157
      %2264 = vst.msk [vmem:[%s457 + $0x70] sm:$0xff] %vm1688, %v2162
      %2265 = vst.msk [vmem:[%s457 + $0x78] sm:$0xff] %vm1688, %v2167
      %2266 = vst.msk [vmem:[%s457 + $0x80] sm:$0xff] %vm1688, %v2172
      %2267 = vst.msk [vmem:[%s457 + $0x88] sm:$0xff] %vm1688, %v2177
      %2268 = vst.msk [vmem:[%s457 + $0x90] sm:$0xff] %vm1688, %v2182
      %2269 = vst.msk [vmem:[%s457 + $0x98] sm:$0xff] %vm1688, %v2187
      %2270 = vst.msk [vmem:[%s457 + $0xa0] sm:$0xff] %vm1688, %v2192
      %2271 = vst.msk [vmem:[%s457 + $0xa8] sm:$0xff] %vm1688, %v2197
      %2272 = vst.msk [vmem:[%s457 + $0xb0] sm:$0xff] %vm1688, %v2202
      %2273 = vst.msk [vmem:[%s457 + $0xb8] sm:$0xff] %vm1688, %v2207
      %2274 = vst.msk [vmem:[%s457 + $0xc0] sm:$0xff] %vm1688, %v2212
      %2275 = vst.msk [vmem:[%s457 + $0xc8] sm:$0xff] %vm1688, %v2217
      %2276 = vst.msk [vmem:[%s457 + $0xd0] sm:$0xff] %vm1688, %v2222
      %2277 = vst.msk [vmem:[%s457 + $0xd8] sm:$0xff] %vm1688, %v2227
      %2278 = vst.msk [vmem:[%s457 + $0xe0] sm:$0xff] %vm1688, %v2232
      %2279 = vst.msk [vmem:[%s457 + $0xe8] sm:$0xff] %vm1688, %v2237
      %2280 = vst.msk [vmem:[%s457 + $0xf0] sm:$0xff] %vm1688, %v2242
      %2281 = vst.msk [vmem:[%s457 + $0xf8] sm:$0xff] %vm1688, %v2247
      %v2282 = vsel %vm1688, %v2092, 0.0
      %v2283 = vsel %vm1688, %v2097, 0.0
      %v2284 = vadd.f32 %v2282, %v2283
      %v2285 = vsel %vm1688, %v2102, 0.0
      %v2286 = vadd.f32 %v2284, %v2285
      %v2287 = vsel %vm1688, %v2107, 0.0
      %v2288 = vadd.f32 %v2286, %v2287
      %v2289 = vsel %vm1688, %v2112, 0.0
      %v2290 = vadd.f32 %v2288, %v2289
      %v2291 = vsel %vm1688, %v2117, 0.0
      %v2292 = vadd.f32 %v2290, %v2291
      %v2293 = vsel %vm1688, %v2122, 0.0
      %v2294 = vadd.f32 %v2292, %v2293
      %v2295 = vsel %vm1688, %v2127, 0.0
      %v2296 = vadd.f32 %v2294, %v2295
      %v2297 = vsel %vm1688, %v2132, 0.0
      %v2298 = vadd.f32 %v2296, %v2297
      %v2299 = vsel %vm1688, %v2137, 0.0
      %v2300 = vadd.f32 %v2298, %v2299
      %v2301 = vsel %vm1688, %v2142, 0.0
      %v2302 = vadd.f32 %v2300, %v2301
      %v2303 = vsel %vm1688, %v2147, 0.0
      %v2304 = vadd.f32 %v2302, %v2303
      %v2305 = vsel %vm1688, %v2152, 0.0
      %v2306 = vadd.f32 %v2304, %v2305
      %v2307 = vsel %vm1688, %v2157, 0.0
      %v2308 = vadd.f32 %v2306, %v2307
      %v2309 = vsel %vm1688, %v2162, 0.0
      %v2310 = vadd.f32 %v2308, %v2309
      %v2311 = vsel %vm1688, %v2167, 0.0
      %v2312 = vadd.f32 %v2310, %v2311
      %v2313 = vsel %vm1688, %v2172, 0.0
      %v2314 = vadd.f32 %v2312, %v2313
      %v2315 = vsel %vm1688, %v2177, 0.0
      %v2316 = vadd.f32 %v2314, %v2315
      %v2317 = vsel %vm1688, %v2182, 0.0
      %v2318 = vadd.f32 %v2316, %v2317
      %v2319 = vsel %vm1688, %v2187, 0.0
      %v2320 = vadd.f32 %v2318, %v2319
      %v2321 = vsel %vm1688, %v2192, 0.0
      %v2322 = vadd.f32 %v2320, %v2321
      %v2323 = vsel %vm1688, %v2197, 0.0
      %v2324 = vadd.f32 %v2322, %v2323
      %v2325 = vsel %vm1688, %v2202, 0.0
      %v2326 = vadd.f32 %v2324, %v2325
      %v2327 = vsel %vm1688, %v2207, 0.0
      %v2328 = vadd.f32 %v2326, %v2327
      %v2329 = vsel %vm1688, %v2212, 0.0
      %v2330 = vadd.f32 %v2328, %v2329
      %v2331 = vsel %vm1688, %v2217, 0.0
      %v2332 = vadd.f32 %v2330, %v2331
      %v2333 = vsel %vm1688, %v2222, 0.0
      %v2334 = vadd.f32 %v2332, %v2333
      %v2335 = vsel %vm1688, %v2227, 0.0
      %v2336 = vadd.f32 %v2334, %v2335
      %v2337 = vsel %vm1688, %v2232, 0.0
      %v2338 = vadd.f32 %v2336, %v2337
      %v2339 = vsel %vm1688, %v2237, 0.0
      %v2340 = vadd.f32 %v2338, %v2339
      %v2341 = vsel %vm1688, %v2242, 0.0
      %v2342 = vadd.f32 %v2340, %v2341
      %v2343 = vsel %vm1688, %v2247, 0.0
      %v2344 = vadd.f32 %v2342, %v2343
      %v2345 = vrot.slane %v2344, 4
      %v2346 = vadd.f32 %v2344, %v2345
      %v2347 = vrot.slane %v2346, 2
      %v2348 = vadd.f32 %v2346, %v2347
      %v2349 = vrot.slane %v2348, 1
      %v2350 = vadd.f32 %v2348, %v2349
      %v2351 = vmul.f32 %v2092, %v2092
      %v2352 = vmul.f32 %v2097, %v2097
      %v2353 = vmul.f32 %v2102, %v2102
      %v2354 = vmul.f32 %v2107, %v2107
      %v2355 = vmul.f32 %v2112, %v2112
      %v2356 = vmul.f32 %v2117, %v2117
      %v2357 = vmul.f32 %v2122, %v2122
      %v2358 = vmul.f32 %v2127, %v2127
      %v2359 = vmul.f32 %v2132, %v2132
      %v2360 = vmul.f32 %v2137, %v2137
      %v2361 = vmul.f32 %v2142, %v2142
      %v2362 = vmul.f32 %v2147, %v2147
      %v2363 = vmul.f32 %v2152, %v2152
      %v2364 = vmul.f32 %v2157, %v2157
      %v2365 = vmul.f32 %v2162, %v2162
      %v2366 = vmul.f32 %v2167, %v2167
      %v2367 = vmul.f32 %v2172, %v2172
      %v2368 = vmul.f32 %v2177, %v2177
      %v2369 = vmul.f32 %v2182, %v2182
      %v2370 = vmul.f32 %v2187, %v2187
      %v2371 = vmul.f32 %v2192, %v2192
      %v2372 = vmul.f32 %v2197, %v2197
      %v2373 = vmul.f32 %v2202, %v2202
      %v2374 = vmul.f32 %v2207, %v2207
      %v2375 = vmul.f32 %v2212, %v2212
      %v2376 = vmul.f32 %v2217, %v2217
      %v2377 = vmul.f32 %v2222, %v2222
      %v2378 = vmul.f32 %v2227, %v2227
      %v2379 = vmul.f32 %v2232, %v2232
      %v2380 = vmul.f32 %v2237, %v2237
      %v2381 = vmul.f32 %v2242, %v2242
      %v2382 = vmul.f32 %v2247, %v2247
      %v2383 = vsel %vm1688, %v2351, 0.0
      %v2384 = vsel %vm1688, %v2352, 0.0
      %v2385 = vadd.f32 %v2383, %v2384
      %v2386 = vsel %vm1688, %v2353, 0.0
      %v2387 = vadd.f32 %v2385, %v2386
      %v2388 = vsel %vm1688, %v2354, 0.0
      %v2389 = vadd.f32 %v2387, %v2388
      %v2390 = vsel %vm1688, %v2355, 0.0
      %v2391 = vadd.f32 %v2389, %v2390
      %v2392 = vsel %vm1688, %v2356, 0.0
      %v2393 = vadd.f32 %v2391, %v2392
      %v2394 = vsel %vm1688, %v2357, 0.0
      %v2395 = vadd.f32 %v2393, %v2394
      %v2396 = vsel %vm1688, %v2358, 0.0
      %v2397 = vadd.f32 %v2395, %v2396
      %v2398 = vsel %vm1688, %v2359, 0.0
      %v2399 = vadd.f32 %v2397, %v2398
      %v2400 = vsel %vm1688, %v2360, 0.0
      %v2401 = vadd.f32 %v2399, %v2400
      %v2402 = vsel %vm1688, %v2361, 0.0
      %v2403 = vadd.f32 %v2401, %v2402
      %v2404 = vsel %vm1688, %v2362, 0.0
      %v2405 = vadd.f32 %v2403, %v2404
      %v2406 = vsel %vm1688, %v2363, 0.0
      %v2407 = vadd.f32 %v2405, %v2406
      %v2408 = vsel %vm1688, %v2364, 0.0
      %v2409 = vadd.f32 %v2407, %v2408
      %v2410 = vsel %vm1688, %v2365, 0.0
      %v2411 = vadd.f32 %v2409, %v2410
      %v2412 = vsel %vm1688, %v2366, 0.0
      %v2413 = vadd.f32 %v2411, %v2412
      %v2414 = vsel %vm1688, %v2367, 0.0
      %v2415 = vadd.f32 %v2413, %v2414
      %v2416 = vsel %vm1688, %v2368, 0.0
      %v2417 = vadd.f32 %v2415, %v2416
      %v2418 = vsel %vm1688, %v2369, 0.0
      %v2419 = vadd.f32 %v2417, %v2418
      %v2420 = vsel %vm1688, %v2370, 0.0
      %v2421 = vadd.f32 %v2419, %v2420
      %v2422 = vsel %vm1688, %v2371, 0.0
      %v2423 = vadd.f32 %v2421, %v2422
      %v2424 = vsel %vm1688, %v2372, 0.0
      %v2425 = vadd.f32 %v2423, %v2424
      %v2426 = vsel %vm1688, %v2373, 0.0
      %v2427 = vadd.f32 %v2425, %v2426
      %v2428 = vsel %vm1688, %v2374, 0.0
      %v2429 = vadd.f32 %v2427, %v2428
      %v2430 = vsel %vm1688, %v2375, 0.0
      %v2431 = vadd.f32 %v2429, %v2430
      %v2432 = vsel %vm1688, %v2376, 0.0
      %v2433 = vadd.f32 %v2431, %v2432
      %v2434 = vsel %vm1688, %v2377, 0.0
      %v2435 = vadd.f32 %v2433, %v2434
      %v2436 = vsel %vm1688, %v2378, 0.0
      %v2437 = vadd.f32 %v2435, %v2436
      %v2438 = vsel %vm1688, %v2379, 0.0
      %v2439 = vadd.f32 %v2437, %v2438
      %v2440 = vsel %vm1688, %v2380, 0.0
      %v2441 = vadd.f32 %v2439, %v2440
      %v2442 = vsel %vm1688, %v2381, 0.0
      %v2443 = vadd.f32 %v2441, %v2442
      %v2444 = vsel %vm1688, %v2382, 0.0
      %v2445 = vadd.f32 %v2443, %v2444
      %v2446 = vrot.slane %v2445, 4
      %v2447 = vadd.f32 %v2445, %v2446
      %v2448 = vrot.slane %v2447, 2
      %v2449 = vadd.f32 %v2447, %v2448
      %v2450 = vrot.slane %v2449, 1
      %v2451 = vadd.f32 %v2449, %v2450
      %vm2452 = vcmask 1040384
      %v2453 = vsel %vm2452, %v2350, %v2451
      %vm2454 = vcmask 58368
      %2455 = vst.msk [vmem:[%s465] sm:$0x3] %vm2454, %v2453
      %s2456 = smul.u32 16, %s24
      %p2457 = scmp.lt.s32.totalorder %s23, 1
      %s2458 = scalar_select %p2457, %s23, 1
      %p2459 = scmp.lt.s32.totalorder %s2456, 15
      %s2460 = scalar_select %p2459, %s2456, 15
      %s2461 = smul.addr %s2460, 2
      %s2462 = smul.addr %s2458, 32
      %s2463 = sadd.s32 %s2461, %s2462
      %s2464 = smul.addr %s2463, 8
      %s2465 = scalar_lea.vmem %s6, %s2464
      %p2466 = scmp.lt.s32.totalorder %s23, 1
      %s2467 = scalar_select %p2466, %s23, 1
      %p2468 = scmp.lt.s32.totalorder %s24, 0
      %s2469 = scalar_select %p2468, %s24, 0
      %s2470 = sadd.s32 %s2469, %s2467
      %s2471 = smul.addr %s2470, 2
      %s2472 = scalar_lea.vmem %s7, %s2471
      // Predicated region
      $region61: #{conv_layer_forward.3} parent=43 // pred_check
        %p2473 = pneg %p214
      $region62: #{conv_layer_forward.3} parent=43 // pred_check_branch
        %2475 = sbr.rel (%p2473) target = $region64
      $region63: #{conv_layer_forward.3} parent=43 // pred_region
        %s2476 = smul.u32 16, %s24
      $region64: #{conv_layer_forward.3} parent=43 // pred_fallthru
        _
      // Predicated region
      $region65: #{conv_layer_forward.3} parent=43 // pred_check
        %p2477 = pneg %p242
      $region66: #{conv_layer_forward.3} parent=43 // pred_check_branch
        %2479 = sbr.rel (%p2477) target = $region68
      $region67: #{conv_layer_forward.3} parent=43 // pred_region
        _
      $region68: #{conv_layer_forward.3} parent=43 // pred_fallthru
        _
    $region44: #{conv_layer_forward.3} parent=5 // pred_fallthru
      _
    %p2480 = scmp.le.s32.totalorder 2, %s14
    // Predicated region
    $region69: #{conv_layer_forward.3} parent=5 // pred_check
      %p2481 = pneg %p2480
    $region70: #{conv_layer_forward.3} parent=5 // pred_check_branch
      %2483 = sbr.rel (%p2481) target = $region72
    $region71: #{conv_layer_forward.3} parent=5 // pred_region
      %s2484 = ssub.s32 %s14, 2
      // Predicated region
      $region73: #{conv_layer_forward.3} parent=71 // pred_check
        %p2485 = pneg %p220
      $region74: #{conv_layer_forward.3} parent=71 // pred_check_branch
        %2487 = sbr.rel (%p2485) target = $region76
      $region75: #{conv_layer_forward.3} parent=71 // pred_region
        %s2488 = smul.u32 16, %s26
        %p2489 = scmp.lt.s32.totalorder %s25, 1
        %s2490 = scalar_select %p2489, %s25, 1
        %p2491 = scmp.lt.s32.totalorder %s2488, 15
        %s2492 = scalar_select %p2491, %s2488, 15
        %s2493 = smul.addr %s2492, 2
        %s2494 = smul.addr %s2490, 32
        %s2495 = sadd.s32 %s2493, %s2494
        %s2496 = smul.addr %s2495, 8
        %s2497 = scalar_lea.vmem %s6, %s2496
      $region76: #{conv_layer_forward.3} parent=71 // pred_fallthru
        _
      // Predicated region
      $region77: #{conv_layer_forward.3} parent=71 // pred_check
        %p2498 = pneg %p248
      $region78: #{conv_layer_forward.3} parent=71 // pred_check_branch
        %2500 = sbr.rel (%p2498) target = $region80
      $region79: #{conv_layer_forward.3} parent=71 // pred_region
        %p2501 = scmp.lt.s32.totalorder %s25, 1
        %s2502 = scalar_select %p2501, %s25, 1
        %p2503 = scmp.lt.s32.totalorder %s26, 0
        %s2504 = scalar_select %p2503, %s26, 0
        %s2505 = sadd.s32 %s2504, %s2502
        %s2506 = smul.addr %s2505, 2
        %s2507 = scalar_lea.vmem %s7, %s2506
      $region80: #{conv_layer_forward.3} parent=71 // pred_fallthru
        _
    $region72: #{conv_layer_forward.3} parent=5 // pred_fallthru
      _
  $region6: #{conv_layer_forward.3} parent=0 // loop_footer
    %s18 = sadd.s32 1, %s14
  $region7: #{conv_layer_forward.3} parent=0 // loop_footer_branch
    %13 = sbr.rel target = $region3
  $region8: #{conv_layer_forward.3} parent=0 // loop_exit
    _

</llo_original>
